<compile_context>
chip_gen: v5e
topology: v5e:2x2
jax: 0.10.0
libtpu: 0.0.40
codegen_flags: <defaults>
</compile_context>

<pallas_src>
import functools

import jax
import jax.numpy as jnp
from jax.experimental import pallas as pl
from jax.experimental.pallas import tpu as pltpu

LANE = 128
VMEM_LIMIT = 32 * 1024 * 1024  # conservative vs. v7x's 64 MiB physical VMEM


def _round_up(x, m):
    return (x + m - 1) // m * m


def _pad2(a, rows, cols):
    return jnp.pad(a, ((0, rows - a.shape[0]), (0, cols - a.shape[1])))


# --------------------------------------------------------------------------
# Stage 1: tiled SAGEConv + ReLU/LayerNorm + gate_nn + x_project
# grid = (node row tiles [parallel], adjacency col tiles [arbitrary/reduction])
# --------------------------------------------------------------------------
def _stage1_kernel(a_ref, x_ref, invdeg_ref,
                   wl_ref, wr_ref, wg1_ref, wg2_ref, wp_ref, vecs_ref,
                   gate_ref, xp_ref,
                   acc_ref, *, c_real, tm, tk):
    i = pl.program_id(0)
    k = pl.program_id(1)

    @pl.when(k == 0)
    def _():
        acc_ref[...] = jnp.zeros_like(acc_ref)

    # Dominant O(N^2) contraction: bf16 counts x bf16 X, f32 MXU accumulation.
    # X is VMEM-resident; slice the k-tile of rows in-kernel (no re-stream).
    krow = pl.multiple_of(k * tk, tk)
    acc_ref[...] += jnp.dot(a_ref[...], x_ref[pl.ds(krow, tk), :],
                            preferred_element_type=jnp.float32)

    @pl.when(k == pl.num_programs(1) - 1)
    def _():
        # Stacked per-channel vectors: bl, ln_g, ln_b, cmask, bg1, bg2, bp.
        bl = vecs_ref[0:1, :]
        ln_g = vecs_ref[1:2, :]
        ln_b = vecs_ref[2:3, :]
        cmask = vecs_ref[3:4, :]
        bg1 = vecs_ref[4:5, :]
        bg2 = vecs_ref[5:6, :]
        bp = vecs_ref[6:7, :]

        # Exact mean aggregation: integer-count sum * f32 1/deg.
        agg = acc_ref[...] * invdeg_ref[...]

        irow = pl.multiple_of(i * tm, tm)
        x_self = x_ref[pl.ds(irow, tm), :].astype(jnp.float32)

        # SAGEConv: lin_l(mean_agg) + bias + lin_r(self)
        h = (jnp.dot(agg, wl_ref[...], preferred_element_type=jnp.float32) + bl
             + jnp.dot(x_self, wr_ref[...], preferred_element_type=jnp.float32))

        # ReLU -> LayerNorm over the *real* C features (padded columns are 0).
        h = jnp.maximum(h, 0.0)
        inv_c = 1.0 / c_real
        mean = jnp.sum(h, axis=-1, keepdims=True) * inv_c
        ctr = (h - mean) * cmask
        var = jnp.sum(ctr * ctr, axis=-1, keepdims=True) * inv_c
        h = ctr * jax.lax.rsqrt(var + 1e-5) * ln_g + ln_b

        # gate_nn: Linear(C, C/2) -> ReLU -> Linear(C/2, C/4)
        g1 = jnp.maximum(
            jnp.dot(h, wg1_ref[...], preferred_element_type=jnp.float32) + bg1,
            0.0)
        gate = (jnp.dot(g1, wg2_ref[...], preferred_element_type=jnp.float32)
                + bg2)

        # x_project: Linear(C, C/4) -> ReLU
        xp = jnp.maximum(
            jnp.dot(h, wp_ref[...], preferred_element_type=jnp.float32) + bp,
            0.0)

        gate_ref[...] = gate.astype(gate_ref.dtype)
        xp_ref[...] = xp.astype(xp_ref.dtype)


# --------------------------------------------------------------------------
# Stage 2 (fused): node softmax of gate, gate * xp, per-row L2 normalize.
# Whole arrays as VMEM blocks (gate/xp are only [n_pad, 128] bf16 here).
# --------------------------------------------------------------------------
def _stage2_kernel(gate_ref, xp_ref, o_ref, *, n_real):
    gate = gate_ref[...].astype(jnp.float32)
    xp = xp_ref[...].astype(jnp.float32)

    rows = jax.lax.broadcasted_iota(jnp.int32, gate.shape, 0)
    g = jnp.where(rows < n_real, gate, -1e30)     # mask padded node rows

    m = jnp.max(g, axis=0, keepdims=True)
    e = jnp.exp(g - m)
    denom = jnp.sum(e, axis=0, keepdims=True)
    gate_sm = e * pl.reciprocal(denom, approx=True)

    out = gate_sm * xp
    ssq = jnp.sum(out * out, axis=-1, keepdims=True)
    # F.normalize(dim=1): x / max(||x||, 1e-12) == x * rsqrt(max(||x||^2, 1e-24))
    o_ref[...] = out * jax.lax.rsqrt(jnp.maximum(ssq, 1e-24))


# --------------------------------------------------------------------------
# Wrapper
# --------------------------------------------------------------------------
def dbgcn_forward(edge_index, x, params, *, node_tile=128, max_k_tile=512):
    """edge_index: [2, E] int32 (src, dst), x: [N, F_in] f32."""
    n, f_in = x.shape
    c = params["wl"].shape[1]
    c2 = params["wg1"].shape[1]
    cq = params["wg2"].shape[1]
    assert c <= LANE, "vector-stacking fast path assumes out_classes <= 128"

    f32 = jnp.float32
    bf16 = jnp.bfloat16

    tm = node_tile
    n_pad = _round_up(n, tm)
    # Grow the reduction tile while it still divides n_pad (bigger DMA chunks,
    # fewer grid steps), capped at max_k_tile; tm stays small so the parallel
    # row axis keeps >= 2 tiles for v7x's two TensorCores when possible.
    tk = tm
    while tk < max_k_tile and n_pad % (2 * tk) == 0:
        tk *= 2

    f_p = _round_up(f_in, LANE)
    c_p = c2_p = cq_p = LANE

    # ---- adjacency: exact integer edge multiplicities, built padded + bf16 ----
    src, dst = edge_index
    counts = jnp.zeros((n_pad, n_pad), f32).at[dst, src].add(1.0)
    deg = jnp.sum(counts, axis=1, keepdims=True)
    inv_deg = 1.0 / jnp.maximum(deg, 1.0)            # [n_pad, 1] f32 (exact)
    a_bf = counts.astype(bf16)                       # small integers: exact in bf16

    # ---- features: single bf16 copy (used for both agg and self terms) ----
    x_bf = _pad2(x.astype(f32), n_pad, f_p).astype(bf16)

    # ---- weights (padded, VMEM-resident) ----
    wl = _pad2(params["wl"], f_p, c_p)
    wr = _pad2(params["wr"], f_p, c_p)
    wg1 = _pad2(params["wg1"], c_p, c2_p)
    wg2 = _pad2(params["wg2"], c2_p, cq_p)
    wp = _pad2(params["wp"], c_p, cq_p)

    # Stack the seven (1, LANE) vectors into one (8, LANE) operand.
    vecs = jnp.zeros((8, LANE), f32)
    vecs = vecs.at[0, :c].set(params["bl"][0])
    vecs = vecs.at[1, :c].set(params["ln_g"][0])
    vecs = vecs.at[2, :c].set(params["ln_b"][0])
    vecs = vecs.at[3, :c].set(1.0)                   # real-feature mask
    vecs = vecs.at[4, :c2].set(params["bg1"][0])
    vecs = vecs.at[5, :cq].set(params["bg2"][0])
    vecs = vecs.at[6, :cq].set(params["bp"][0])

    grid1 = (n_pad // tm, n_pad // tk)
    const2 = lambda i, k: (0, 0)

    weight_bytes = 4 * (wl.size + wr.size + wg1.size + wg2.size + wp.size
                        + vecs.size)

    stage1 = pl.pallas_call(
        functools.partial(_stage1_kernel, c_real=c, tm=tm, tk=tk),
        out_shape=(jax.ShapeDtypeStruct((n_pad, cq_p), bf16),   # gate logits
                   jax.ShapeDtypeStruct((n_pad, cq_p), bf16)),  # projected x
        grid_spec=pltpu.PrefetchScalarGridSpec(
            num_scalar_prefetch=0,
            grid=grid1,
            in_specs=[
                pl.BlockSpec((tm, tk), lambda i, k: (i, k)),    # A counts tile (bf16)
                pl.BlockSpec((n_pad, f_p), const2),             # X resident (bf16)
                pl.BlockSpec((tm, 1), lambda i, k: (i, 0)),     # 1/deg rows (f32)
                pl.BlockSpec((f_p, c_p), const2),               # wl
                pl.BlockSpec((f_p, c_p), const2),               # wr
                pl.BlockSpec((c_p, c2_p), const2),              # wg1
                pl.BlockSpec((c2_p, cq_p), const2),             # wg2
                pl.BlockSpec((c_p, cq_p), const2),              # wp
                pl.BlockSpec((8, LANE), const2),                # stacked vectors
            ],
            out_specs=[pl.BlockSpec((tm, cq_p), lambda i, k: (i, 0)),
                       pl.BlockSpec((tm, cq_p), lambda i, k: (i, 0))],
            scratch_shapes=[pltpu.VMEM((tm, f_p), f32)],        # agg accumulator
        ),
        compiler_params=pltpu.CompilerParams(
            dimension_semantics=("parallel", "arbitrary"),
            vmem_limit_bytes=VMEM_LIMIT),
        cost_estimate=pl.CostEstimate(
            flops=2 * n_pad * n_pad * f_p
                  + 2 * n_pad * (2 * f_p * c_p + c_p * c2_p + c2_p * cq_p
                                 + c_p * cq_p),
            transcendentals=n_pad,                              # LayerNorm rsqrt
            bytes_accessed=a_bf.size * 2          # adjacency streamed once
                           + x_bf.size * 2        # X resident, DMA'd once
                           + inv_deg.size * 4
                           + weight_bytes
                           + 2 * n_pad * cq_p * 2),             # bf16 outputs
    )
    gate, xp = stage1(a_bf, x_bf, inv_deg, wl, wr, wg1, wg2, wp, vecs)

    # Fused softmax-over-nodes + gate*xp + per-row L2 normalize (one launch).
    # TODO(synk): for very large N switch back to a two-pass flash-style
    # column-stats reduction instead of whole-array VMEM blocks.
    out_p = pl.pallas_call(
        functools.partial(_stage2_kernel, n_real=n),
        out_shape=jax.ShapeDtypeStruct((n_pad, cq_p), f32),
        grid_spec=pltpu.PrefetchScalarGridSpec(
            num_scalar_prefetch=0,
            grid=(1,),
            in_specs=[pl.BlockSpec((n_pad, cq_p), lambda i: (0, 0)),
                      pl.BlockSpec((n_pad, cq_p), lambda i: (0, 0))],
            out_specs=pl.BlockSpec((n_pad, cq_p), lambda i: (0, 0)),
        ),
        compiler_params=pltpu.CompilerParams(
            dimension_semantics=("arbitrary",),
            vmem_limit_bytes=VMEM_LIMIT),
    )(gate, xp)

    return out_p[:n, :cq]


# --------------------------------------------------------------------------
# Pure-JAX reference (mimics the kernel's bf16 feature cast; aggregation is
# exact in both since 1/deg is applied in f32 on integer-count sums).
# --------------------------------------------------------------------------
def dbgcn_reference(edge_index, x, params):
    n = x.shape[0]
    src, dst = edge_index
    counts = jnp.zeros((n, n), jnp.float32).at[dst, src].add(1.0)
    deg = jnp.maximum(jnp.sum(counts, axis=1, keepdims=True), 1.0)
    xb = x.astype(jnp.bfloat16).astype(jnp.float32)
    agg = (counts @ xb) / deg
    h = agg @ params["wl"] + params["bl"] + xb @ params["wr"]
    h = jnp.maximum(h, 0.0)
    mean = jnp.mean(h, axis=-1, keepdims=True)
    ctr = h - mean
    var = jnp.mean(ctr * ctr, axis=-1, keepdims=True)
    h = ctr * jax.lax.rsqrt(var + 1e-5) * params["ln_g"] + params["ln_b"]
    g1 = jnp.maximum(h @ params["wg1"] + params["bg1"], 0.0)
    gate = g1 @ params["wg2"] + params["bg2"]
    xp = jnp.maximum(h @ params["wp"] + params["bp"], 0.0)
    gate = jax.nn.softmax(gate, axis=0)
    out = gate * xp
    nrm = jnp.sqrt(jnp.sum(out * out, axis=-1, keepdims=True))
    return out / jnp.maximum(nrm, 1e-12)


if __name__ == "__main__":
    N, F_IN, C = 200, 16, 32      # nodes, in_feats, out_classes (C % 4 == 0)

    key = jax.random.PRNGKey(0)
    keys = jax.random.split(key, 10)

    # deterministic node features
    x = jax.random.normal(keys[0], (N, F_IN), jnp.float32)

    # deterministic ring + chord graph (both directions), edge_index: [2, E]
    idx = jnp.arange(N)
    src = jnp.concatenate([idx, (idx + 1) % N, idx, (idx + 5) % N])
    dst = jnp.concatenate([(idx + 1) % N, idx, (idx + 5) % N, idx])
    edge_index = jnp.stack([src, dst], axis=0).astype(jnp.int32)

    def lin(k, din, dout, scale=0.05):
        return jax.random.normal(k, (din, dout), jnp.float32) * scale

    def bias(k, dout, scale=0.02):
        return jax.random.normal(k, (1, dout), jnp.float32) * scale

    params = dict(
        # SAGEConv: lin_l (with bias) on aggregated neighbors, lin_r (no bias) on self
        wl=lin(keys[1], F_IN, C), bl=bias(keys[2], C), wr=lin(keys[3], F_IN, C),
        # LayerNorm(out_classes)
        ln_g=jnp.ones((1, C), jnp.float32), ln_b=jnp.zeros((1, C), jnp.float32),
        # att_net_ct: Linear(C, C/2) -> ReLU -> Linear(C/2, C/4)
        wg1=lin(keys[4], C, C // 2), bg1=bias(keys[5], C // 2),
        wg2=lin(keys[6], C // 2, C // 4), bg2=bias(keys[7], C // 4),
        # x_project: Linear(C, C/4) -> ReLU
        wp=lin(keys[8], C, C // 4), bp=bias(keys[9], C // 4),
    )

    out = jax.jit(dbgcn_forward)(edge_index, x, params)
    out = jax.block_until_ready(out)
    assert out.shape == (N, C // 4)

    ref = dbgcn_reference(edge_index, x, params)
    max_err = float(jnp.max(jnp.abs(out - ref)))
    assert jnp.allclose(out, ref, atol=2e-2, rtol=2e-2), f"max err {max_err}"

    print("KERNEL_OK")
</pallas_src>

<mosaic_0001>
module attributes {stable_mosaic.version = 11 : i64} {
  func.func @_stage1_kernel(%arg0: i32, %arg1: i32, %arg2: memref<128x256xbf16, #tpu.memory_space<vmem>>, %arg3: memref<256x128xbf16, #tpu.memory_space<vmem>>, %arg4: memref<128x1xf32, #tpu.memory_space<vmem>>, %arg5: memref<128x128xf32, #tpu.memory_space<vmem>>, %arg6: memref<128x128xf32, #tpu.memory_space<vmem>>, %arg7: memref<128x128xf32, #tpu.memory_space<vmem>>, %arg8: memref<128x128xf32, #tpu.memory_space<vmem>>, %arg9: memref<128x128xf32, #tpu.memory_space<vmem>>, %arg10: memref<8x128xf32, #tpu.memory_space<vmem>>, %arg11: memref<128x128xbf16, #tpu.memory_space<vmem>>, %arg12: memref<128x128xbf16, #tpu.memory_space<vmem>>, %arg13: memref<128x128xf32, #tpu.memory_space<vmem>>) attributes {dimension_semantics = [#tpu.dimension_semantics<parallel>, #tpu.dimension_semantics<arbitrary>], iteration_bounds = array<i64: 2, 1>, scalar_prefetch = 0 : i64, scratch_operands = 1 : i64, tpu.core_type = #tpu.core_type<tc>, window_params = [{transform_indices = @transform_0, window_bounds = array<i64: 128, 256>}, {pipeline_mode = #tpu.pipeline_mode<synchronous>, transform_indices = @transform_1, window_bounds = array<i64: 256, 128>}, {transform_indices = @transform_2, window_bounds = array<i64: 128, 1>}, {pipeline_mode = #tpu.pipeline_mode<synchronous>, transform_indices = @transform_3, window_bounds = array<i64: 128, 128>}, {pipeline_mode = #tpu.pipeline_mode<synchronous>, transform_indices = @transform_4, window_bounds = array<i64: 128, 128>}, {pipeline_mode = #tpu.pipeline_mode<synchronous>, transform_indices = @transform_5, window_bounds = array<i64: 128, 128>}, {pipeline_mode = #tpu.pipeline_mode<synchronous>, transform_indices = @transform_6, window_bounds = array<i64: 128, 128>}, {pipeline_mode = #tpu.pipeline_mode<synchronous>, transform_indices = @transform_7, window_bounds = array<i64: 128, 128>}, {pipeline_mode = #tpu.pipeline_mode<synchronous>, transform_indices = @transform_8, window_bounds = array<i64: 8, 128>}, {transform_indices = @transform_9, window_bounds = array<i64: 128, 128>}, {transform_indices = @transform_10, window_bounds = array<i64: 128, 128>}]} {
    %c0_i32 = arith.constant 0 : i32
    %0 = arith.cmpi eq, %arg1, %c0_i32 : i32
    %1 = arith.extui %0 : i1 to i32
    %c0_i32_0 = arith.constant 0 : i32
    %2 = arith.cmpi ne, %1, %c0_i32_0 : i32
    scf.if %2 {
      %cst_9 = arith.constant 0.000000e+00 : f32
      %15 = vector.broadcast %cst_9 : f32 to vector<128x128xf32>
      %c0_10 = arith.constant 0 : index
      %c0_11 = arith.constant 0 : index
      %16 = vector.load %arg13[%c0_10, %c0_11] : memref<128x128xf32, #tpu.memory_space<vmem>>, vector<128x128xf32>
      tpu.vector_store %arg13[%c0_10, %c0_11], %15 {strides = array<i32>} : memref<128x128xf32, #tpu.memory_space<vmem>>, vector<128x128xf32>,
    } else {
    }
    %c256_i32 = arith.constant 256 : i32
    %3 = arith.muli %arg1, %c256_i32 : i32
    %4 = tpu.assume_multiple %3, 256 : i32
    %c0 = arith.constant 0 : index
    %c0_1 = arith.constant 0 : index
    %5 = vector.load %arg13[%c0, %c0_1] : memref<128x128xf32, #tpu.memory_space<vmem>>, vector<128x128xf32>
    %c0_2 = arith.constant 0 : index
    %c0_3 = arith.constant 0 : index
    %6 = vector.load %arg2[%c0_2, %c0_3] : memref<128x256xbf16, #tpu.memory_space<vmem>>, vector<128x256xbf16>
    %7 = arith.index_cast %4 : i32 to index
    %c0_4 = arith.constant 0 : index
    %8 = vector.load %arg3[%7, %c0_4] : memref<256x128xbf16, #tpu.memory_space<vmem>>, vector<256x128xbf16>
    %cst = arith.constant dense<0.000000e+00> : vector<128x128xf32>
    %9 = tpu.matmul %6, %8, %cst {dimension_numbers = #tpu.dot_dimension_numbers<[1], [0], [0], [1], [0, 0, 1, 1], [], []>} : vector<128x256xbf16>, vector<256x128xbf16>, vector<128x128xf32> -> vector<128x128xf32>
    %10 = arith.addf %5, %9 : vector<128x128xf32>
    %c0_5 = arith.constant 0 : index
    %c0_6 = arith.constant 0 : index
    %11 = vector.load %arg13[%c0_5, %c0_6] : memref<128x128xf32, #tpu.memory_space<vmem>>, vector<128x128xf32>
    tpu.vector_store %arg13[%c0_5, %c0_6], %10 {strides = array<i32>} : memref<128x128xf32, #tpu.memory_space<vmem>>, vector<128x128xf32>,
    %c0_i32_7 = arith.constant 0 : i32
    %12 = arith.cmpi eq, %arg1, %c0_i32_7 : i32
    %13 = arith.extui %12 : i1 to i32
    %c0_i32_8 = arith.constant 0 : i32
    %14 = arith.cmpi ne, %13, %c0_i32_8 : i32
    scf.if %14 {
      %c0_9 = arith.constant 0 : index
      %c0_10 = arith.constant 0 : index
      %15 = vector.load %arg10[%c0_9, %c0_10] : memref<8x128xf32, #tpu.memory_space<vmem>>, vector<1x128xf32>
      %c1 = arith.constant 1 : index
      %c0_11 = arith.constant 0 : index
      %16 = vector.load %arg10[%c1, %c0_11] : memref<8x128xf32, #tpu.memory_space<vmem>>, vector<1x128xf32>
      %c2 = arith.constant 2 : index
      %c0_12 = arith.constant 0 : index
      %17 = vector.load %arg10[%c2, %c0_12] : memref<8x128xf32, #tpu.memory_space<vmem>>, vector<1x128xf32>
      %c3 = arith.constant 3 : index
      %c0_13 = arith.constant 0 : index
      %18 = vector.load %arg10[%c3, %c0_13] : memref<8x128xf32, #tpu.memory_space<vmem>>, vector<1x128xf32>
      %c4 = arith.constant 4 : index
      %c0_14 = arith.constant 0 : index
      %19 = vector.load %arg10[%c4, %c0_14] : memref<8x128xf32, #tpu.memory_space<vmem>>, vector<1x128xf32>
      %c5 = arith.constant 5 : index
      %c0_15 = arith.constant 0 : index
      %20 = vector.load %arg10[%c5, %c0_15] : memref<8x128xf32, #tpu.memory_space<vmem>>, vector<1x128xf32>
      %c6 = arith.constant 6 : index
      %c0_16 = arith.constant 0 : index
      %21 = vector.load %arg10[%c6, %c0_16] : memref<8x128xf32, #tpu.memory_space<vmem>>, vector<1x128xf32>
      %c0_17 = arith.constant 0 : index
      %c0_18 = arith.constant 0 : index
      %22 = vector.load %arg13[%c0_17, %c0_18] : memref<128x128xf32, #tpu.memory_space<vmem>>, vector<128x128xf32>
      %c0_19 = arith.constant 0 : index
      %c0_20 = arith.constant 0 : index
      %23 = vector.load %arg4[%c0_19, %c0_20] : memref<128x1xf32, #tpu.memory_space<vmem>>, vector<128x1xf32>
      %24 = vector.broadcast %23 : vector<128x1xf32> to vector<128x128xf32>
      %25 = arith.mulf %22, %24 : vector<128x128xf32>
      %c128_i32 = arith.constant 128 : i32
      %26 = arith.muli %arg0, %c128_i32 : i32
      %27 = tpu.assume_multiple %26, 128 : i32
      %28 = arith.index_cast %27 : i32 to index
      %c0_21 = arith.constant 0 : index
      %29 = vector.load %arg3[%28, %c0_21] : memref<256x128xbf16, #tpu.memory_space<vmem>>, vector<128x128xbf16>
      %30 = arith.extf %29 : vector<128x128xbf16> to vector<128x128xf32>
      %c0_22 = arith.constant 0 : index
      %c0_23 = arith.constant 0 : index
      %31 = vector.load %arg5[%c0_22, %c0_23] : memref<128x128xf32, #tpu.memory_space<vmem>>, vector<128x128xf32>
      %cst_24 = arith.constant dense<0.000000e+00> : vector<128x128xf32>
      %32 = tpu.matmul %25, %31, %cst_24 {dimension_numbers = #tpu.dot_dimension_numbers<[1], [0], [0], [1], [0, 0, 1, 1], [], []>} : vector<128x128xf32>, vector<128x128xf32>, vector<128x128xf32> -> vector<128x128xf32>
      %33 = vector.broadcast %15 : vector<1x128xf32> to vector<128x128xf32>
      %34 = arith.addf %32, %33 : vector<128x128xf32>
      %c0_25 = arith.constant 0 : index
      %c0_26 = arith.constant 0 : index
      %35 = vector.load %arg6[%c0_25, %c0_26] : memref<128x128xf32, #tpu.memory_space<vmem>>, vector<128x128xf32>
      %cst_27 = arith.constant dense<0.000000e+00> : vector<128x128xf32>
      %36 = tpu.matmul %30, %35, %cst_27 {dimension_numbers = #tpu.dot_dimension_numbers<[1], [0], [0], [1], [0, 0, 1, 1], [], []>} : vector<128x128xf32>, vector<128x128xf32>, vector<128x128xf32> -> vector<128x128xf32>
      %37 = arith.addf %34, %36 : vector<128x128xf32>
      %cst_28 = arith.constant 0.000000e+00 : f32
      %38 = vector.broadcast %cst_28 : f32 to vector<128x128xf32>
      %39 = arith.maximumf %37, %38 : vector<128x128xf32>
      %cst_29 = arith.constant dense<0.000000e+00> : vector<128xf32>
      %40 = vector.multi_reduction <add>, %39, %cst_29 [1] : vector<128x128xf32> to vector<128xf32>
      %41 = vector.shape_cast %40 : vector<128xf32> to vector<128x1xf32>
      %cst_30 = arith.constant 3.125000e-02 : f32
      %42 = vector.broadcast %cst_30 : f32 to vector<128x1xf32>
      %43 = arith.mulf %41, %42 : vector<128x1xf32>
      %44 = vector.broadcast %43 : vector<128x1xf32> to vector<128x128xf32>
      %45 = arith.subf %39, %44 : vector<128x128xf32>
      %46 = vector.broadcast %18 : vector<1x128xf32> to vector<128x128xf32>
      %47 = arith.mulf %45, %46 : vector<128x128xf32>
      %48 = arith.mulf %47, %47 : vector<128x128xf32>
      %cst_31 = arith.constant dense<0.000000e+00> : vector<128xf32>
      %49 = vector.multi_reduction <add>, %48, %cst_31 [1] : vector<128x128xf32> to vector<128xf32>
      %50 = vector.shape_cast %49 : vector<128xf32> to vector<128x1xf32>
      %cst_32 = arith.constant 3.125000e-02 : f32
      %51 = vector.broadcast %cst_32 : f32 to vector<128x1xf32>
      %52 = arith.mulf %50, %51 : vector<128x1xf32>
      %cst_33 = arith.constant 9.99999974E-6 : f32
      %53 = vector.broadcast %cst_33 : f32 to vector<128x1xf32>
      %54 = arith.addf %52, %53 : vector<128x1xf32>
      %55 = math.rsqrt %54 : vector<128x1xf32>
      %56 = vector.broadcast %55 : vector<128x1xf32> to vector<128x128xf32>
      %57 = arith.mulf %47, %56 : vector<128x128xf32>
      %58 = vector.broadcast %16 : vector<1x128xf32> to vector<128x128xf32>
      %59 = arith.mulf %57, %58 : vector<128x128xf32>
      %60 = vector.broadcast %17 : vector<1x128xf32> to vector<128x128xf32>
      %61 = arith.addf %59, %60 : vector<128x128xf32>
      %c0_34 = arith.constant 0 : index
      %c0_35 = arith.constant 0 : index
      %62 = vector.load %arg7[%c0_34, %c0_35] : memref<128x128xf32, #tpu.memory_space<vmem>>, vector<128x128xf32>
      %cst_36 = arith.constant dense<0.000000e+00> : vector<128x128xf32>
      %63 = tpu.matmul %61, %62, %cst_36 {dimension_numbers = #tpu.dot_dimension_numbers<[1], [0], [0], [1], [0, 0, 1, 1], [], []>} : vector<128x128xf32>, vector<128x128xf32>, vector<128x128xf32> -> vector<128x128xf32>
      %64 = vector.broadcast %19 : vector<1x128xf32> to vector<128x128xf32>
      %65 = arith.addf %63, %64 : vector<128x128xf32>
      %cst_37 = arith.constant 0.000000e+00 : f32
      %66 = vector.broadcast %cst_37 : f32 to vector<128x128xf32>
      %67 = arith.maximumf %65, %66 : vector<128x128xf32>
      %c0_38 = arith.constant 0 : index
      %c0_39 = arith.constant 0 : index
      %68 = vector.load %arg8[%c0_38, %c0_39] : memref<128x128xf32, #tpu.memory_space<vmem>>, vector<128x128xf32>
      %cst_40 = arith.constant dense<0.000000e+00> : vector<128x128xf32>
      %69 = tpu.matmul %67, %68, %cst_40 {dimension_numbers = #tpu.dot_dimension_numbers<[1], [0], [0], [1], [0, 0, 1, 1], [], []>} : vector<128x128xf32>, vector<128x128xf32>, vector<128x128xf32> -> vector<128x128xf32>
      %70 = vector.broadcast %20 : vector<1x128xf32> to vector<128x128xf32>
      %71 = arith.addf %69, %70 : vector<128x128xf32>
      %c0_41 = arith.constant 0 : index
      %c0_42 = arith.constant 0 : index
      %72 = vector.load %arg9[%c0_41, %c0_42] : memref<128x128xf32, #tpu.memory_space<vmem>>, vector<128x128xf32>
      %cst_43 = arith.constant dense<0.000000e+00> : vector<128x128xf32>
      %73 = tpu.matmul %61, %72, %cst_43 {dimension_numbers = #tpu.dot_dimension_numbers<[1], [0], [0], [1], [0, 0, 1, 1], [], []>} : vector<128x128xf32>, vector<128x128xf32>, vector<128x128xf32> -> vector<128x128xf32>
      %74 = vector.broadcast %21 : vector<1x128xf32> to vector<128x128xf32>
      %75 = arith.addf %73, %74 : vector<128x128xf32>
      %cst_44 = arith.constant 0.000000e+00 : f32
      %76 = vector.broadcast %cst_44 : f32 to vector<128x128xf32>
      %77 = arith.maximumf %75, %76 : vector<128x128xf32>
      %78 = arith.truncf %71 : vector<128x128xf32> to vector<128x128xbf16>
      %c0_45 = arith.constant 0 : index
      %c0_46 = arith.constant 0 : index
      %79 = vector.load %arg11[%c0_45, %c0_46] : memref<128x128xbf16, #tpu.memory_space<vmem>>, vector<128x128xbf16>
      tpu.vector_store %arg11[%c0_45, %c0_46], %78 {strides = array<i32>} : memref<128x128xbf16, #tpu.memory_space<vmem>>, vector<128x128xbf16>,
      %80 = arith.truncf %77 : vector<128x128xf32> to vector<128x128xbf16>
      %c0_47 = arith.constant 0 : index
      %c0_48 = arith.constant 0 : index
      %81 = vector.load %arg12[%c0_47, %c0_48] : memref<128x128xbf16, #tpu.memory_space<vmem>>, vector<128x128xbf16>
      tpu.vector_store %arg12[%c0_47, %c0_48], %80 {strides = array<i32>} : memref<128x128xbf16, #tpu.memory_space<vmem>>, vector<128x128xbf16>,
    } else {
    }
    return
  }
  func.func @transform_0(%arg0: i32, %arg1: i32) -> (i32, i32) {
    %c0_i32 = arith.constant 0 : i32
    return %arg0, %arg1 : i32, i32
  }
  func.func @transform_1(%arg0: i32, %arg1: i32) -> (i32, i32) {
    %c0_i32 = arith.constant 0 : i32
    %c0_i32_0 = arith.constant 0 : i32
    %c0_i32_1 = arith.constant 0 : i32
    return %c0_i32, %c0_i32_0 : i32, i32
  }
  func.func @transform_2(%arg0: i32, %arg1: i32) -> (i32, i32) {
    %c0_i32 = arith.constant 0 : i32
    %c0_i32_0 = arith.constant 0 : i32
    return %arg0, %c0_i32 : i32, i32
  }
  func.func @transform_3(%arg0: i32, %arg1: i32) -> (i32, i32) {
    %c0_i32 = arith.constant 0 : i32
    %c0_i32_0 = arith.constant 0 : i32
    %c0_i32_1 = arith.constant 0 : i32
    return %c0_i32, %c0_i32_0 : i32, i32
  }
  func.func @transform_4(%arg0: i32, %arg1: i32) -> (i32, i32) {
    %c0_i32 = arith.constant 0 : i32
    %c0_i32_0 = arith.constant 0 : i32
    %c0_i32_1 = arith.constant 0 : i32
    return %c0_i32, %c0_i32_0 : i32, i32
  }
  func.func @transform_5(%arg0: i32, %arg1: i32) -> (i32, i32) {
    %c0_i32 = arith.constant 0 : i32
    %c0_i32_0 = arith.constant 0 : i32
    %c0_i32_1 = arith.constant 0 : i32
    return %c0_i32, %c0_i32_0 : i32, i32
  }
  func.func @transform_6(%arg0: i32, %arg1: i32) -> (i32, i32) {
    %c0_i32 = arith.constant 0 : i32
    %c0_i32_0 = arith.constant 0 : i32
    %c0_i32_1 = arith.constant 0 : i32
    return %c0_i32, %c0_i32_0 : i32, i32
  }
  func.func @transform_7(%arg0: i32, %arg1: i32) -> (i32, i32) {
    %c0_i32 = arith.constant 0 : i32
    %c0_i32_0 = arith.constant 0 : i32
    %c0_i32_1 = arith.constant 0 : i32
    return %c0_i32, %c0_i32_0 : i32, i32
  }
  func.func @transform_8(%arg0: i32, %arg1: i32) -> (i32, i32) {
    %c0_i32 = arith.constant 0 : i32
    %c0_i32_0 = arith.constant 0 : i32
    %c0_i32_1 = arith.constant 0 : i32
    return %c0_i32, %c0_i32_0 : i32, i32
  }
  func.func @transform_9(%arg0: i32, %arg1: i32) -> (i32, i32) {
    %c0_i32 = arith.constant 0 : i32
    %c0_i32_0 = arith.constant 0 : i32
    return %arg0, %c0_i32 : i32, i32
  }
  func.func @transform_10(%arg0: i32, %arg1: i32) -> (i32, i32) {
    %c0_i32 = arith.constant 0 : i32
    %c0_i32_0 = arith.constant 0 : i32
    return %arg0, %c0_i32 : i32, i32
  }
}

module attributes {stable_mosaic.version = 11 : i64} {
  func.func @_stage2_kernel(%arg0: i32, %arg1: memref<256x128xbf16, #tpu.memory_space<vmem>>, %arg2: memref<256x128xbf16, #tpu.memory_space<vmem>>, %arg3: memref<256x128xf32, #tpu.memory_space<vmem>>) attributes {dimension_semantics = [#tpu.dimension_semantics<arbitrary>], iteration_bounds = array<i64: 1>, scalar_prefetch = 0 : i64, scratch_operands = 0 : i64, tpu.core_type = #tpu.core_type<tc>, window_params = [{pipeline_mode = #tpu.pipeline_mode<synchronous>, transform_indices = @transform_0, window_bounds = array<i64: 256, 128>}, {pipeline_mode = #tpu.pipeline_mode<synchronous>, transform_indices = @transform_1, window_bounds = array<i64: 256, 128>}, {pipeline_mode = #tpu.pipeline_mode<synchronous>, transform_indices = @transform_2, window_bounds = array<i64: 256, 128>}]} {
    %c0 = arith.constant 0 : index
    %c0_0 = arith.constant 0 : index
    %0 = vector.load %arg1[%c0, %c0_0] : memref<256x128xbf16, #tpu.memory_space<vmem>>, vector<256x128xbf16>
    %1 = arith.extf %0 : vector<256x128xbf16> to vector<256x128xf32>
    %c0_1 = arith.constant 0 : index
    %c0_2 = arith.constant 0 : index
    %2 = vector.load %arg2[%c0_1, %c0_2] : memref<256x128xbf16, #tpu.memory_space<vmem>>, vector<256x128xbf16>
    %3 = arith.extf %2 : vector<256x128xbf16> to vector<256x128xf32>
    %4 = tpu.iota {dimensions = array<i32: 0>} : vector<256x128xi32>
    %c200_i32 = arith.constant 200 : i32
    %5 = vector.broadcast %c200_i32 : i32 to vector<256x128xi32>
    %6 = arith.cmpi slt, %4, %5 : vector<256x128xi32>
    %cst = arith.constant -1.000000e+30 : f32
    %7 = vector.broadcast %cst : f32 to vector<256x128xf32>
    %8 = arith.select %6, %1, %7 : vector<256x128xi1>, vector<256x128xf32>
    %cst_3 = arith.constant dense<0xFF800000> : vector<128xf32>
    %9 = vector.multi_reduction <maximumf>, %8, %cst_3 [0] : vector<256x128xf32> to vector<128xf32>
    %10 = vector.shape_cast %9 : vector<128xf32> to vector<1x128xf32>
    %11 = vector.broadcast %10 : vector<1x128xf32> to vector<256x128xf32>
    %12 = arith.subf %8, %11 : vector<256x128xf32>
    %13 = math.exp %12 : vector<256x128xf32>
    %cst_4 = arith.constant dense<0.000000e+00> : vector<128xf32>
    %14 = vector.multi_reduction <add>, %13, %cst_4 [0] : vector<256x128xf32> to vector<128xf32>
    %15 = vector.shape_cast %14 : vector<128xf32> to vector<1x128xf32>
    %16 = tpu.reciprocal %15 {approx = true} : vector<1x128xf32> -> vector<1x128xf32>
    %17 = vector.broadcast %16 : vector<1x128xf32> to vector<256x128xf32>
    %18 = arith.mulf %13, %17 : vector<256x128xf32>
    %19 = arith.mulf %18, %3 : vector<256x128xf32>
    %20 = arith.mulf %19, %19 : vector<256x128xf32>
    %cst_5 = arith.constant dense<0.000000e+00> : vector<256xf32>
    %21 = vector.multi_reduction <add>, %20, %cst_5 [1] : vector<256x128xf32> to vector<256xf32>
    %22 = vector.shape_cast %21 : vector<256xf32> to vector<256x1xf32>
    %cst_6 = arith.constant 1.000000e-24 : f32
    %23 = vector.broadcast %cst_6 : f32 to vector<256x1xf32>
    %24 = arith.maximumf %22, %23 : vector<256x1xf32>
    %25 = math.rsqrt %24 : vector<256x1xf32>
    %26 = vector.broadcast %25 : vector<256x1xf32> to vector<256x128xf32>
    %27 = arith.mulf %19, %26 : vector<256x128xf32>
    %c0_7 = arith.constant 0 : index
    %c0_8 = arith.constant 0 : index
    %28 = vector.load %arg3[%c0_7, %c0_8] : memref<256x128xf32, #tpu.memory_space<vmem>>, vector<256x128xf32>
    tpu.vector_store %arg3[%c0_7, %c0_8], %27 {strides = array<i32>} : memref<256x128xf32, #tpu.memory_space<vmem>>, vector<256x128xf32>,
    return
  }
  func.func @transform_0(%arg0: i32) -> (i32, i32) {
    %c0_i32 = arith.constant 0 : i32
    %c0_i32_0 = arith.constant 0 : i32
    %c0_i32_1 = arith.constant 0 : i32
    return %c0_i32, %c0_i32_0 : i32, i32
  }
  func.func @transform_1(%arg0: i32) -> (i32, i32) {
    %c0_i32 = arith.constant 0 : i32
    %c0_i32_0 = arith.constant 0 : i32
    %c0_i32_1 = arith.constant 0 : i32
    return %c0_i32, %c0_i32_0 : i32, i32
  }
  func.func @transform_2(%arg0: i32) -> (i32, i32) {
    %c0_i32 = arith.constant 0 : i32
    %c0_i32_0 = arith.constant 0 : i32
    %c0_i32_1 = arith.constant 0 : i32
    return %c0_i32, %c0_i32_0 : i32, i32
  }
}

</mosaic_0001>

<llo_original>
// kernel: dbgcn_forward.3
$region0: #{dbgcn_forward.3}
  #allocation0 [shape = 'u32[]', space=smem, size = 0x4, offset = 0x4, fixed_abs, tag = 'smem constant byte address 0x4 - core index']
  #allocation1 [shape = 'u32[72,128]{1,0:T(1,128)}', space=vmem, size = 0x9000, scoped, tag = 'internal scratch']
  %s0 = inlined_call_operand.vmem [shape: bf16[256,128], index: 0, kind: input, shape index: {}]
  %s1 = inlined_call_operand.vmem [shape: bf16[256,128], index: 1, kind: input, shape index: {}]
  %s2 = inlined_call_operand.vmem [shape: f32[256,128], index: 2, kind: output, shape index: {}]
  %s3 = sld [smem:[#allocation0]]
  $region18: #{dbgcn_forward.3} parent=0
    _
  %s5 = ssub.s32 1, %s3
  %s6 = scalar_select 0, %s5, %s3
  // Predicated region
  $region2: #{dbgcn_forward.3} parent=0 // pred_check
    _
  $region3: #{dbgcn_forward.3} parent=0 // pred_check_branch
    %8 = sbr.rel (0) target = $region5
  $region4: #{dbgcn_forward.3} parent=0 // pred_region
    _
  $region5: #{dbgcn_forward.3} parent=0 // pred_fallthru
    _
  // Predicated region
  $region6: #{dbgcn_forward.3} parent=0 // pred_check
    _
  $region7: #{dbgcn_forward.3} parent=0 // pred_check_branch
    %10 = sbr.rel (0) target = $region9
  $region8: #{dbgcn_forward.3} parent=0 // pred_region
    _
  $region9: #{dbgcn_forward.3} parent=0 // pred_fallthru
    _
  %v11 = vld [vmem:[%s0] sm:$0xf]
  %v12 = vld [vmem:[%s0 + $0x4] sm:$0xf]
  %v13 = vld [vmem:[%s0 + $0x8] sm:$0xf]
  %v14 = vld [vmem:[%s0 + $0xc] sm:$0xf]
  %v15 = vld [vmem:[%s0 + $0x10] sm:$0xf]
  %v16 = vld [vmem:[%s0 + $0x14] sm:$0xf]
  %v17 = vld [vmem:[%s0 + $0x18] sm:$0xf]
  %v18 = vld [vmem:[%s0 + $0x1c] sm:$0xf]
  %v19 = vld [vmem:[%s0 + $0x20] sm:$0xf]
  %v20 = vld [vmem:[%s0 + $0x24] sm:$0xf]
  %v21 = vld [vmem:[%s0 + $0x28] sm:$0xf]
  %v22 = vld [vmem:[%s0 + $0x2c] sm:$0xf]
  %v23 = vld [vmem:[%s0 + $0x30] sm:$0xf]
  %v24 = vld [vmem:[%s0 + $0x34] sm:$0xf]
  %v25 = vld [vmem:[%s0 + $0x38] sm:$0xf]
  %v26 = vld [vmem:[%s0 + $0x3c] sm:$0xf]
  %v27 = vld [vmem:[%s0 + $0x40] sm:$0xf]
  %v28 = vld [vmem:[%s0 + $0x44] sm:$0xf]
  %v29 = vld [vmem:[%s0 + $0x48] sm:$0xf]
  %v30 = vld [vmem:[%s0 + $0x4c] sm:$0xf]
  %v31 = vld [vmem:[%s0 + $0x50] sm:$0xf]
  %v32 = vld [vmem:[%s0 + $0x54] sm:$0xf]
  %v33 = vld [vmem:[%s0 + $0x58] sm:$0xf]
  %v34 = vld [vmem:[%s0 + $0x5c] sm:$0xf]
  %v35 = vld [vmem:[%s0 + $0x60] sm:$0xf]
  %v36 = vld [vmem:[%s0 + $0x64] sm:$0xf]
  %v37 = vld [vmem:[%s0 + $0x68] sm:$0xf]
  %v38 = vld [vmem:[%s0 + $0x6c] sm:$0xf]
  %v39 = vld [vmem:[%s0 + $0x70] sm:$0xf]
  %v40 = vld [vmem:[%s0 + $0x74] sm:$0xf]
  %v41 = vld [vmem:[%s0 + $0x78] sm:$0xf]
  %v42 = vld [vmem:[%s0 + $0x7c] sm:$0xf]
  %v43 = vunpack.c.l.bf16 %v11
  %v44 = vunpack.c.l.bf16 %v12
  %v45 = vunpack.c.l.bf16 %v13
  %v46 = vunpack.c.l.bf16 %v14
  %v47 = vunpack.c.l.bf16 %v15
  %v48 = vunpack.c.l.bf16 %v16
  %v49 = vunpack.c.l.bf16 %v17
  %v50 = vunpack.c.l.bf16 %v18
  %v51 = vunpack.c.l.bf16 %v19
  %v52 = vunpack.c.l.bf16 %v20
  %v53 = vunpack.c.l.bf16 %v21
  %v54 = vunpack.c.l.bf16 %v22
  %v55 = vunpack.c.l.bf16 %v23
  %v56 = vunpack.c.l.bf16 %v24
  %v57 = vunpack.c.l.bf16 %v25
  %v58 = vunpack.c.l.bf16 %v26
  %v59 = vunpack.c.l.bf16 %v27
  %v60 = vunpack.c.l.bf16 %v28
  %v61 = vunpack.c.l.bf16 %v29
  %v62 = vunpack.c.l.bf16 %v30
  %v63 = vunpack.c.l.bf16 %v31
  %v64 = vunpack.c.l.bf16 %v32
  %v65 = vunpack.c.l.bf16 %v33
  %v66 = vunpack.c.l.bf16 %v34
  %v67 = vunpack.c.l.bf16 %v35
  %v68 = vunpack.c.l.bf16 %v36
  %v69 = vunpack.c.l.bf16 %v37
  %v70 = vunpack.c.l.bf16 %v38
  %v71 = vunpack.c.l.bf16 %v39
  %v72 = vunpack.c.l.bf16 %v40
  %v73 = vunpack.c.l.bf16 %v41
  %v74 = vunpack.c.l.bf16 %v42
  %v75 = vld [vmem:[%s1] sm:$0xf]
  %v76 = vld [vmem:[%s1 + $0x4] sm:$0xf]
  %v77 = vld [vmem:[%s1 + $0x8] sm:$0xf]
  %v78 = vld [vmem:[%s1 + $0xc] sm:$0xf]
  %v79 = vld [vmem:[%s1 + $0x10] sm:$0xf]
  %v80 = vld [vmem:[%s1 + $0x14] sm:$0xf]
  %v81 = vld [vmem:[%s1 + $0x18] sm:$0xf]
  %v82 = vld [vmem:[%s1 + $0x1c] sm:$0xf]
  %v83 = vld [vmem:[%s1 + $0x20] sm:$0xf]
  %v84 = vld [vmem:[%s1 + $0x24] sm:$0xf]
  %v85 = vld [vmem:[%s1 + $0x28] sm:$0xf]
  %v86 = vld [vmem:[%s1 + $0x2c] sm:$0xf]
  %v87 = vld [vmem:[%s1 + $0x30] sm:$0xf]
  %v88 = vld [vmem:[%s1 + $0x34] sm:$0xf]
  %v89 = vld [vmem:[%s1 + $0x38] sm:$0xf]
  %v90 = vld [vmem:[%s1 + $0x3c] sm:$0xf]
  %v91 = vld [vmem:[%s1 + $0x40] sm:$0xf]
  %v92 = vld [vmem:[%s1 + $0x44] sm:$0xf]
  %v93 = vld [vmem:[%s1 + $0x48] sm:$0xf]
  %v94 = vld [vmem:[%s1 + $0x4c] sm:$0xf]
  %v95 = vld [vmem:[%s1 + $0x50] sm:$0xf]
  %v96 = vld [vmem:[%s1 + $0x54] sm:$0xf]
  %v97 = vld [vmem:[%s1 + $0x58] sm:$0xf]
  %v98 = vld [vmem:[%s1 + $0x5c] sm:$0xf]
  %v99 = vld [vmem:[%s1 + $0x60] sm:$0xf]
  %v100 = vld [vmem:[%s1 + $0x64] sm:$0xf]
  %v101 = vld [vmem:[%s1 + $0x68] sm:$0xf]
  %v102 = vld [vmem:[%s1 + $0x6c] sm:$0xf]
  %v103 = vld [vmem:[%s1 + $0x70] sm:$0xf]
  %v104 = vld [vmem:[%s1 + $0x74] sm:$0xf]
  %v105 = vld [vmem:[%s1 + $0x78] sm:$0xf]
  %v106 = vld [vmem:[%s1 + $0x7c] sm:$0xf]
  %v107 = vunpack.c.l.bf16 %v75
  %v108 = vunpack.c.l.bf16 %v76
  %v109 = vunpack.c.l.bf16 %v77
  %v110 = vunpack.c.l.bf16 %v78
  %v111 = vunpack.c.l.bf16 %v79
  %v112 = vunpack.c.l.bf16 %v80
  %v113 = vunpack.c.l.bf16 %v81
  %v114 = vunpack.c.l.bf16 %v82
  %v115 = vunpack.c.l.bf16 %v83
  %v116 = vunpack.c.l.bf16 %v84
  %v117 = vunpack.c.l.bf16 %v85
  %v118 = vunpack.c.l.bf16 %v86
  %v119 = vunpack.c.l.bf16 %v87
  %v120 = vunpack.c.l.bf16 %v88
  %v121 = vunpack.c.l.bf16 %v89
  %v122 = vunpack.c.l.bf16 %v90
  %v123 = vunpack.c.l.bf16 %v91
  %v124 = vunpack.c.l.bf16 %v92
  %v125 = vunpack.c.l.bf16 %v93
  %v126 = vunpack.c.l.bf16 %v94
  %v127 = vunpack.c.l.bf16 %v95
  %v128 = vunpack.c.l.bf16 %v96
  %v129 = vunpack.c.l.bf16 %v97
  %v130 = vunpack.c.l.bf16 %v98
  %v131 = vunpack.c.l.bf16 %v99
  %v132 = vunpack.c.l.bf16 %v100
  %v133 = vunpack.c.l.bf16 %v101
  %v134 = vunpack.c.l.bf16 %v102
  %v135 = vunpack.c.l.bf16 %v103
  %v136 = vunpack.c.l.bf16 %v104
  %v137 = vunpack.c.l.bf16 %v105
  %v138 = vunpack.c.l.bf16 %v106
  %v139 = vlaneseq
  %v140 = vshrl.u32 %v139, 7
  %v141 = vadd.s32 %v140, 8
  %v142 = vadd.s32 %v140, 16
  %v143 = vadd.s32 %v140, 24
  %v144 = vadd.s32 %v140, 32
  %v145 = vadd.s32 %v140, 40
  %v146 = vadd.s32 %v140, 48
  %v147 = vadd.s32 %v140, 56
  %v148 = vadd.s32 %v140, 64
  %v149 = vadd.s32 %v140, 72
  %v150 = vadd.s32 %v140, 80
  %v151 = vadd.s32 %v140, 88
  %v152 = vadd.s32 %v140, 96
  %v153 = vadd.s32 %v140, 104
  %v154 = vadd.s32 %v140, 112
  %v155 = vadd.s32 %v140, 120
  %v156 = vadd.s32 %v140, 128
  %v157 = vadd.s32 %v140, 136
  %v158 = vadd.s32 %v140, 144
  %v159 = vadd.s32 %v140, 152
  %v160 = vadd.s32 %v140, 160
  %v161 = vadd.s32 %v140, 168
  %v162 = vadd.s32 %v140, 176
  %v163 = vadd.s32 %v140, 184
  %v164 = vadd.s32 %v140, 192
  %v165 = vadd.s32 %v140, 200
  %v166 = vadd.s32 %v140, 208
  %v167 = vadd.s32 %v140, 216
  %v168 = vadd.s32 %v140, 224
  %v169 = vadd.s32 %v140, 232
  %v170 = vadd.s32 %v140, 240
  %v171 = vadd.s32 %v140, 248
  %vm172 = vcmp.lt.s32.totalorder %v140, 200
  %vm173 = vcmp.lt.s32.totalorder %v141, 200
  %vm174 = vcmp.lt.s32.totalorder %v142, 200
  %vm175 = vcmp.lt.s32.totalorder %v143, 200
  %vm176 = vcmp.lt.s32.totalorder %v144, 200
  %vm177 = vcmp.lt.s32.totalorder %v145, 200
  %vm178 = vcmp.lt.s32.totalorder %v146, 200
  %vm179 = vcmp.lt.s32.totalorder %v147, 200
  %vm180 = vcmp.lt.s32.totalorder %v148, 200
  %vm181 = vcmp.lt.s32.totalorder %v149, 200
  %vm182 = vcmp.lt.s32.totalorder %v150, 200
  %vm183 = vcmp.lt.s32.totalorder %v151, 200
  %vm184 = vcmp.lt.s32.totalorder %v152, 200
  %vm185 = vcmp.lt.s32.totalorder %v153, 200
  %vm186 = vcmp.lt.s32.totalorder %v154, 200
  %vm187 = vcmp.lt.s32.totalorder %v155, 200
  %vm188 = vcmp.lt.s32.totalorder %v156, 200
  %vm189 = vcmp.lt.s32.totalorder %v157, 200
  %vm190 = vcmp.lt.s32.totalorder %v158, 200
  %vm191 = vcmp.lt.s32.totalorder %v159, 200
  %vm192 = vcmp.lt.s32.totalorder %v160, 200
  %vm193 = vcmp.lt.s32.totalorder %v161, 200
  %vm194 = vcmp.lt.s32.totalorder %v162, 200
  %vm195 = vcmp.lt.s32.totalorder %v163, 200
  %vm196 = vcmp.lt.s32.totalorder %v164, 200
  %vm197 = vcmp.lt.s32.totalorder %v165, 200
  %vm198 = vcmp.lt.s32.totalorder %v166, 200
  %vm199 = vcmp.lt.s32.totalorder %v167, 200
  %vm200 = vcmp.lt.s32.totalorder %v168, 200
  %vm201 = vcmp.lt.s32.totalorder %v169, 200
  %vm202 = vcmp.lt.s32.totalorder %v170, 200
  %vm203 = vcmp.lt.s32.totalorder %v171, 200
  %v204 = vsel %vm172, %v43, -1e+30
  %v205 = vsel %vm173, %v44, -1e+30
  %v206 = vsel %vm174, %v45, -1e+30
  %v207 = vsel %vm175, %v46, -1e+30
  %v208 = vsel %vm176, %v47, -1e+30
  %v209 = vsel %vm177, %v48, -1e+30
  %v210 = vsel %vm178, %v49, -1e+30
  %v211 = vsel %vm179, %v50, -1e+30
  %v212 = vsel %vm180, %v51, -1e+30
  %v213 = vsel %vm181, %v52, -1e+30
  %v214 = vsel %vm182, %v53, -1e+30
  %v215 = vsel %vm183, %v54, -1e+30
  %v216 = vsel %vm184, %v55, -1e+30
  %v217 = vsel %vm185, %v56, -1e+30
  %v218 = vsel %vm186, %v57, -1e+30
  %v219 = vsel %vm187, %v58, -1e+30
  %v220 = vsel %vm188, %v59, -1e+30
  %v221 = vsel %vm189, %v60, -1e+30
  %v222 = vsel %vm190, %v61, -1e+30
  %v223 = vsel %vm191, %v62, -1e+30
  %v224 = vsel %vm192, %v63, -1e+30
  %v225 = vsel %vm193, %v64, -1e+30
  %v226 = vsel %vm194, %v65, -1e+30
  %v227 = vsel %vm195, %v66, -1e+30
  %v228 = vsel %vm196, %v67, -1e+30
  %v229 = vsel %vm197, %v68, -1e+30
  %v230 = vsel %vm198, %v69, -1e+30
  %v231 = vsel %vm199, %v70, -1e+30
  %v232 = vsel %vm200, %v71, -1e+30
  %v233 = vsel %vm201, %v72, -1e+30
  %v234 = vsel %vm202, %v73, -1e+30
  %v235 = vsel %vm203, %v74, -1e+30
  %v236 = vmax.f32 %v204, %v208
  %v237 = vmax.f32 %v205, %v209
  %v238 = vmax.f32 %v206, %v210
  %v239 = vmax.f32 %v207, %v211
  %v240 = vmax.f32 %v236, %v212
  %v241 = vmax.f32 %v237, %v213
  %v242 = vmax.f32 %v238, %v214
  %v243 = vmax.f32 %v239, %v215
  %v244 = vmax.f32 %v240, %v216
  %v245 = vmax.f32 %v241, %v217
  %v246 = vmax.f32 %v242, %v218
  %v247 = vmax.f32 %v243, %v219
  %v248 = vmax.f32 %v244, %v220
  %v249 = vmax.f32 %v245, %v221
  %v250 = vmax.f32 %v246, %v222
  %v251 = vmax.f32 %v247, %v223
  %v252 = vmax.f32 %v248, %v224
  %v253 = vmax.f32 %v249, %v225
  %v254 = vmax.f32 %v250, %v226
  %v255 = vmax.f32 %v251, %v227
  %v256 = vmax.f32 %v252, %v228
  %v257 = vmax.f32 %v253, %v229
  %v258 = vmax.f32 %v254, %v230
  %v259 = vmax.f32 %v255, %v231
  %v260 = vmax.f32 %v256, %v232
  %v261 = vmax.f32 %v257, %v233
  %v262 = vmax.f32 %v258, %v234
  %v263 = vmax.f32 %v259, %v235
  %v264 = vmax.f32 %v260, %v261
  %v265 = vmax.f32 %v262, %v263
  %v266 = vmax.f32 %v264, %v265
  %v267 = vrot.slane %v266, 4
  %v268 = vmax.f32 %v266, %v267
  %v269 = vrot.slane %v268, 2
  %v270 = vmax.f32 %v268, %v269
  %v271 = vrot.slane %v270, 1
  %v272 = vmax.f32 %v270, %v271
  %v273 = vsub.f32 %v204, %v272
  %v274 = vsub.f32 %v205, %v272
  %v275 = vsub.f32 %v206, %v272
  %v276 = vsub.f32 %v207, %v272
  %v277 = vsub.f32 %v208, %v272
  %v278 = vsub.f32 %v209, %v272
  %v279 = vsub.f32 %v210, %v272
  %v280 = vsub.f32 %v211, %v272
  %v281 = vsub.f32 %v212, %v272
  %v282 = vsub.f32 %v213, %v272
  %v283 = vsub.f32 %v214, %v272
  %v284 = vsub.f32 %v215, %v272
  %v285 = vsub.f32 %v216, %v272
  %v286 = vsub.f32 %v217, %v272
  %v287 = vsub.f32 %v218, %v272
  %v288 = vsub.f32 %v219, %v272
  %v289 = vsub.f32 %v220, %v272
  %v290 = vsub.f32 %v221, %v272
  %v291 = vsub.f32 %v222, %v272
  %v292 = vsub.f32 %v223, %v272
  %v293 = vsub.f32 %v224, %v272
  %v294 = vsub.f32 %v225, %v272
  %v295 = vsub.f32 %v226, %v272
  %v296 = vsub.f32 %v227, %v272
  %v297 = vsub.f32 %v228, %v272
  %v298 = vsub.f32 %v229, %v272
  %v299 = vsub.f32 %v230, %v272
  %v300 = vsub.f32 %v231, %v272
  %v301 = vsub.f32 %v232, %v272
  %v302 = vsub.f32 %v233, %v272
  %v303 = vsub.f32 %v234, %v272
  %v304 = vsub.f32 %v235, %v272
  %v305 = vmul.f32 %v273, 1.442695
  %v306 = vpow.pop %v305
  %v307 = vmul.f32 %v274, 1.442695
  %v308 = vpow.pop %v307
  %v309 = vmul.f32 %v275, 1.442695
  %v310 = vpow.pop %v309
  %v311 = vmul.f32 %v276, 1.442695
  %v312 = vpow.pop %v311
  %v313 = vmul.f32 %v277, 1.442695
  %v314 = vpow.pop %v313
  %v315 = vmul.f32 %v278, 1.442695
  %v316 = vpow.pop %v315
  %v317 = vmul.f32 %v279, 1.442695
  %v318 = vpow.pop %v317
  %v319 = vmul.f32 %v280, 1.442695
  %v320 = vpow.pop %v319
  %v321 = vmul.f32 %v281, 1.442695
  %v322 = vpow.pop %v321
  %v323 = vmul.f32 %v282, 1.442695
  %v324 = vpow.pop %v323
  %v325 = vmul.f32 %v283, 1.442695
  %v326 = vpow.pop %v325
  %v327 = vmul.f32 %v284, 1.442695
  %v328 = vpow.pop %v327
  %v329 = vmul.f32 %v285, 1.442695
  %v330 = vpow.pop %v329
  %v331 = vmul.f32 %v286, 1.442695
  %v332 = vpow.pop %v331
  %v333 = vmul.f32 %v287, 1.442695
  %v334 = vpow.pop %v333
  %v335 = vmul.f32 %v288, 1.442695
  %v336 = vpow.pop %v335
  %v337 = vmul.f32 %v289, 1.442695
  %v338 = vpow.pop %v337
  %v339 = vmul.f32 %v290, 1.442695
  %v340 = vpow.pop %v339
  %v341 = vmul.f32 %v291, 1.442695
  %v342 = vpow.pop %v341
  %v343 = vmul.f32 %v292, 1.442695
  %v344 = vpow.pop %v343
  %v345 = vmul.f32 %v293, 1.442695
  %v346 = vpow.pop %v345
  %v347 = vmul.f32 %v294, 1.442695
  %v348 = vpow.pop %v347
  %v349 = vmul.f32 %v295, 1.442695
  %v350 = vpow.pop %v349
  %v351 = vmul.f32 %v296, 1.442695
  %v352 = vpow.pop %v351
  %v353 = vmul.f32 %v297, 1.442695
  %v354 = vpow.pop %v353
  %v355 = vmul.f32 %v298, 1.442695
  %v356 = vpow.pop %v355
  %v357 = vmul.f32 %v299, 1.442695
  %v358 = vpow.pop %v357
  %v359 = vmul.f32 %v300, 1.442695
  %v360 = vpow.pop %v359
  %v361 = vmul.f32 %v301, 1.442695
  %v362 = vpow.pop %v361
  %v363 = vmul.f32 %v302, 1.442695
  %v364 = vpow.pop %v363
  %v365 = vmul.f32 %v303, 1.442695
  %v366 = vpow.pop %v365
  %v367 = vmul.f32 %v304, 1.442695
  %v368 = vpow.pop %v367
  %v369 = vadd.f32 %v306, %v308
  %v370 = vadd.f32 %v369, %v310
  %v371 = vadd.f32 %v370, %v312
  %v372 = vadd.f32 %v371, %v314
  %v373 = vadd.f32 %v372, %v316
  %v374 = vadd.f32 %v373, %v318
  %v375 = vadd.f32 %v374, %v320
  %v376 = vadd.f32 %v375, %v322
  %v377 = vadd.f32 %v376, %v324
  %v378 = vadd.f32 %v377, %v326
  %v379 = vadd.f32 %v378, %v328
  %v380 = vadd.f32 %v379, %v330
  %v381 = vadd.f32 %v380, %v332
  %v382 = vadd.f32 %v381, %v334
  %v383 = vadd.f32 %v382, %v336
  %v384 = vadd.f32 %v383, %v338
  %v385 = vadd.f32 %v384, %v340
  %v386 = vadd.f32 %v385, %v342
  %v387 = vadd.f32 %v386, %v344
  %v388 = vadd.f32 %v387, %v346
  %v389 = vadd.f32 %v388, %v348
  %v390 = vadd.f32 %v389, %v350
  %v391 = vadd.f32 %v390, %v352
  %v392 = vadd.f32 %v391, %v354
  %v393 = vadd.f32 %v392, %v356
  %v394 = vadd.f32 %v393, %v358
  %v395 = vadd.f32 %v394, %v360
  %v396 = vadd.f32 %v395, %v362
  %v397 = vadd.f32 %v396, %v364
  %v398 = vadd.f32 %v397, %v366
  %v399 = vadd.f32 %v398, %v368
  %v400 = vrot.slane %v399, 4
  %v401 = vadd.f32 %v399, %v400
  %v402 = vrot.slane %v401, 2
  %v403 = vadd.f32 %v401, %v402
  %v404 = vrot.slane %v403, 1
  %v405 = vadd.f32 %v403, %v404
  %v406 = vrcp.pop %v405
  %v407 = vmul.f32 %v306, %v406
  %v408 = vmul.f32 %v308, %v406
  %v409 = vmul.f32 %v310, %v406
  %v410 = vmul.f32 %v312, %v406
  %v411 = vmul.f32 %v314, %v406
  %v412 = vmul.f32 %v316, %v406
  %v413 = vmul.f32 %v318, %v406
  %v414 = vmul.f32 %v320, %v406
  %v415 = vmul.f32 %v322, %v406
  %v416 = vmul.f32 %v324, %v406
  %v417 = vmul.f32 %v326, %v406
  %v418 = vmul.f32 %v328, %v406
  %v419 = vmul.f32 %v330, %v406
  %v420 = vmul.f32 %v332, %v406
  %v421 = vmul.f32 %v334, %v406
  %v422 = vmul.f32 %v336, %v406
  %v423 = vmul.f32 %v338, %v406
  %v424 = vmul.f32 %v340, %v406
  %v425 = vmul.f32 %v342, %v406
  %v426 = vmul.f32 %v344, %v406
  %v427 = vmul.f32 %v346, %v406
  %v428 = vmul.f32 %v348, %v406
  %v429 = vmul.f32 %v350, %v406
  %v430 = vmul.f32 %v352, %v406
  %v431 = vmul.f32 %v354, %v406
  %v432 = vmul.f32 %v356, %v406
  %v433 = vmul.f32 %v358, %v406
  %v434 = vmul.f32 %v360, %v406
  %v435 = vmul.f32 %v362, %v406
  %v436 = vmul.f32 %v364, %v406
  %v437 = vmul.f32 %v366, %v406
  %v438 = vmul.f32 %v368, %v406
  %v439 = vmul.f32 %v407, %v107
  %v440 = vmul.f32 %v408, %v108
  %v441 = vmul.f32 %v409, %v109
  %v442 = vmul.f32 %v410, %v110
  %v443 = vmul.f32 %v411, %v111
  %v444 = vmul.f32 %v412, %v112
  %v445 = vmul.f32 %v413, %v113
  %v446 = vmul.f32 %v414, %v114
  %v447 = vmul.f32 %v415, %v115
  %v448 = vmul.f32 %v416, %v116
  %v449 = vmul.f32 %v417, %v117
  %v450 = vmul.f32 %v418, %v118
  %v451 = vmul.f32 %v419, %v119
  %v452 = vmul.f32 %v420, %v120
  %v453 = vmul.f32 %v421, %v121
  %v454 = vmul.f32 %v422, %v122
  %v455 = vmul.f32 %v423, %v123
  %v456 = vmul.f32 %v424, %v124
  %v457 = vmul.f32 %v425, %v125
  %v458 = vmul.f32 %v426, %v126
  %v459 = vmul.f32 %v427, %v127
  %v460 = vmul.f32 %v428, %v128
  %v461 = vmul.f32 %v429, %v129
  %v462 = vmul.f32 %v430, %v130
  %v463 = vmul.f32 %v431, %v131
  %v464 = vmul.f32 %v432, %v132
  %v465 = vmul.f32 %v433, %v133
  %v466 = vmul.f32 %v434, %v134
  %v467 = vmul.f32 %v435, %v135
  %v468 = vmul.f32 %v436, %v136
  %v469 = vmul.f32 %v437, %v137
  %v470 = vmul.f32 %v438, %v138
  %v471 = vmul.f32 %v439, %v439
  %v472 = vmul.f32 %v440, %v440
  %v473 = vmul.f32 %v441, %v441
  %v474 = vmul.f32 %v442, %v442
  %v475 = vmul.f32 %v443, %v443
  %v476 = vmul.f32 %v444, %v444
  %v477 = vmul.f32 %v445, %v445
  %v478 = vmul.f32 %v446, %v446
  %v479 = vmul.f32 %v447, %v447
  %v480 = vmul.f32 %v448, %v448
  %v481 = vmul.f32 %v449, %v449
  %v482 = vmul.f32 %v450, %v450
  %v483 = vmul.f32 %v451, %v451
  %v484 = vmul.f32 %v452, %v452
  %v485 = vmul.f32 %v453, %v453
  %v486 = vmul.f32 %v454, %v454
  %v487 = vmul.f32 %v455, %v455
  %v488 = vmul.f32 %v456, %v456
  %v489 = vmul.f32 %v457, %v457
  %v490 = vmul.f32 %v458, %v458
  %v491 = vmul.f32 %v459, %v459
  %v492 = vmul.f32 %v460, %v460
  %v493 = vmul.f32 %v461, %v461
  %v494 = vmul.f32 %v462, %v462
  %v495 = vmul.f32 %v463, %v463
  %v496 = vmul.f32 %v464, %v464
  %v497 = vmul.f32 %v465, %v465
  %v498 = vmul.f32 %v466, %v466
  %v499 = vmul.f32 %v467, %v467
  %v500 = vmul.f32 %v468, %v468
  %v501 = vmul.f32 %v469, %v469
  %v502 = vmul.f32 %v470, %v470
  %503 = vadd.xlane.f32.xlu0 %v471
  %v504 = vpop.xlane.xlu0 %503
  %505 = vadd.xlane.f32.xlu0 %v472
  %v506 = vpop.xlane.xlu0 %505
  %507 = vadd.xlane.f32.xlu0 %v473
  %v508 = vpop.xlane.xlu0 %507
  %509 = vadd.xlane.f32.xlu0 %v474
  %v510 = vpop.xlane.xlu0 %509
  %511 = vadd.xlane.f32.xlu0 %v475
  %v512 = vpop.xlane.xlu0 %511
  %513 = vadd.xlane.f32.xlu0 %v476
  %v514 = vpop.xlane.xlu0 %513
  %515 = vadd.xlane.f32.xlu0 %v477
  %v516 = vpop.xlane.xlu0 %515
  %517 = vadd.xlane.f32.xlu0 %v478
  %v518 = vpop.xlane.xlu0 %517
  %519 = vadd.xlane.f32.xlu0 %v479
  %v520 = vpop.xlane.xlu0 %519
  %521 = vadd.xlane.f32.xlu0 %v480
  %v522 = vpop.xlane.xlu0 %521
  %523 = vadd.xlane.f32.xlu0 %v481
  %v524 = vpop.xlane.xlu0 %523
  %525 = vadd.xlane.f32.xlu0 %v482
  %v526 = vpop.xlane.xlu0 %525
  %527 = vadd.xlane.f32.xlu0 %v483
  %v528 = vpop.xlane.xlu0 %527
  %529 = vadd.xlane.f32.xlu0 %v484
  %v530 = vpop.xlane.xlu0 %529
  %531 = vadd.xlane.f32.xlu0 %v485
  %v532 = vpop.xlane.xlu0 %531
  %533 = vadd.xlane.f32.xlu0 %v486
  %v534 = vpop.xlane.xlu0 %533
  %535 = vadd.xlane.f32.xlu0 %v487
  %v536 = vpop.xlane.xlu0 %535
  %537 = vadd.xlane.f32.xlu0 %v488
  %v538 = vpop.xlane.xlu0 %537
  %539 = vadd.xlane.f32.xlu0 %v489
  %v540 = vpop.xlane.xlu0 %539
  %541 = vadd.xlane.f32.xlu0 %v490
  %v542 = vpop.xlane.xlu0 %541
  %543 = vadd.xlane.f32.xlu0 %v491
  %v544 = vpop.xlane.xlu0 %543
  %545 = vadd.xlane.f32.xlu0 %v492
  %v546 = vpop.xlane.xlu0 %545
  %547 = vadd.xlane.f32.xlu0 %v493
  %v548 = vpop.xlane.xlu0 %547
  %549 = vadd.xlane.f32.xlu0 %v494
  %v550 = vpop.xlane.xlu0 %549
  %551 = vadd.xlane.f32.xlu0 %v495
  %v552 = vpop.xlane.xlu0 %551
  %553 = vadd.xlane.f32.xlu0 %v496
  %v554 = vpop.xlane.xlu0 %553
  %555 = vadd.xlane.f32.xlu0 %v497
  %v556 = vpop.xlane.xlu0 %555
  %557 = vadd.xlane.f32.xlu0 %v498
  %v558 = vpop.xlane.xlu0 %557
  %559 = vadd.xlane.f32.xlu0 %v499
  %v560 = vpop.xlane.xlu0 %559
  %561 = vadd.xlane.f32.xlu0 %v500
  %v562 = vpop.xlane.xlu0 %561
  %563 = vadd.xlane.f32.xlu0 %v501
  %v564 = vpop.xlane.xlu0 %563
  %565 = vadd.xlane.f32.xlu0 %v502
  %v566 = vpop.xlane.xlu0 %565
  %v567 = vmax.f32 %v504, 1e-24
  %v568 = vmax.f32 %v506, 1e-24
  %v569 = vmax.f32 %v508, 1e-24
  %v570 = vmax.f32 %v510, 1e-24
  %v571 = vmax.f32 %v512, 1e-24
  %v572 = vmax.f32 %v514, 1e-24
  %v573 = vmax.f32 %v516, 1e-24
  %v574 = vmax.f32 %v518, 1e-24
  %v575 = vmax.f32 %v520, 1e-24
  %v576 = vmax.f32 %v522, 1e-24
  %v577 = vmax.f32 %v524, 1e-24
  %v578 = vmax.f32 %v526, 1e-24
  %v579 = vmax.f32 %v528, 1e-24
  %v580 = vmax.f32 %v530, 1e-24
  %v581 = vmax.f32 %v532, 1e-24
  %v582 = vmax.f32 %v534, 1e-24
  %v583 = vmax.f32 %v536, 1e-24
  %v584 = vmax.f32 %v538, 1e-24
  %v585 = vmax.f32 %v540, 1e-24
  %v586 = vmax.f32 %v542, 1e-24
  %v587 = vmax.f32 %v544, 1e-24
  %v588 = vmax.f32 %v546, 1e-24
  %v589 = vmax.f32 %v548, 1e-24
  %v590 = vmax.f32 %v550, 1e-24
  %v591 = vmax.f32 %v552, 1e-24
  %v592 = vmax.f32 %v554, 1e-24
  %v593 = vmax.f32 %v556, 1e-24
  %v594 = vmax.f32 %v558, 1e-24
  %v595 = vmax.f32 %v560, 1e-24
  %v596 = vmax.f32 %v562, 1e-24
  %v597 = vmax.f32 %v564, 1e-24
  %v598 = vmax.f32 %v566, 1e-24
  %v599 = vrsqrt.pop %v567
  %v600 = vmul.f32 %v599, %v567
  %v601 = vmul.f32 %v600, %v599
  %v602 = vmul.f32 0.5, %v601
  %v603 = vsub.f32 1.5, %v602
  %v604 = vmul.f32 %v599, %v603
  %vm605 = vweird.f32 %v567
  %vm606 = vweird.f32 %v599
  %vm607 = vmor %vm605, %vm606
  %v608 = vsel %vm607, %v599, %v604
  %v609 = vrsqrt.pop %v568
  %v610 = vmul.f32 %v609, %v568
  %v611 = vmul.f32 %v610, %v609
  %v612 = vmul.f32 0.5, %v611
  %v613 = vsub.f32 1.5, %v612
  %v614 = vmul.f32 %v609, %v613
  %vm615 = vweird.f32 %v568
  %vm616 = vweird.f32 %v609
  %vm617 = vmor %vm615, %vm616
  %v618 = vsel %vm617, %v609, %v614
  %v619 = vrsqrt.pop %v569
  %v620 = vmul.f32 %v619, %v569
  %v621 = vmul.f32 %v620, %v619
  %v622 = vmul.f32 0.5, %v621
  %v623 = vsub.f32 1.5, %v622
  %v624 = vmul.f32 %v619, %v623
  %vm625 = vweird.f32 %v569
  %vm626 = vweird.f32 %v619
  %vm627 = vmor %vm625, %vm626
  %v628 = vsel %vm627, %v619, %v624
  %v629 = vrsqrt.pop %v570
  %v630 = vmul.f32 %v629, %v570
  %v631 = vmul.f32 %v630, %v629
  %v632 = vmul.f32 0.5, %v631
  %v633 = vsub.f32 1.5, %v632
  %v634 = vmul.f32 %v629, %v633
  %vm635 = vweird.f32 %v570
  %vm636 = vweird.f32 %v629
  %vm637 = vmor %vm635, %vm636
  %v638 = vsel %vm637, %v629, %v634
  %v639 = vrsqrt.pop %v571
  %v640 = vmul.f32 %v639, %v571
  %v641 = vmul.f32 %v640, %v639
  %v642 = vmul.f32 0.5, %v641
  %v643 = vsub.f32 1.5, %v642
  %v644 = vmul.f32 %v639, %v643
  %vm645 = vweird.f32 %v571
  %vm646 = vweird.f32 %v639
  %vm647 = vmor %vm645, %vm646
  %v648 = vsel %vm647, %v639, %v644
  %v649 = vrsqrt.pop %v572
  %v650 = vmul.f32 %v649, %v572
  %v651 = vmul.f32 %v650, %v649
  %v652 = vmul.f32 0.5, %v651
  %v653 = vsub.f32 1.5, %v652
  %v654 = vmul.f32 %v649, %v653
  %vm655 = vweird.f32 %v572
  %vm656 = vweird.f32 %v649
  %vm657 = vmor %vm655, %vm656
  %v658 = vsel %vm657, %v649, %v654
  %v659 = vrsqrt.pop %v573
  %v660 = vmul.f32 %v659, %v573
  %v661 = vmul.f32 %v660, %v659
  %v662 = vmul.f32 0.5, %v661
  %v663 = vsub.f32 1.5, %v662
  %v664 = vmul.f32 %v659, %v663
  %vm665 = vweird.f32 %v573
  %vm666 = vweird.f32 %v659
  %vm667 = vmor %vm665, %vm666
  %v668 = vsel %vm667, %v659, %v664
  %v669 = vrsqrt.pop %v574
  %v670 = vmul.f32 %v669, %v574
  %v671 = vmul.f32 %v670, %v669
  %v672 = vmul.f32 0.5, %v671
  %v673 = vsub.f32 1.5, %v672
  %v674 = vmul.f32 %v669, %v673
  %vm675 = vweird.f32 %v574
  %vm676 = vweird.f32 %v669
  %vm677 = vmor %vm675, %vm676
  %v678 = vsel %vm677, %v669, %v674
  %v679 = vrsqrt.pop %v575
  %v680 = vmul.f32 %v679, %v575
  %v681 = vmul.f32 %v680, %v679
  %v682 = vmul.f32 0.5, %v681
  %v683 = vsub.f32 1.5, %v682
  %v684 = vmul.f32 %v679, %v683
  %vm685 = vweird.f32 %v575
  %vm686 = vweird.f32 %v679
  %vm687 = vmor %vm685, %vm686
  %v688 = vsel %vm687, %v679, %v684
  %v689 = vrsqrt.pop %v576
  %v690 = vmul.f32 %v689, %v576
  %v691 = vmul.f32 %v690, %v689
  %v692 = vmul.f32 0.5, %v691
  %v693 = vsub.f32 1.5, %v692
  %v694 = vmul.f32 %v689, %v693
  %vm695 = vweird.f32 %v576
  %vm696 = vweird.f32 %v689
  %vm697 = vmor %vm695, %vm696
  %v698 = vsel %vm697, %v689, %v694
  %v699 = vrsqrt.pop %v577
  %v700 = vmul.f32 %v699, %v577
  %v701 = vmul.f32 %v700, %v699
  %v702 = vmul.f32 0.5, %v701
  %v703 = vsub.f32 1.5, %v702
  %v704 = vmul.f32 %v699, %v703
  %vm705 = vweird.f32 %v577
  %vm706 = vweird.f32 %v699
  %vm707 = vmor %vm705, %vm706
  %v708 = vsel %vm707, %v699, %v704
  %v709 = vrsqrt.pop %v578
  %v710 = vmul.f32 %v709, %v578
  %v711 = vmul.f32 %v710, %v709
  %v712 = vmul.f32 0.5, %v711
  %v713 = vsub.f32 1.5, %v712
  %v714 = vmul.f32 %v709, %v713
  %vm715 = vweird.f32 %v578
  %vm716 = vweird.f32 %v709
  %vm717 = vmor %vm715, %vm716
  %v718 = vsel %vm717, %v709, %v714
  %v719 = vrsqrt.pop %v579
  %v720 = vmul.f32 %v719, %v579
  %v721 = vmul.f32 %v720, %v719
  %v722 = vmul.f32 0.5, %v721
  %v723 = vsub.f32 1.5, %v722
  %v724 = vmul.f32 %v719, %v723
  %vm725 = vweird.f32 %v579
  %vm726 = vweird.f32 %v719
  %vm727 = vmor %vm725, %vm726
  %v728 = vsel %vm727, %v719, %v724
  %v729 = vrsqrt.pop %v580
  %v730 = vmul.f32 %v729, %v580
  %v731 = vmul.f32 %v730, %v729
  %v732 = vmul.f32 0.5, %v731
  %v733 = vsub.f32 1.5, %v732
  %v734 = vmul.f32 %v729, %v733
  %vm735 = vweird.f32 %v580
  %vm736 = vweird.f32 %v729
  %vm737 = vmor %vm735, %vm736
  %v738 = vsel %vm737, %v729, %v734
  %v739 = vrsqrt.pop %v581
  %v740 = vmul.f32 %v739, %v581
  %v741 = vmul.f32 %v740, %v739
  %v742 = vmul.f32 0.5, %v741
  %v743 = vsub.f32 1.5, %v742
  %v744 = vmul.f32 %v739, %v743
  %vm745 = vweird.f32 %v581
  %vm746 = vweird.f32 %v739
  %vm747 = vmor %vm745, %vm746
  %v748 = vsel %vm747, %v739, %v744
  %v749 = vrsqrt.pop %v582
  %v750 = vmul.f32 %v749, %v582
  %v751 = vmul.f32 %v750, %v749
  %v752 = vmul.f32 0.5, %v751
  %v753 = vsub.f32 1.5, %v752
  %v754 = vmul.f32 %v749, %v753
  %vm755 = vweird.f32 %v582
  %vm756 = vweird.f32 %v749
  %vm757 = vmor %vm755, %vm756
  %v758 = vsel %vm757, %v749, %v754
  %v759 = vrsqrt.pop %v583
  %v760 = vmul.f32 %v759, %v583
  %v761 = vmul.f32 %v760, %v759
  %v762 = vmul.f32 0.5, %v761
  %v763 = vsub.f32 1.5, %v762
  %v764 = vmul.f32 %v759, %v763
  %vm765 = vweird.f32 %v583
  %vm766 = vweird.f32 %v759
  %vm767 = vmor %vm765, %vm766
  %v768 = vsel %vm767, %v759, %v764
  %v769 = vrsqrt.pop %v584
  %v770 = vmul.f32 %v769, %v584
  %v771 = vmul.f32 %v770, %v769
  %v772 = vmul.f32 0.5, %v771
  %v773 = vsub.f32 1.5, %v772
  %v774 = vmul.f32 %v769, %v773
  %vm775 = vweird.f32 %v584
  %vm776 = vweird.f32 %v769
  %vm777 = vmor %vm775, %vm776
  %v778 = vsel %vm777, %v769, %v774
  %v779 = vrsqrt.pop %v585
  %v780 = vmul.f32 %v779, %v585
  %v781 = vmul.f32 %v780, %v779
  %v782 = vmul.f32 0.5, %v781
  %v783 = vsub.f32 1.5, %v782
  %v784 = vmul.f32 %v779, %v783
  %vm785 = vweird.f32 %v585
  %vm786 = vweird.f32 %v779
  %vm787 = vmor %vm785, %vm786
  %v788 = vsel %vm787, %v779, %v784
  %v789 = vrsqrt.pop %v586
  %v790 = vmul.f32 %v789, %v586
  %v791 = vmul.f32 %v790, %v789
  %v792 = vmul.f32 0.5, %v791
  %v793 = vsub.f32 1.5, %v792
  %v794 = vmul.f32 %v789, %v793
  %vm795 = vweird.f32 %v586
  %vm796 = vweird.f32 %v789
  %vm797 = vmor %vm795, %vm796
  %v798 = vsel %vm797, %v789, %v794
  %v799 = vrsqrt.pop %v587
  %v800 = vmul.f32 %v799, %v587
  %v801 = vmul.f32 %v800, %v799
  %v802 = vmul.f32 0.5, %v801
  %v803 = vsub.f32 1.5, %v802
  %v804 = vmul.f32 %v799, %v803
  %vm805 = vweird.f32 %v587
  %vm806 = vweird.f32 %v799
  %vm807 = vmor %vm805, %vm806
  %v808 = vsel %vm807, %v799, %v804
  %v809 = vrsqrt.pop %v588
  %v810 = vmul.f32 %v809, %v588
  %v811 = vmul.f32 %v810, %v809
  %v812 = vmul.f32 0.5, %v811
  %v813 = vsub.f32 1.5, %v812
  %v814 = vmul.f32 %v809, %v813
  %vm815 = vweird.f32 %v588
  %vm816 = vweird.f32 %v809
  %vm817 = vmor %vm815, %vm816
  %v818 = vsel %vm817, %v809, %v814
  %v819 = vrsqrt.pop %v589
  %v820 = vmul.f32 %v819, %v589
  %v821 = vmul.f32 %v820, %v819
  %v822 = vmul.f32 0.5, %v821
  %v823 = vsub.f32 1.5, %v822
  %v824 = vmul.f32 %v819, %v823
  %vm825 = vweird.f32 %v589
  %vm826 = vweird.f32 %v819
  %vm827 = vmor %vm825, %vm826
  %v828 = vsel %vm827, %v819, %v824
  %v829 = vrsqrt.pop %v590
  %v830 = vmul.f32 %v829, %v590
  %v831 = vmul.f32 %v830, %v829
  %v832 = vmul.f32 0.5, %v831
  %v833 = vsub.f32 1.5, %v832
  %v834 = vmul.f32 %v829, %v833
  %vm835 = vweird.f32 %v590
  %vm836 = vweird.f32 %v829
  %vm837 = vmor %vm835, %vm836
  %v838 = vsel %vm837, %v829, %v834
  %v839 = vrsqrt.pop %v591
  %v840 = vmul.f32 %v839, %v591
  %v841 = vmul.f32 %v840, %v839
  %v842 = vmul.f32 0.5, %v841
  %v843 = vsub.f32 1.5, %v842
  %v844 = vmul.f32 %v839, %v843
  %vm845 = vweird.f32 %v591
  %vm846 = vweird.f32 %v839
  %vm847 = vmor %vm845, %vm846
  %v848 = vsel %vm847, %v839, %v844
  %v849 = vrsqrt.pop %v592
  %v850 = vmul.f32 %v849, %v592
  %v851 = vmul.f32 %v850, %v849
  %v852 = vmul.f32 0.5, %v851
  %v853 = vsub.f32 1.5, %v852
  %v854 = vmul.f32 %v849, %v853
  %vm855 = vweird.f32 %v592
  %vm856 = vweird.f32 %v849
  %vm857 = vmor %vm855, %vm856
  %v858 = vsel %vm857, %v849, %v854
  %v859 = vrsqrt.pop %v593
  %v860 = vmul.f32 %v859, %v593
  %v861 = vmul.f32 %v860, %v859
  %v862 = vmul.f32 0.5, %v861
  %v863 = vsub.f32 1.5, %v862
  %v864 = vmul.f32 %v859, %v863
  %vm865 = vweird.f32 %v593
  %vm866 = vweird.f32 %v859
  %vm867 = vmor %vm865, %vm866
  %v868 = vsel %vm867, %v859, %v864
  %v869 = vrsqrt.pop %v594
  %v870 = vmul.f32 %v869, %v594
  %v871 = vmul.f32 %v870, %v869
  %v872 = vmul.f32 0.5, %v871
  %v873 = vsub.f32 1.5, %v872
  %v874 = vmul.f32 %v869, %v873
  %vm875 = vweird.f32 %v594
  %vm876 = vweird.f32 %v869
  %vm877 = vmor %vm875, %vm876
  %v878 = vsel %vm877, %v869, %v874
  %v879 = vrsqrt.pop %v595
  %v880 = vmul.f32 %v879, %v595
  %v881 = vmul.f32 %v880, %v879
  %v882 = vmul.f32 0.5, %v881
  %v883 = vsub.f32 1.5, %v882
  %v884 = vmul.f32 %v879, %v883
  %vm885 = vweird.f32 %v595
  %vm886 = vweird.f32 %v879
  %vm887 = vmor %vm885, %vm886
  %v888 = vsel %vm887, %v879, %v884
  %v889 = vrsqrt.pop %v596
  %v890 = vmul.f32 %v889, %v596
  %v891 = vmul.f32 %v890, %v889
  %v892 = vmul.f32 0.5, %v891
  %v893 = vsub.f32 1.5, %v892
  %v894 = vmul.f32 %v889, %v893
  %vm895 = vweird.f32 %v596
  %vm896 = vweird.f32 %v889
  %vm897 = vmor %vm895, %vm896
  %v898 = vsel %vm897, %v889, %v894
  %v899 = vrsqrt.pop %v597
  %v900 = vmul.f32 %v899, %v597
  %v901 = vmul.f32 %v900, %v899
  %v902 = vmul.f32 0.5, %v901
  %v903 = vsub.f32 1.5, %v902
  %v904 = vmul.f32 %v899, %v903
  %vm905 = vweird.f32 %v597
  %vm906 = vweird.f32 %v899
  %vm907 = vmor %vm905, %vm906
  %v908 = vsel %vm907, %v899, %v904
  %v909 = vrsqrt.pop %v598
  %v910 = vmul.f32 %v909, %v598
  %v911 = vmul.f32 %v910, %v909
  %v912 = vmul.f32 0.5, %v911
  %v913 = vsub.f32 1.5, %v912
  %v914 = vmul.f32 %v909, %v913
  %vm915 = vweird.f32 %v598
  %vm916 = vweird.f32 %v909
  %vm917 = vmor %vm915, %vm916
  %v918 = vsel %vm917, %v909, %v914
  %v919 = vmul.f32 %v439, %v608
  %v920 = vmul.f32 %v440, %v618
  %v921 = vmul.f32 %v441, %v628
  %v922 = vmul.f32 %v442, %v638
  %v923 = vmul.f32 %v443, %v648
  %v924 = vmul.f32 %v444, %v658
  %v925 = vmul.f32 %v445, %v668
  %v926 = vmul.f32 %v446, %v678
  %v927 = vmul.f32 %v447, %v688
  %v928 = vmul.f32 %v448, %v698
  %v929 = vmul.f32 %v449, %v708
  %v930 = vmul.f32 %v450, %v718
  %v931 = vmul.f32 %v451, %v728
  %v932 = vmul.f32 %v452, %v738
  %v933 = vmul.f32 %v453, %v748
  %v934 = vmul.f32 %v454, %v758
  %v935 = vmul.f32 %v455, %v768
  %v936 = vmul.f32 %v456, %v778
  %v937 = vmul.f32 %v457, %v788
  %v938 = vmul.f32 %v458, %v798
  %v939 = vmul.f32 %v459, %v808
  %v940 = vmul.f32 %v460, %v818
  %v941 = vmul.f32 %v461, %v828
  %v942 = vmul.f32 %v462, %v838
  %v943 = vmul.f32 %v463, %v848
  %v944 = vmul.f32 %v464, %v858
  %v945 = vmul.f32 %v465, %v868
  %v946 = vmul.f32 %v466, %v878
  %v947 = vmul.f32 %v467, %v888
  %v948 = vmul.f32 %v468, %v898
  %v949 = vmul.f32 %v469, %v908
  %v950 = vmul.f32 %v470, %v918
  %951 = vst [vmem:[%s2] sm:$0xff] %v919
  %952 = vst [vmem:[%s2 + $0x8] sm:$0xff] %v920
  %953 = vst [vmem:[%s2 + $0x10] sm:$0xff] %v921
  %954 = vst [vmem:[%s2 + $0x18] sm:$0xff] %v922
  %955 = vst [vmem:[%s2 + $0x20] sm:$0xff] %v923
  %956 = vst [vmem:[%s2 + $0x28] sm:$0xff] %v924
  %957 = vst [vmem:[%s2 + $0x30] sm:$0xff] %v925
  %958 = vst [vmem:[%s2 + $0x38] sm:$0xff] %v926
  %959 = vst [vmem:[%s2 + $0x40] sm:$0xff] %v927
  %960 = vst [vmem:[%s2 + $0x48] sm:$0xff] %v928
  %961 = vst [vmem:[%s2 + $0x50] sm:$0xff] %v929
  %962 = vst [vmem:[%s2 + $0x58] sm:$0xff] %v930
  %963 = vst [vmem:[%s2 + $0x60] sm:$0xff] %v931
  %964 = vst [vmem:[%s2 + $0x68] sm:$0xff] %v932
  %965 = vst [vmem:[%s2 + $0x70] sm:$0xff] %v933
  %966 = vst [vmem:[%s2 + $0x78] sm:$0xff] %v934
  %967 = vst [vmem:[%s2 + $0x80] sm:$0xff] %v935
  %968 = vst [vmem:[%s2 + $0x88] sm:$0xff] %v936
  %969 = vst [vmem:[%s2 + $0x90] sm:$0xff] %v937
  %970 = vst [vmem:[%s2 + $0x98] sm:$0xff] %v938
  %971 = vst [vmem:[%s2 + $0xa0] sm:$0xff] %v939
  %972 = vst [vmem:[%s2 + $0xa8] sm:$0xff] %v940
  %973 = vst [vmem:[%s2 + $0xb0] sm:$0xff] %v941
  %974 = vst [vmem:[%s2 + $0xb8] sm:$0xff] %v942
  %975 = vst [vmem:[%s2 + $0xc0] sm:$0xff] %v943
  %976 = vst [vmem:[%s2 + $0xc8] sm:$0xff] %v944
  %977 = vst [vmem:[%s2 + $0xd0] sm:$0xff] %v945
  %978 = vst [vmem:[%s2 + $0xd8] sm:$0xff] %v946
  %979 = vst [vmem:[%s2 + $0xe0] sm:$0xff] %v947
  %980 = vst [vmem:[%s2 + $0xe8] sm:$0xff] %v948
  %981 = vst [vmem:[%s2 + $0xf0] sm:$0xff] %v949
  %982 = vst [vmem:[%s2 + $0xf8] sm:$0xff] %v950
  // Predicated region
  $region10: #{dbgcn_forward.3} parent=0 // pred_check
    _
  $region11: #{dbgcn_forward.3} parent=0 // pred_check_branch
    %984 = sbr.rel (0) target = $region13
  $region12: #{dbgcn_forward.3} parent=0 // pred_region
    _
  $region13: #{dbgcn_forward.3} parent=0 // pred_fallthru
    _
  // Predicated region
  $region14: #{dbgcn_forward.3} parent=0 // pred_check
    _
  $region15: #{dbgcn_forward.3} parent=0 // pred_check_branch
    %986 = sbr.rel (0) target = $region17
  $region16: #{dbgcn_forward.3} parent=0 // pred_region
    _
  $region17: #{dbgcn_forward.3} parent=0 // pred_fallthru
    _

// kernel: dbgcn_forward.2
$region0: #{dbgcn_forward.2}
  #allocation0 [shape = 'u32[]', space=smem, size = 0x4, offset = 0x4, fixed_abs, tag = 'smem constant byte address 0x4 - core index']
  #allocation1 [shape = 'u32[72,128]{1,0:T(1,128)}', space=vmem, size = 0x9000, scoped, tag = 'internal scratch']
  #allocation2 [shape = 'f32[128,128]{1,0:T(8,128)}', space=vmem, size = 0x10000, scoped, tag = 'scratch operand']
  %s0 = inlined_call_operand.vmem [shape: bf16[256,256], index: 0, kind: input, shape index: {}]
  %s1 = inlined_call_operand.vmem [shape: bf16[256,128], index: 1, kind: input, shape index: {}]
  %s2 = inlined_call_operand.vmem [shape: f32[256,1], index: 2, kind: input, shape index: {}]
  %s3 = inlined_call_operand.vmem [shape: f32[128,128], index: 3, kind: input, shape index: {}]
  %s4 = inlined_call_operand.vmem [shape: f32[128,128], index: 4, kind: input, shape index: {}]
  %s5 = inlined_call_operand.vmem [shape: f32[128,128], index: 5, kind: input, shape index: {}]
  %s6 = inlined_call_operand.vmem [shape: f32[128,128], index: 6, kind: input, shape index: {}]
  %s7 = inlined_call_operand.vmem [shape: f32[128,128], index: 7, kind: input, shape index: {}]
  %s8 = inlined_call_operand.vmem [shape: f32[8,128], index: 8, kind: input, shape index: {}]
  %s9 = inlined_call_operand.vmem [shape: bf16[256,128], index: 9, kind: output, shape index: {0}]
  %s10 = inlined_call_operand.vmem [shape: bf16[256,128], index: 10, kind: output, shape index: {1}]
  %11 = xla_tuple %s9, %s10
  %s12 = sld [smem:[#allocation0]]
  $region85: #{dbgcn_forward.2} parent=0
    _
  %s14 = ssub.s32 1, %s12
  %s15 = scalar_select 0, %s14, %s12
  loop: start=0, step=1, limit=4
  $region2: #{dbgcn_forward.2} parent=0 // loop_pre_header
    _
  $region3: #{dbgcn_forward.2} parent=0 // loop_header
    %s17 = sphi 0, %s21
    %p18 = scmp.ge.s32.totalorder %s17, 4
    %s24 = sphi 0, %s36
    %s25 = sphi 0, %s32
    %s26 = sphi 0, %s24
    %s27 = sphi 0, %s25
    %s28 = sphi 0, %s26
    %s29 = sphi 0, %s27
    %s41 = sphi 0, %s43
    %s44 = sphi 0, %s41
    %s45 = sphi 0, %s44
    %s61 = sphi 0, %s45
    %s65 = sphi 0, %s65
    %s67 = sphi 0, %s65
    %s68 = sphi 0, %s67
    %s82 = sphi 0, %s68
    %s88 = sphi 0, %s90
    %s91 = sphi 0, %s88
    %s92 = sphi 0, %s91
    %s108 = sphi 0, %s92
    %s112 = sphi 0, %s112
    %s114 = sphi 0, %s112
    %s115 = sphi 0, %s114
    %s129 = sphi 0, %s115
    %s133 = sphi 0, %s133
    %s135 = sphi 0, %s133
    %s136 = sphi 0, %s135
    %s150 = sphi 0, %s136
    %s154 = sphi 0, %s154
    %s156 = sphi 0, %s154
    %s157 = sphi 0, %s156
    %s171 = sphi 0, %s157
    %s175 = sphi 0, %s175
    %s177 = sphi 0, %s175
    %s178 = sphi 0, %s177
    %s192 = sphi 0, %s178
    %s196 = sphi 0, %s196
    %s198 = sphi 0, %s196
    %s199 = sphi 0, %s198
    %s213 = sphi 0, %s199
    %s217 = sphi 0, %s217
    %s219 = sphi 0, %s217
    %s220 = sphi 0, %s219
    %s234 = sphi 0, %s220
    %s240 = sphi 0, %s242
    %s243 = sphi 0, %s240
    %s244 = sphi 0, %s243
    %s260 = sphi 0, %s244
    %s266 = sphi 0, %s268
    %s269 = sphi 0, %s266
    %s270 = sphi 0, %s269
    %s286 = sphi 0, %s270
  $region4: #{dbgcn_forward.2} parent=0 // loop_header_branch
    %20 = sbr.rel (%p18) target = $region8
  $region5: #{dbgcn_forward.2} parent=0 // loop_body
    %s22 = ssub.s32 %s17, 1
    %s23 = ssub.s32 %s17, 2
    %s30 = sadd.s32 1, %s25
    %p31 = scmp.ge.s32.totalorder %s30, 1
    %s32 = scalar_select %p31, 0, %s30
    %s33 = sadd.s32 1, %s24
    %s34 = scalar_select %p31, %s33, %s24
    %p35 = scmp.ge.s32.totalorder %s34, 2
    %s36 = scalar_select %p35, 0, %s34
    %s37 = ssub.s32 %s24, %s36
    %s38 = ssub.s32 %s25, %s32
    %s39 = sor.u32 %s37, %s38
    %p40 = scmp.eq.s32.totalorder %s39, 0
    %s42 = sadd.s32 %s41, 1
    %s43 = scalar_select %p40, %s41, %s42
    %p46 = pneg %p40
    %p47 = scmp.eq.s32.totalorder %s17, 1
    %p48 = por %p46, %p47
    %p49 = scmp.ne.s32.totalorder %s41, %s44
    %p50 = scmp.eq.s32.totalorder %s17, 0
    %p51 = por %p49, %p50
    %p52 = scmp.ne.s32.totalorder %s41, %s44
    %p53 = scmp.eq.s32.totalorder %s22, 1
    %p54 = por %p52, %p53
    %p55 = scmp.ne.s32.totalorder %s44, %s45
    %p56 = scmp.eq.s32.totalorder %s22, 0
    %p57 = por %p55, %p56
    %p58 = scmp.ne.s32.totalorder %s44, %s45
    %p59 = scmp.eq.s32.totalorder %s23, 1
    %p60 = por %p58, %p59
    %p62 = scmp.ne.s32.totalorder %s45, %s61
    %p63 = scmp.eq.s32.totalorder %s23, 0
    %p64 = por %p62, %p63
    %s66 = sadd.s32 %s65, 1
    %p69 = scmp.eq.s32.totalorder %s17, 1
    %p70 = scmp.ne.s32.totalorder %s65, %s67
    %p71 = scmp.eq.s32.totalorder %s17, 0
    %p72 = por %p70, %p71
    %p73 = scmp.ne.s32.totalorder %s65, %s67
    %p74 = scmp.eq.s32.totalorder %s22, 1
    %p75 = por %p73, %p74
    %p76 = scmp.ne.s32.totalorder %s67, %s68
    %p77 = scmp.eq.s32.totalorder %s22, 0
    %p78 = por %p76, %p77
    %p79 = scmp.ne.s32.totalorder %s67, %s68
    %p80 = scmp.eq.s32.totalorder %s23, 1
    %p81 = por %p79, %p80
    %p83 = scmp.ne.s32.totalorder %s68, %s82
    %p84 = scmp.eq.s32.totalorder %s23, 0
    %p85 = por %p83, %p84
    %s86 = ssub.s32 %s24, %s36
    %p87 = scmp.eq.s32.totalorder %s86, 0
    %s89 = sadd.s32 %s88, 1
    %s90 = scalar_select %p87, %s88, %s89
    %p93 = pneg %p87
    %p94 = scmp.eq.s32.totalorder %s17, 1
    %p95 = por %p93, %p94
    %p96 = scmp.ne.s32.totalorder %s88, %s91
    %p97 = scmp.eq.s32.totalorder %s17, 0
    %p98 = por %p96, %p97
    %p99 = scmp.ne.s32.totalorder %s88, %s91
    %p100 = scmp.eq.s32.totalorder %s22, 1
    %p101 = por %p99, %p100
    %p102 = scmp.ne.s32.totalorder %s91, %s92
    %p103 = scmp.eq.s32.totalorder %s22, 0
    %p104 = por %p102, %p103
    %p105 = scmp.ne.s32.totalorder %s91, %s92
    %p106 = scmp.eq.s32.totalorder %s23, 1
    %p107 = por %p105, %p106
    %p109 = scmp.ne.s32.totalorder %s92, %s108
    %p110 = scmp.eq.s32.totalorder %s23, 0
    %p111 = por %p109, %p110
    %s113 = sadd.s32 %s112, 1
    %p116 = scmp.eq.s32.totalorder %s17, 1
    %p117 = scmp.ne.s32.totalorder %s112, %s114
    %p118 = scmp.eq.s32.totalorder %s17, 0
    %p119 = por %p117, %p118
    %p120 = scmp.ne.s32.totalorder %s112, %s114
    %p121 = scmp.eq.s32.totalorder %s22, 1
    %p122 = por %p120, %p121
    %p123 = scmp.ne.s32.totalorder %s114, %s115
    %p124 = scmp.eq.s32.totalorder %s22, 0
    %p125 = por %p123, %p124
    %p126 = scmp.ne.s32.totalorder %s114, %s115
    %p127 = scmp.eq.s32.totalorder %s23, 1
    %p128 = por %p126, %p127
    %p130 = scmp.ne.s32.totalorder %s115, %s129
    %p131 = scmp.eq.s32.totalorder %s23, 0
    %p132 = por %p130, %p131
    %s134 = sadd.s32 %s133, 1
    %p137 = scmp.eq.s32.totalorder %s17, 1
    %p138 = scmp.ne.s32.totalorder %s133, %s135
    %p139 = scmp.eq.s32.totalorder %s17, 0
    %p140 = por %p138, %p139
    %p141 = scmp.ne.s32.totalorder %s133, %s135
    %p142 = scmp.eq.s32.totalorder %s22, 1
    %p143 = por %p141, %p142
    %p144 = scmp.ne.s32.totalorder %s135, %s136
    %p145 = scmp.eq.s32.totalorder %s22, 0
    %p146 = por %p144, %p145
    %p147 = scmp.ne.s32.totalorder %s135, %s136
    %p148 = scmp.eq.s32.totalorder %s23, 1
    %p149 = por %p147, %p148
    %p151 = scmp.ne.s32.totalorder %s136, %s150
    %p152 = scmp.eq.s32.totalorder %s23, 0
    %p153 = por %p151, %p152
    %s155 = sadd.s32 %s154, 1
    %p158 = scmp.eq.s32.totalorder %s17, 1
    %p159 = scmp.ne.s32.totalorder %s154, %s156
    %p160 = scmp.eq.s32.totalorder %s17, 0
    %p161 = por %p159, %p160
    %p162 = scmp.ne.s32.totalorder %s154, %s156
    %p163 = scmp.eq.s32.totalorder %s22, 1
    %p164 = por %p162, %p163
    %p165 = scmp.ne.s32.totalorder %s156, %s157
    %p166 = scmp.eq.s32.totalorder %s22, 0
    %p167 = por %p165, %p166
    %p168 = scmp.ne.s32.totalorder %s156, %s157
    %p169 = scmp.eq.s32.totalorder %s23, 1
    %p170 = por %p168, %p169
    %p172 = scmp.ne.s32.totalorder %s157, %s171
    %p173 = scmp.eq.s32.totalorder %s23, 0
    %p174 = por %p172, %p173
    %s176 = sadd.s32 %s175, 1
    %p179 = scmp.eq.s32.totalorder %s17, 1
    %p180 = scmp.ne.s32.totalorder %s175, %s177
    %p181 = scmp.eq.s32.totalorder %s17, 0
    %p182 = por %p180, %p181
    %p183 = scmp.ne.s32.totalorder %s175, %s177
    %p184 = scmp.eq.s32.totalorder %s22, 1
    %p185 = por %p183, %p184
    %p186 = scmp.ne.s32.totalorder %s177, %s178
    %p187 = scmp.eq.s32.totalorder %s22, 0
    %p188 = por %p186, %p187
    %p189 = scmp.ne.s32.totalorder %s177, %s178
    %p190 = scmp.eq.s32.totalorder %s23, 1
    %p191 = por %p189, %p190
    %p193 = scmp.ne.s32.totalorder %s178, %s192
    %p194 = scmp.eq.s32.totalorder %s23, 0
    %p195 = por %p193, %p194
    %s197 = sadd.s32 %s196, 1
    %p200 = scmp.eq.s32.totalorder %s17, 1
    %p201 = scmp.ne.s32.totalorder %s196, %s198
    %p202 = scmp.eq.s32.totalorder %s17, 0
    %p203 = por %p201, %p202
    %p204 = scmp.ne.s32.totalorder %s196, %s198
    %p205 = scmp.eq.s32.totalorder %s22, 1
    %p206 = por %p204, %p205
    %p207 = scmp.ne.s32.totalorder %s198, %s199
    %p208 = scmp.eq.s32.totalorder %s22, 0
    %p209 = por %p207, %p208
    %p210 = scmp.ne.s32.totalorder %s198, %s199
    %p211 = scmp.eq.s32.totalorder %s23, 1
    %p212 = por %p210, %p211
    %p214 = scmp.ne.s32.totalorder %s199, %s213
    %p215 = scmp.eq.s32.totalorder %s23, 0
    %p216 = por %p214, %p215
    %s218 = sadd.s32 %s217, 1
    %p221 = scmp.eq.s32.totalorder %s17, 1
    %p222 = scmp.ne.s32.totalorder %s217, %s219
    %p223 = scmp.eq.s32.totalorder %s17, 0
    %p224 = por %p222, %p223
    %p225 = scmp.ne.s32.totalorder %s217, %s219
    %p226 = scmp.eq.s32.totalorder %s22, 1
    %p227 = por %p225, %p226
    %p228 = scmp.ne.s32.totalorder %s219, %s220
    %p229 = scmp.eq.s32.totalorder %s22, 0
    %p230 = por %p228, %p229
    %p231 = scmp.ne.s32.totalorder %s219, %s220
    %p232 = scmp.eq.s32.totalorder %s23, 1
    %p233 = por %p231, %p232
    %p235 = scmp.ne.s32.totalorder %s220, %s234
    %p236 = scmp.eq.s32.totalorder %s23, 0
    %p237 = por %p235, %p236
    %s238 = ssub.s32 %s24, %s36
    %p239 = scmp.eq.s32.totalorder %s238, 0
    %s241 = sadd.s32 %s240, 1
    %s242 = scalar_select %p239, %s240, %s241
    %p245 = pneg %p239
    %p246 = scmp.eq.s32.totalorder %s17, 1
    %p247 = por %p245, %p246
    %p248 = scmp.ne.s32.totalorder %s240, %s243
    %p249 = scmp.eq.s32.totalorder %s17, 0
    %p250 = por %p248, %p249
    %p251 = scmp.ne.s32.totalorder %s240, %s243
    %p252 = scmp.eq.s32.totalorder %s22, 1
    %p253 = por %p251, %p252
    %p254 = scmp.ne.s32.totalorder %s243, %s244
    %p255 = scmp.eq.s32.totalorder %s22, 0
    %p256 = por %p254, %p255
    %p257 = scmp.ne.s32.totalorder %s243, %s244
    %p258 = scmp.eq.s32.totalorder %s23, 1
    %p259 = por %p257, %p258
    %p261 = scmp.ne.s32.totalorder %s244, %s260
    %p262 = scmp.eq.s32.totalorder %s23, 0
    %p263 = por %p261, %p262
    %s264 = ssub.s32 %s24, %s36
    %p265 = scmp.eq.s32.totalorder %s264, 0
    %s267 = sadd.s32 %s266, 1
    %s268 = scalar_select %p265, %s266, %s267
    %p271 = pneg %p265
    %p272 = scmp.eq.s32.totalorder %s17, 1
    %p273 = por %p271, %p272
    %p274 = scmp.ne.s32.totalorder %s266, %s269
    %p275 = scmp.eq.s32.totalorder %s17, 0
    %p276 = por %p274, %p275
    %p277 = scmp.ne.s32.totalorder %s266, %s269
    %p278 = scmp.eq.s32.totalorder %s22, 1
    %p279 = por %p277, %p278
    %p280 = scmp.ne.s32.totalorder %s269, %s270
    %p281 = scmp.eq.s32.totalorder %s22, 0
    %p282 = por %p280, %p281
    %p283 = scmp.ne.s32.totalorder %s269, %s270
    %p284 = scmp.eq.s32.totalorder %s23, 1
    %p285 = por %p283, %p284
    %p287 = scmp.ne.s32.totalorder %s270, %s286
    %p288 = scmp.eq.s32.totalorder %s23, 0
    %p289 = por %p287, %p288
    %p290 = scmp.le.s32.totalorder 1, %s17
    %p291 = scmp.lt.s32.totalorder %s17, 3
    %p292 = pnand %p290, %p291
    %p293 = pneg %p292
    // Predicated region
    $region9: #{dbgcn_forward.2} parent=5 // pred_check
      _
    $region10: #{dbgcn_forward.2} parent=5 // pred_check_branch
      %295 = sbr.rel (%p292) target = $region12
    $region11: #{dbgcn_forward.2} parent=5 // pred_region
      %s296 = ssub.s32 %s17, 1
      // Predicated region
      $region13: #{dbgcn_forward.2} parent=11 // pred_check
        %p297 = pneg %p78
      $region14: #{dbgcn_forward.2} parent=11 // pred_check_branch
        %299 = sbr.rel (%p297) target = $region16
      $region15: #{dbgcn_forward.2} parent=11 // pred_region
        _
      $region16: #{dbgcn_forward.2} parent=11 // pred_fallthru
        _
      // Predicated region
      $region17: #{dbgcn_forward.2} parent=11 // pred_check
        %p300 = pneg %p125
      $region18: #{dbgcn_forward.2} parent=11 // pred_check_branch
        %302 = sbr.rel (%p300) target = $region20
      $region19: #{dbgcn_forward.2} parent=11 // pred_region
        _
      $region20: #{dbgcn_forward.2} parent=11 // pred_fallthru
        _
      // Predicated region
      $region21: #{dbgcn_forward.2} parent=11 // pred_check
        %p303 = pneg %p146
      $region22: #{dbgcn_forward.2} parent=11 // pred_check_branch
        %305 = sbr.rel (%p303) target = $region24
      $region23: #{dbgcn_forward.2} parent=11 // pred_region
        _
      $region24: #{dbgcn_forward.2} parent=11 // pred_fallthru
        _
      // Predicated region
      $region25: #{dbgcn_forward.2} parent=11 // pred_check
        %p306 = pneg %p167
      $region26: #{dbgcn_forward.2} parent=11 // pred_check_branch
        %308 = sbr.rel (%p306) target = $region28
      $region27: #{dbgcn_forward.2} parent=11 // pred_region
        _
      $region28: #{dbgcn_forward.2} parent=11 // pred_fallthru
        _
      // Predicated region
      $region29: #{dbgcn_forward.2} parent=11 // pred_check
        %p309 = pneg %p188
      $region30: #{dbgcn_forward.2} parent=11 // pred_check_branch
        %311 = sbr.rel (%p309) target = $region32
      $region31: #{dbgcn_forward.2} parent=11 // pred_region
        _
      $region32: #{dbgcn_forward.2} parent=11 // pred_fallthru
        _
      // Predicated region
      $region33: #{dbgcn_forward.2} parent=11 // pred_check
        %p312 = pneg %p209
      $region34: #{dbgcn_forward.2} parent=11 // pred_check_branch
        %314 = sbr.rel (%p312) target = $region36
      $region35: #{dbgcn_forward.2} parent=11 // pred_region
        _
      $region36: #{dbgcn_forward.2} parent=11 // pred_fallthru
        _
      // Predicated region
      $region37: #{dbgcn_forward.2} parent=11 // pred_check
        %p315 = pneg %p230
      $region38: #{dbgcn_forward.2} parent=11 // pred_check_branch
        %317 = sbr.rel (%p315) target = $region40
      $region39: #{dbgcn_forward.2} parent=11 // pred_region
        _
      $region40: #{dbgcn_forward.2} parent=11 // pred_fallthru
        _
    $region12: #{dbgcn_forward.2} parent=5 // pred_fallthru
      _
    %p318 = scmp.lt.s32.totalorder %s17, 2
    // Predicated region
    $region41: #{dbgcn_forward.2} parent=5 // pred_check
      %p319 = pneg %p318
    $region42: #{dbgcn_forward.2} parent=5 // pred_check_branch
      %321 = sbr.rel (%p319) target = $region44
    $region43: #{dbgcn_forward.2} parent=5 // pred_region
      // Predicated region
      $region45: #{dbgcn_forward.2} parent=43 // pred_check
        %p322 = pneg %p51
      $region46: #{dbgcn_forward.2} parent=43 // pred_check_branch
        %324 = sbr.rel (%p322) target = $region48
      $region47: #{dbgcn_forward.2} parent=43 // pred_region
        %s325 = smul.u32 16, %s24
        %s326 = smul.u32 2, %s25
        %p327 = scmp.lt.s32.totalorder %s325, 31
        %s328 = scalar_select %p327, %s325, 31
        %p329 = scmp.lt.s32.totalorder %s326, 1
        %s330 = scalar_select %p329, %s326, 1
        %s331 = smul.addr %s328, 2
        %s332 = sadd.s32 %s330, %s331
        %s333 = smul.addr %s332, 4
        %s334 = scalar_lea.vmem %s0, %s333
        %s335 = smul.u32 16, %s24
        %s336 = smul.u32 2, %s25
      $region48: #{dbgcn_forward.2} parent=43 // pred_fallthru
        _
      // Predicated region
      $region49: #{dbgcn_forward.2} parent=43 // pred_check
        %p337 = pneg %p98
      $region50: #{dbgcn_forward.2} parent=43 // pred_check_branch
        %339 = sbr.rel (%p337) target = $region52
      $region51: #{dbgcn_forward.2} parent=43 // pred_region
        %s340 = smul.u32 16, %s24
        %p341 = scmp.lt.s32.totalorder %s340, 31
        %s342 = scalar_select %p341, %s340, 31
        %s343 = smul.addr %s342, 8
        %s344 = scalar_lea.vmem %s2, %s343
        %s345 = smul.u32 16, %s24
      $region52: #{dbgcn_forward.2} parent=43 // pred_fallthru
        _
    $region44: #{dbgcn_forward.2} parent=5 // pred_fallthru
      _
    %p346 = scmp.le.s32.totalorder 1, %s17
    %p347 = scmp.lt.s32.totalorder %s17, 3
    %p348 = pnand %p346, %p347
    %p349 = pneg %p348
    // Predicated region
    $region53: #{dbgcn_forward.2} parent=5 // pred_check
      _
    $region54: #{dbgcn_forward.2} parent=5 // pred_check_branch
      %351 = sbr.rel (%p348) target = $region56
    $region55: #{dbgcn_forward.2} parent=5 // pred_region
      %s352 = ssub.s32 %s17, 1
      %s353 = smul.u32 16, %s26
      %s354 = smul.u32 2, %s27
      %p355 = scmp.lt.s32.totalorder %s353, 31
      %s356 = scalar_select %p355, %s353, 31
      %p357 = scmp.lt.s32.totalorder %s354, 1
      %s358 = scalar_select %p357, %s354, 1
      %s359 = smul.addr %s356, 2
      %s360 = sadd.s32 %s358, %s359
      %s361 = smul.addr %s360, 4
      %s362 = scalar_lea.vmem %s0, %s361
      %p363 = pneg %p57
      %p364 = pneg %p54
      %p365 = pneg %p78
      %p366 = pneg %p75
      %s367 = smul.u32 16, %s26
      %p368 = scmp.lt.s32.totalorder %s367, 31
      %s369 = scalar_select %p368, %s367, 31
      %s370 = smul.addr %s369, 8
      %s371 = scalar_lea.vmem %s2, %s370
      %p372 = pneg %p104
      %p373 = pneg %p101
      %p374 = pneg %p125
      %p375 = pneg %p122
      %p376 = pneg %p146
      %p377 = pneg %p143
      %p378 = pneg %p167
      %p379 = pneg %p164
      %p380 = pneg %p188
      %p381 = pneg %p185
      %p382 = pneg %p209
      %p383 = pneg %p206
      %p384 = pneg %p230
      %p385 = pneg %p227
      %p386 = pneg %p256
      %p387 = pneg %p253
      %s388 = smul.u32 16, %s26
      %p389 = scmp.lt.s32.totalorder %s388, 31
      %s390 = scalar_select %p389, %s388, 31
      %s391 = smul.addr %s390, 4
      %s392 = scalar_lea.vmem %s9, %s391
      %p393 = pneg %p282
      %p394 = pneg %p279
      %s395 = smul.u32 16, %s26
      %p396 = scmp.lt.s32.totalorder %s395, 31
      %s397 = scalar_select %p396, %s395, 31
      %s398 = smul.addr %s397, 4
      %s399 = scalar_lea.vmem %s10, %s398
      %s400 = smul.u32 16, %s26
      %s401 = smul.u32 2, %s27
      %p402 = scmp.lt.s32.totalorder %s400, 31
      %s403 = scalar_select %p402, %s400, 31
      %p404 = scmp.lt.s32.totalorder %s401, 1
      %s405 = scalar_select %p404, %s401, 1
      %s406 = smul.addr %s403, 2
      %s407 = sadd.s32 %s405, %s406
      %s408 = smul.addr %s407, 4
      %s409 = scalar_lea.vmem %s0, %s408
      %s410 = smul.u32 16, %s26
      %s411 = smul.u32 2, %s27
      %s412 = smul.u32 16, %s26
      %p413 = scmp.lt.s32.totalorder %s412, 31
      %s414 = scalar_select %p413, %s412, 31
      %s415 = smul.addr %s414, 8
      %s416 = scalar_lea.vmem %s2, %s415
      %s417 = smul.u32 16, %s26
      %s418 = smul.u32 16, %s26
      %p419 = scmp.lt.s32.totalorder %s418, 31
      %s420 = scalar_select %p419, %s418, 31
      %s421 = smul.addr %s420, 4
      %s422 = scalar_lea.vmem %s9, %s421
      %s423 = smul.u32 16, %s26
      %s424 = smul.u32 16, %s26
      %p425 = scmp.lt.s32.totalorder %s424, 31
      %s426 = scalar_select %p425, %s424, 31
      %s427 = smul.addr %s426, 4
      %s428 = scalar_lea.vmem %s10, %s427
      %s429 = smul.u32 16, %s26
      %p430 = scmp.eq.s32.totalorder %s27, 0
      // Predicated region
      $region57: #{dbgcn_forward.2} parent=55 // pred_check
        %p431 = pneg %p430
      $region58: #{dbgcn_forward.2} parent=55 // pred_check_branch
        %433 = sbr.rel (%p431) target = $region60
      $region59: #{dbgcn_forward.2} parent=55 // pred_region
        %434 = vst [vmem:[#allocation2] sm:$0xff] 0.0
        %435 = vst [vmem:[#allocation2 + $0x8] sm:$0xff] 0.0
        %436 = vst [vmem:[#allocation2 + $0x10] sm:$0xff] 0.0
        %437 = vst [vmem:[#allocation2 + $0x18] sm:$0xff] 0.0
        %438 = vst [vmem:[#allocation2 + $0x20] sm:$0xff] 0.0
        %439 = vst [vmem:[#allocation2 + $0x28] sm:$0xff] 0.0
        %440 = vst [vmem:[#allocation2 + $0x30] sm:$0xff] 0.0
        %441 = vst [vmem:[#allocation2 + $0x38] sm:$0xff] 0.0
        %442 = vst [vmem:[#allocation2 + $0x40] sm:$0xff] 0.0
        %443 = vst [vmem:[#allocation2 + $0x48] sm:$0xff] 0.0
        %444 = vst [vmem:[#allocation2 + $0x50] sm:$0xff] 0.0
        %445 = vst [vmem:[#allocation2 + $0x58] sm:$0xff] 0.0
        %446 = vst [vmem:[#allocation2 + $0x60] sm:$0xff] 0.0
        %447 = vst [vmem:[#allocation2 + $0x68] sm:$0xff] 0.0
        %448 = vst [vmem:[#allocation2 + $0x70] sm:$0xff] 0.0
        %449 = vst [vmem:[#allocation2 + $0x78] sm:$0xff] 0.0
      $region60: #{dbgcn_forward.2} parent=55 // pred_fallthru
        _
      %s450 = smul.u32 %s27, 256
      %v451 = vld [vmem:[#allocation2] sm:$0xff]
      %v452 = vld [vmem:[#allocation2 + $0x8] sm:$0xff]
      %v453 = vld [vmem:[#allocation2 + $0x10] sm:$0xff]
      %v454 = vld [vmem:[#allocation2 + $0x18] sm:$0xff]
      %v455 = vld [vmem:[#allocation2 + $0x20] sm:$0xff]
      %v456 = vld [vmem:[#allocation2 + $0x28] sm:$0xff]
      %v457 = vld [vmem:[#allocation2 + $0x30] sm:$0xff]
      %v458 = vld [vmem:[#allocation2 + $0x38] sm:$0xff]
      %v459 = vld [vmem:[#allocation2 + $0x40] sm:$0xff]
      %v460 = vld [vmem:[#allocation2 + $0x48] sm:$0xff]
      %v461 = vld [vmem:[#allocation2 + $0x50] sm:$0xff]
      %v462 = vld [vmem:[#allocation2 + $0x58] sm:$0xff]
      %v463 = vld [vmem:[#allocation2 + $0x60] sm:$0xff]
      %v464 = vld [vmem:[#allocation2 + $0x68] sm:$0xff]
      %v465 = vld [vmem:[#allocation2 + $0x70] sm:$0xff]
      %v466 = vld [vmem:[#allocation2 + $0x78] sm:$0xff]
      %v467 = vld [vmem:[%s409] sm:$0xff]
      %v468 = vld [vmem:[%s409 + $0x8] sm:$0xff]
      %v469 = vld [vmem:[%s409 + $0x10] sm:$0xff]
      %v470 = vld [vmem:[%s409 + $0x18] sm:$0xff]
      %v471 = vld [vmem:[%s409 + $0x20] sm:$0xff]
      %v472 = vld [vmem:[%s409 + $0x28] sm:$0xff]
      %v473 = vld [vmem:[%s409 + $0x30] sm:$0xff]
      %v474 = vld [vmem:[%s409 + $0x38] sm:$0xff]
      %v475 = vld [vmem:[%s409 + $0x40] sm:$0xff]
      %v476 = vld [vmem:[%s409 + $0x48] sm:$0xff]
      %v477 = vld [vmem:[%s409 + $0x50] sm:$0xff]
      %v478 = vld [vmem:[%s409 + $0x58] sm:$0xff]
      %v479 = vld [vmem:[%s409 + $0x60] sm:$0xff]
      %v480 = vld [vmem:[%s409 + $0x68] sm:$0xff]
      %v481 = vld [vmem:[%s409 + $0x70] sm:$0xff]
      %v482 = vld [vmem:[%s409 + $0x78] sm:$0xff]
      %s483 = sshra.s32 %s450, 3
      %s484 = sand.u32 %s450, 7
      %s485 = smul.addr %s483, 4
      %s486 = scalar_lea.vmem %s1, %s485
      %v487 = vld [vmem:[%s486] sm:$0xf]
      %v488 = vld [vmem:[%s486 + $0x4] sm:$0xf]
      %v489 = vld [vmem:[%s486 + $0x8] sm:$0xf]
      %v490 = vld [vmem:[%s486 + $0xc] sm:$0xf]
      %v491 = vld [vmem:[%s486 + $0x10] sm:$0xf]
      %v492 = vld [vmem:[%s486 + $0x14] sm:$0xf]
      %v493 = vld [vmem:[%s486 + $0x18] sm:$0xf]
      %v494 = vld [vmem:[%s486 + $0x1c] sm:$0xf]
      %v495 = vld [vmem:[%s486 + $0x20] sm:$0xf]
      %v496 = vld [vmem:[%s486 + $0x24] sm:$0xf]
      %v497 = vld [vmem:[%s486 + $0x28] sm:$0xf]
      %v498 = vld [vmem:[%s486 + $0x2c] sm:$0xf]
      %v499 = vld [vmem:[%s486 + $0x30] sm:$0xf]
      %v500 = vld [vmem:[%s486 + $0x34] sm:$0xf]
      %v501 = vld [vmem:[%s486 + $0x38] sm:$0xf]
      %v502 = vld [vmem:[%s486 + $0x3c] sm:$0xf]
      %v503 = vld [vmem:[%s486 + $0x40] sm:$0xf]
      %v504 = vld [vmem:[%s486 + $0x44] sm:$0xf]
      %v505 = vld [vmem:[%s486 + $0x48] sm:$0xf]
      %v506 = vld [vmem:[%s486 + $0x4c] sm:$0xf]
      %v507 = vld [vmem:[%s486 + $0x50] sm:$0xf]
      %v508 = vld [vmem:[%s486 + $0x54] sm:$0xf]
      %v509 = vld [vmem:[%s486 + $0x58] sm:$0xf]
      %v510 = vld [vmem:[%s486 + $0x5c] sm:$0xf]
      %v511 = vld [vmem:[%s486 + $0x60] sm:$0xf]
      %v512 = vld [vmem:[%s486 + $0x64] sm:$0xf]
      %v513 = vld [vmem:[%s486 + $0x68] sm:$0xf]
      %v514 = vld [vmem:[%s486 + $0x6c] sm:$0xf]
      %v515 = vld [vmem:[%s486 + $0x70] sm:$0xf]
      %v516 = vld [vmem:[%s486 + $0x74] sm:$0xf]
      %v517 = vld [vmem:[%s486 + $0x78] sm:$0xf]
      %v518 = vld [vmem:[%s486 + $0x7c] sm:$0xf]
      %v535 = vunpack.c.l.b16 %v467
      %v536 = vunpack.c.h.b16 %v467
      %v537 = vunpack.c.l.b16 %v468
      %v538 = vunpack.c.h.b16 %v468
      %v539 = vunpack.c.l.b16 %v469
      %v540 = vunpack.c.h.b16 %v469
      %v541 = vunpack.c.l.b16 %v470
      %v542 = vunpack.c.h.b16 %v470
      %v543 = vunpack.c.l.b16 %v471
      %v544 = vunpack.c.h.b16 %v471
      %v545 = vunpack.c.l.b16 %v472
      %v546 = vunpack.c.h.b16 %v472
      %v547 = vunpack.c.l.b16 %v473
      %v548 = vunpack.c.h.b16 %v473
      %v549 = vunpack.c.l.b16 %v474
      %v550 = vunpack.c.h.b16 %v474
      %v551 = vunpack.c.l.b16 %v475
      %v552 = vunpack.c.h.b16 %v475
      %v553 = vunpack.c.l.b16 %v476
      %v554 = vunpack.c.h.b16 %v476
      %v555 = vunpack.c.l.b16 %v477
      %v556 = vunpack.c.h.b16 %v477
      %v557 = vunpack.c.l.b16 %v478
      %v558 = vunpack.c.h.b16 %v478
      %v559 = vunpack.c.l.b16 %v479
      %v560 = vunpack.c.h.b16 %v479
      %v561 = vunpack.c.l.b16 %v480
      %v562 = vunpack.c.h.b16 %v480
      %v563 = vunpack.c.l.b16 %v481
      %v564 = vunpack.c.h.b16 %v481
      %v565 = vunpack.c.l.b16 %v482
      %v566 = vunpack.c.h.b16 %v482
      %v567 = vpack.c.b16 %v537, %v535
      %v568 = vpack.c.b16 %v538, %v536
      %v569 = vpack.c.b16 %v541, %v539
      %v570 = vpack.c.b16 %v542, %v540
      %v571 = vpack.c.b16 %v545, %v543
      %v572 = vpack.c.b16 %v546, %v544
      %v573 = vpack.c.b16 %v549, %v547
      %v574 = vpack.c.b16 %v550, %v548
      %v575 = vpack.c.b16 %v553, %v551
      %v576 = vpack.c.b16 %v554, %v552
      %v577 = vpack.c.b16 %v557, %v555
      %v578 = vpack.c.b16 %v558, %v556
      %v579 = vpack.c.b16 %v561, %v559
      %v580 = vpack.c.b16 %v562, %v560
      %v581 = vpack.c.b16 %v565, %v563
      %v582 = vpack.c.b16 %v566, %v564
      %v631 = vunpack.c.l.b16 %v487
      %v632 = vunpack.c.l.b16 %v488
      %v633 = vunpack.c.l.b16 %v489
      %v634 = vunpack.c.l.b16 %v490
      %v635 = vunpack.c.l.b16 %v491
      %v636 = vunpack.c.l.b16 %v492
      %v637 = vunpack.c.l.b16 %v493
      %v638 = vunpack.c.l.b16 %v494
      %v639 = vunpack.c.l.b16 %v495
      %v640 = vunpack.c.l.b16 %v496
      %v641 = vunpack.c.l.b16 %v497
      %v642 = vunpack.c.l.b16 %v498
      %v643 = vunpack.c.l.b16 %v499
      %v644 = vunpack.c.l.b16 %v500
      %v645 = vunpack.c.l.b16 %v501
      %v646 = vunpack.c.l.b16 %v502
      %v647 = vunpack.c.l.b16 %v503
      %v648 = vunpack.c.l.b16 %v504
      %v649 = vunpack.c.l.b16 %v505
      %v650 = vunpack.c.l.b16 %v506
      %v651 = vunpack.c.l.b16 %v507
      %v652 = vunpack.c.l.b16 %v508
      %v653 = vunpack.c.l.b16 %v509
      %v654 = vunpack.c.l.b16 %v510
      %v655 = vunpack.c.l.b16 %v511
      %v656 = vunpack.c.l.b16 %v512
      %v657 = vunpack.c.l.b16 %v513
      %v658 = vunpack.c.l.b16 %v514
      %v659 = vunpack.c.l.b16 %v515
      %v660 = vunpack.c.l.b16 %v516
      %v661 = vunpack.c.l.b16 %v517
      %v662 = vunpack.c.l.b16 %v518
      %v663 = vpack.c.b16 %v632, %v631
      %v664 = vpack.c.b16 %v634, %v633
      %v665 = vpack.c.b16 %v636, %v635
      %v666 = vpack.c.b16 %v638, %v637
      %v667 = vpack.c.b16 %v640, %v639
      %v668 = vpack.c.b16 %v642, %v641
      %v669 = vpack.c.b16 %v644, %v643
      %v670 = vpack.c.b16 %v646, %v645
      %v671 = vpack.c.b16 %v648, %v647
      %v672 = vpack.c.b16 %v650, %v649
      %v673 = vpack.c.b16 %v652, %v651
      %v674 = vpack.c.b16 %v654, %v653
      %v675 = vpack.c.b16 %v656, %v655
      %v676 = vpack.c.b16 %v658, %v657
      %v677 = vpack.c.b16 %v660, %v659
      %v678 = vpack.c.b16 %v662, %v661
      %695 = vmatpush.bf16.msra.mxu0 %v670
      %696 = vmatpush.bf16.msra.mxu0 %v669
      %697 = vmatpush.bf16.msra.mxu0 %v668
      %698 = vmatpush.bf16.msra.mxu0 %v667
      %699 = vmatpush.bf16.msra.mxu0 %v666
      %700 = vmatpush.bf16.msra.mxu0 %v665
      %701 = vmatpush.bf16.msra.mxu0 %v664
      %702 = vmatpush.bf16.msra.mxu0 %v663
      %703 = vmatmul.bf16.gmra.mxu0 %v567
      %v704 = vpop.f32.mrf.mxu0
      %v705 = vadd.f32 0.0, %v704
      %v706 = vpop.f32.mrf.mxu0
      %v707 = vadd.f32 0.0, %v706
      %708 = vmatmul.bf16.gmra.mxu0 %v569
      %v709 = vpop.f32.mrf.mxu0
      %v710 = vadd.f32 0.0, %v709
      %v711 = vpop.f32.mrf.mxu0
      %v712 = vadd.f32 0.0, %v711
      %713 = vmatmul.bf16.gmra.mxu0 %v571
      %v714 = vpop.f32.mrf.mxu0
      %v715 = vadd.f32 0.0, %v714
      %v716 = vpop.f32.mrf.mxu0
      %v717 = vadd.f32 0.0, %v716
      %718 = vmatmul.bf16.gmra.mxu0 %v573
      %v719 = vpop.f32.mrf.mxu0
      %v720 = vadd.f32 0.0, %v719
      %v721 = vpop.f32.mrf.mxu0
      %v722 = vadd.f32 0.0, %v721
      %723 = vmatmul.bf16.gmra.mxu0 %v575
      %v724 = vpop.f32.mrf.mxu0
      %v725 = vadd.f32 0.0, %v724
      %v726 = vpop.f32.mrf.mxu0
      %v727 = vadd.f32 0.0, %v726
      %728 = vmatmul.bf16.gmra.mxu0 %v577
      %v729 = vpop.f32.mrf.mxu0
      %v730 = vadd.f32 0.0, %v729
      %v731 = vpop.f32.mrf.mxu0
      %v732 = vadd.f32 0.0, %v731
      %733 = vmatmul.bf16.gmra.mxu0 %v579
      %v734 = vpop.f32.mrf.mxu0
      %v735 = vadd.f32 0.0, %v734
      %v736 = vpop.f32.mrf.mxu0
      %v737 = vadd.f32 0.0, %v736
      %738 = vmatmul.bf16.gmra.mxu0 %v581
      %v739 = vpop.f32.mrf.mxu0
      %v740 = vadd.f32 0.0, %v739
      %v741 = vpop.f32.mrf.mxu0
      %v742 = vadd.f32 0.0, %v741
      %743 = vdwg.mxu0
      %744 = vmatpush.bf16.msra.mxu0 %v678
      %745 = vmatpush.bf16.msra.mxu0 %v677
      %746 = vmatpush.bf16.msra.mxu0 %v676
      %747 = vmatpush.bf16.msra.mxu0 %v675
      %748 = vmatpush.bf16.msra.mxu0 %v674
      %749 = vmatpush.bf16.msra.mxu0 %v673
      %750 = vmatpush.bf16.msra.mxu0 %v672
      %751 = vmatpush.bf16.msra.mxu0 %v671
      %752 = vmatmul.bf16.gmra.mxu0 %v568
      %v753 = vpop.f32.mrf.mxu0
      %v754 = vadd.f32 %v705, %v753
      %v755 = vpop.f32.mrf.mxu0
      %v756 = vadd.f32 %v707, %v755
      %757 = vmatmul.bf16.gmra.mxu0 %v570
      %v758 = vpop.f32.mrf.mxu0
      %v759 = vadd.f32 %v710, %v758
      %v760 = vpop.f32.mrf.mxu0
      %v761 = vadd.f32 %v712, %v760
      %762 = vmatmul.bf16.gmra.mxu0 %v572
      %v763 = vpop.f32.mrf.mxu0
      %v764 = vadd.f32 %v715, %v763
      %v765 = vpop.f32.mrf.mxu0
      %v766 = vadd.f32 %v717, %v765
      %767 = vmatmul.bf16.gmra.mxu0 %v574
      %v768 = vpop.f32.mrf.mxu0
      %v769 = vadd.f32 %v720, %v768
      %v770 = vpop.f32.mrf.mxu0
      %v771 = vadd.f32 %v722, %v770
      %772 = vmatmul.bf16.gmra.mxu0 %v576
      %v773 = vpop.f32.mrf.mxu0
      %v774 = vadd.f32 %v725, %v773
      %v775 = vpop.f32.mrf.mxu0
      %v776 = vadd.f32 %v727, %v775
      %777 = vmatmul.bf16.gmra.mxu0 %v578
      %v778 = vpop.f32.mrf.mxu0
      %v779 = vadd.f32 %v730, %v778
      %v780 = vpop.f32.mrf.mxu0
      %v781 = vadd.f32 %v732, %v780
      %782 = vmatmul.bf16.gmra.mxu0 %v580
      %v783 = vpop.f32.mrf.mxu0
      %v784 = vadd.f32 %v735, %v783
      %v785 = vpop.f32.mrf.mxu0
      %v786 = vadd.f32 %v737, %v785
      %787 = vmatmul.bf16.gmra.mxu0 %v582
      %v788 = vpop.f32.mrf.mxu0
      %v789 = vadd.f32 %v740, %v788
      %v790 = vpop.f32.mrf.mxu0
      %v791 = vadd.f32 %v742, %v790
      %792 = vdwg.mxu0
      %v793 = vadd.f32 %v451, %v754
      %v794 = vadd.f32 %v452, %v756
      %v795 = vadd.f32 %v453, %v759
      %v796 = vadd.f32 %v454, %v761
      %v797 = vadd.f32 %v455, %v764
      %v798 = vadd.f32 %v456, %v766
      %v799 = vadd.f32 %v457, %v769
      %v800 = vadd.f32 %v458, %v771
      %v801 = vadd.f32 %v459, %v774
      %v802 = vadd.f32 %v460, %v776
      %v803 = vadd.f32 %v461, %v779
      %v804 = vadd.f32 %v462, %v781
      %v805 = vadd.f32 %v463, %v784
      %v806 = vadd.f32 %v464, %v786
      %v807 = vadd.f32 %v465, %v789
      %v808 = vadd.f32 %v466, %v791
      %809 = vst [vmem:[#allocation2] sm:$0xff] %v793
      %810 = vst [vmem:[#allocation2 + $0x8] sm:$0xff] %v794
      %811 = vst [vmem:[#allocation2 + $0x10] sm:$0xff] %v795
      %812 = vst [vmem:[#allocation2 + $0x18] sm:$0xff] %v796
      %813 = vst [vmem:[#allocation2 + $0x20] sm:$0xff] %v797
      %814 = vst [vmem:[#allocation2 + $0x28] sm:$0xff] %v798
      %815 = vst [vmem:[#allocation2 + $0x30] sm:$0xff] %v799
      %816 = vst [vmem:[#allocation2 + $0x38] sm:$0xff] %v800
      %817 = vst [vmem:[#allocation2 + $0x40] sm:$0xff] %v801
      %818 = vst [vmem:[#allocation2 + $0x48] sm:$0xff] %v802
      %819 = vst [vmem:[#allocation2 + $0x50] sm:$0xff] %v803
      %820 = vst [vmem:[#allocation2 + $0x58] sm:$0xff] %v804
      %821 = vst [vmem:[#allocation2 + $0x60] sm:$0xff] %v805
      %822 = vst [vmem:[#allocation2 + $0x68] sm:$0xff] %v806
      %823 = vst [vmem:[#allocation2 + $0x70] sm:$0xff] %v807
      %824 = vst [vmem:[#allocation2 + $0x78] sm:$0xff] %v808
      // Predicated region
      $region61: #{dbgcn_forward.2} parent=55 // pred_check
        %p825 = pneg %p430
      $region62: #{dbgcn_forward.2} parent=55 // pred_check_branch
        %827 = sbr.rel (%p825) target = $region64
      $region63: #{dbgcn_forward.2} parent=55 // pred_region
        %v828 = vld [vmem:[%s8] sm:$0x1]
        %v829 = vld [vmem:[%s8 + $0x1] sm:$0x1]
        %v830 = vld [vmem:[%s8 + $0x2] sm:$0x1]
        %v831 = vld [vmem:[%s8 + $0x3] sm:$0x1]
        %v832 = vld [vmem:[%s8 + $0x4] sm:$0x1]
        %v833 = vld [vmem:[%s8 + $0x5] sm:$0x1]
        %v834 = vld [vmem:[%s8 + $0x6] sm:$0x1]
        %v835 = vld [vmem:[#allocation2] sm:$0xff]
        %v836 = vld [vmem:[#allocation2 + $0x8] sm:$0xff]
        %v837 = vld [vmem:[#allocation2 + $0x10] sm:$0xff]
        %v838 = vld [vmem:[#allocation2 + $0x18] sm:$0xff]
        %v839 = vld [vmem:[#allocation2 + $0x20] sm:$0xff]
        %v840 = vld [vmem:[#allocation2 + $0x28] sm:$0xff]
        %v841 = vld [vmem:[#allocation2 + $0x30] sm:$0xff]
        %v842 = vld [vmem:[#allocation2 + $0x38] sm:$0xff]
        %v843 = vld [vmem:[#allocation2 + $0x40] sm:$0xff]
        %v844 = vld [vmem:[#allocation2 + $0x48] sm:$0xff]
        %v845 = vld [vmem:[#allocation2 + $0x50] sm:$0xff]
        %v846 = vld [vmem:[#allocation2 + $0x58] sm:$0xff]
        %v847 = vld [vmem:[#allocation2 + $0x60] sm:$0xff]
        %v848 = vld [vmem:[#allocation2 + $0x68] sm:$0xff]
        %v849 = vld [vmem:[#allocation2 + $0x70] sm:$0xff]
        %v850 = vld [vmem:[#allocation2 + $0x78] sm:$0xff]
        %v851 = vld [vmem:[%s416] sm:$0xff]
        %v852 = vld [vmem:[%s416 + $0x8] sm:$0xff]
        %v853 = vld [vmem:[%s416 + $0x10] sm:$0xff]
        %v854 = vld [vmem:[%s416 + $0x18] sm:$0xff]
        %v855 = vld [vmem:[%s416 + $0x20] sm:$0xff]
        %v856 = vld [vmem:[%s416 + $0x28] sm:$0xff]
        %v857 = vld [vmem:[%s416 + $0x30] sm:$0xff]
        %v858 = vld [vmem:[%s416 + $0x38] sm:$0xff]
        %v859 = vld [vmem:[%s416 + $0x40] sm:$0xff]
        %v860 = vld [vmem:[%s416 + $0x48] sm:$0xff]
        %v861 = vld [vmem:[%s416 + $0x50] sm:$0xff]
        %v862 = vld [vmem:[%s416 + $0x58] sm:$0xff]
        %v863 = vld [vmem:[%s416 + $0x60] sm:$0xff]
        %v864 = vld [vmem:[%s416 + $0x68] sm:$0xff]
        %v865 = vld [vmem:[%s416 + $0x70] sm:$0xff]
        %v866 = vld [vmem:[%s416 + $0x78] sm:$0xff]
        %868 = vset.pattern.permute.xlu0 0
        %869 = vperm.xlu0 %868, %v851
        %v870 = vpop.permute.xlu0 %869
        %873 = vset.pattern.permute.xlu0 0
        %874 = vperm.xlu0 %873, %v852
        %v875 = vpop.permute.xlu0 %874
        %878 = vset.pattern.permute.xlu0 0
        %879 = vperm.xlu0 %878, %v853
        %v880 = vpop.permute.xlu0 %879
        %883 = vset.pattern.permute.xlu0 0
        %884 = vperm.xlu0 %883, %v854
        %v885 = vpop.permute.xlu0 %884
        %888 = vset.pattern.permute.xlu0 0
        %889 = vperm.xlu0 %888, %v855
        %v890 = vpop.permute.xlu0 %889
        %893 = vset.pattern.permute.xlu0 0
        %894 = vperm.xlu0 %893, %v856
        %v895 = vpop.permute.xlu0 %894
        %898 = vset.pattern.permute.xlu0 0
        %899 = vperm.xlu0 %898, %v857
        %v900 = vpop.permute.xlu0 %899
        %903 = vset.pattern.permute.xlu0 0
        %904 = vperm.xlu0 %903, %v858
        %v905 = vpop.permute.xlu0 %904
        %908 = vset.pattern.permute.xlu0 0
        %909 = vperm.xlu0 %908, %v859
        %v910 = vpop.permute.xlu0 %909
        %913 = vset.pattern.permute.xlu0 0
        %914 = vperm.xlu0 %913, %v860
        %v915 = vpop.permute.xlu0 %914
        %918 = vset.pattern.permute.xlu0 0
        %919 = vperm.xlu0 %918, %v861
        %v920 = vpop.permute.xlu0 %919
        %923 = vset.pattern.permute.xlu0 0
        %924 = vperm.xlu0 %923, %v862
        %v925 = vpop.permute.xlu0 %924
        %928 = vset.pattern.permute.xlu0 0
        %929 = vperm.xlu0 %928, %v863
        %v930 = vpop.permute.xlu0 %929
        %933 = vset.pattern.permute.xlu0 0
        %934 = vperm.xlu0 %933, %v864
        %v935 = vpop.permute.xlu0 %934
        %938 = vset.pattern.permute.xlu0 0
        %939 = vperm.xlu0 %938, %v865
        %v940 = vpop.permute.xlu0 %939
        %943 = vset.pattern.permute.xlu0 0
        %944 = vperm.xlu0 %943, %v866
        %v945 = vpop.permute.xlu0 %944
        %v947 = vmul.f32 %v835, %v870
        %v948 = vmul.f32 %v836, %v875
        %v949 = vmul.f32 %v837, %v880
        %v950 = vmul.f32 %v838, %v885
        %v951 = vmul.f32 %v839, %v890
        %v952 = vmul.f32 %v840, %v895
        %v953 = vmul.f32 %v841, %v900
        %v954 = vmul.f32 %v842, %v905
        %v955 = vmul.f32 %v843, %v910
        %v956 = vmul.f32 %v844, %v915
        %v957 = vmul.f32 %v845, %v920
        %v958 = vmul.f32 %v846, %v925
        %v959 = vmul.f32 %v847, %v930
        %v960 = vmul.f32 %v848, %v935
        %v961 = vmul.f32 %v849, %v940
        %v962 = vmul.f32 %v850, %v945
        %s963 = smul.u32 %s26, 128
        %s964 = sshra.s32 %s963, 3
        %s965 = sand.u32 %s963, 7
        %s966 = smul.addr %s964, 4
        %s967 = scalar_lea.vmem %s1, %s966
        %v968 = vld [vmem:[%s967] sm:$0xf]
        %v969 = vld [vmem:[%s967 + $0x4] sm:$0xf]
        %v970 = vld [vmem:[%s967 + $0x8] sm:$0xf]
        %v971 = vld [vmem:[%s967 + $0xc] sm:$0xf]
        %v972 = vld [vmem:[%s967 + $0x10] sm:$0xf]
        %v973 = vld [vmem:[%s967 + $0x14] sm:$0xf]
        %v974 = vld [vmem:[%s967 + $0x18] sm:$0xf]
        %v975 = vld [vmem:[%s967 + $0x1c] sm:$0xf]
        %v976 = vld [vmem:[%s967 + $0x20] sm:$0xf]
        %v977 = vld [vmem:[%s967 + $0x24] sm:$0xf]
        %v978 = vld [vmem:[%s967 + $0x28] sm:$0xf]
        %v979 = vld [vmem:[%s967 + $0x2c] sm:$0xf]
        %v980 = vld [vmem:[%s967 + $0x30] sm:$0xf]
        %v981 = vld [vmem:[%s967 + $0x34] sm:$0xf]
        %v982 = vld [vmem:[%s967 + $0x38] sm:$0xf]
        %v983 = vld [vmem:[%s967 + $0x3c] sm:$0xf]
        %v984 = vunpack.c.l.bf16 %v968
        %v985 = vunpack.c.l.bf16 %v969
        %v986 = vunpack.c.l.bf16 %v970
        %v987 = vunpack.c.l.bf16 %v971
        %v988 = vunpack.c.l.bf16 %v972
        %v989 = vunpack.c.l.bf16 %v973
        %v990 = vunpack.c.l.bf16 %v974
        %v991 = vunpack.c.l.bf16 %v975
        %v992 = vunpack.c.l.bf16 %v976
        %v993 = vunpack.c.l.bf16 %v977
        %v994 = vunpack.c.l.bf16 %v978
        %v995 = vunpack.c.l.bf16 %v979
        %v996 = vunpack.c.l.bf16 %v980
        %v997 = vunpack.c.l.bf16 %v981
        %v998 = vunpack.c.l.bf16 %v982
        %v999 = vunpack.c.l.bf16 %v983
        %v1000 = vld [vmem:[%s3] sm:$0xff]
        %v1001 = vld [vmem:[%s3 + $0x8] sm:$0xff]
        %v1002 = vld [vmem:[%s3 + $0x10] sm:$0xff]
        %v1003 = vld [vmem:[%s3 + $0x18] sm:$0xff]
        %v1004 = vld [vmem:[%s3 + $0x20] sm:$0xff]
        %v1005 = vld [vmem:[%s3 + $0x28] sm:$0xff]
        %v1006 = vld [vmem:[%s3 + $0x30] sm:$0xff]
        %v1007 = vld [vmem:[%s3 + $0x38] sm:$0xff]
        %v1008 = vld [vmem:[%s3 + $0x40] sm:$0xff]
        %v1009 = vld [vmem:[%s3 + $0x48] sm:$0xff]
        %v1010 = vld [vmem:[%s3 + $0x50] sm:$0xff]
        %v1011 = vld [vmem:[%s3 + $0x58] sm:$0xff]
        %v1012 = vld [vmem:[%s3 + $0x60] sm:$0xff]
        %v1013 = vld [vmem:[%s3 + $0x68] sm:$0xff]
        %v1014 = vld [vmem:[%s3 + $0x70] sm:$0xff]
        %v1015 = vld [vmem:[%s3 + $0x78] sm:$0xff]
        %v1016 = vperm.slane %v828, 0
        %1017 = vmatpush.msra.mxu0 %v1015
        %1018 = vmatpush.msra.mxu0 %v1014
        %1019 = vmatpush.msra.mxu0 %v1013
        %1020 = vmatpush.msra.mxu0 %v1012
        %1021 = vmatpush.msra.mxu0 %v1011
        %1022 = vmatpush.msra.mxu0 %v1010
        %1023 = vmatpush.msra.mxu0 %v1009
        %1024 = vmatpush.msra.mxu0 %v1008
        %1025 = vmatpush.msra.mxu0 %v1007
        %1026 = vmatpush.msra.mxu0 %v1006
        %1027 = vmatpush.msra.mxu0 %v1005
        %1028 = vmatpush.msra.mxu0 %v1004
        %1029 = vmatpush.msra.mxu0 %v1003
        %1030 = vmatpush.msra.mxu0 %v1002
        %1031 = vmatpush.msra.mxu0 %v1001
        %1032 = vmatpush.msra.mxu0 %v1000
        %1033 = vmatmul.f32.gmra.mxu0 %v947
        %v1034 = vpop.f32.mrf.mxu0
        %v1035 = vadd.f32 %v1016, %v1034
        %1036 = vmatmul.f32.gmra.mxu0 %v948
        %v1037 = vpop.f32.mrf.mxu0
        %v1038 = vadd.f32 %v1016, %v1037
        %1039 = vmatmul.f32.gmra.mxu0 %v949
        %v1040 = vpop.f32.mrf.mxu0
        %v1041 = vadd.f32 %v1016, %v1040
        %1042 = vmatmul.f32.gmra.mxu0 %v950
        %v1043 = vpop.f32.mrf.mxu0
        %v1044 = vadd.f32 %v1016, %v1043
        %1045 = vmatmul.f32.gmra.mxu0 %v951
        %v1046 = vpop.f32.mrf.mxu0
        %v1047 = vadd.f32 %v1016, %v1046
        %1048 = vmatmul.f32.gmra.mxu0 %v952
        %v1049 = vpop.f32.mrf.mxu0
        %v1050 = vadd.f32 %v1016, %v1049
        %1051 = vmatmul.f32.gmra.mxu0 %v953
        %v1052 = vpop.f32.mrf.mxu0
        %v1053 = vadd.f32 %v1016, %v1052
        %1054 = vmatmul.f32.gmra.mxu0 %v954
        %v1055 = vpop.f32.mrf.mxu0
        %v1056 = vadd.f32 %v1016, %v1055
        %1057 = vmatmul.f32.gmra.mxu0 %v955
        %v1058 = vpop.f32.mrf.mxu0
        %v1059 = vadd.f32 %v1016, %v1058
        %1060 = vmatmul.f32.gmra.mxu0 %v956
        %v1061 = vpop.f32.mrf.mxu0
        %v1062 = vadd.f32 %v1016, %v1061
        %1063 = vmatmul.f32.gmra.mxu0 %v957
        %v1064 = vpop.f32.mrf.mxu0
        %v1065 = vadd.f32 %v1016, %v1064
        %1066 = vmatmul.f32.gmra.mxu0 %v958
        %v1067 = vpop.f32.mrf.mxu0
        %v1068 = vadd.f32 %v1016, %v1067
        %1069 = vmatmul.f32.gmra.mxu0 %v959
        %v1070 = vpop.f32.mrf.mxu0
        %v1071 = vadd.f32 %v1016, %v1070
        %1072 = vmatmul.f32.gmra.mxu0 %v960
        %v1073 = vpop.f32.mrf.mxu0
        %v1074 = vadd.f32 %v1016, %v1073
        %1075 = vmatmul.f32.gmra.mxu0 %v961
        %v1076 = vpop.f32.mrf.mxu0
        %v1077 = vadd.f32 %v1016, %v1076
        %1078 = vmatmul.f32.gmra.mxu0 %v962
        %v1079 = vpop.f32.mrf.mxu0
        %v1080 = vadd.f32 %v1016, %v1079
        %1081 = vdwg.mxu0
        %v1082 = vld [vmem:[%s4] sm:$0xff]
        %v1083 = vld [vmem:[%s4 + $0x8] sm:$0xff]
        %v1084 = vld [vmem:[%s4 + $0x10] sm:$0xff]
        %v1085 = vld [vmem:[%s4 + $0x18] sm:$0xff]
        %v1086 = vld [vmem:[%s4 + $0x20] sm:$0xff]
        %v1087 = vld [vmem:[%s4 + $0x28] sm:$0xff]
        %v1088 = vld [vmem:[%s4 + $0x30] sm:$0xff]
        %v1089 = vld [vmem:[%s4 + $0x38] sm:$0xff]
        %v1090 = vld [vmem:[%s4 + $0x40] sm:$0xff]
        %v1091 = vld [vmem:[%s4 + $0x48] sm:$0xff]
        %v1092 = vld [vmem:[%s4 + $0x50] sm:$0xff]
        %v1093 = vld [vmem:[%s4 + $0x58] sm:$0xff]
        %v1094 = vld [vmem:[%s4 + $0x60] sm:$0xff]
        %v1095 = vld [vmem:[%s4 + $0x68] sm:$0xff]
        %v1096 = vld [vmem:[%s4 + $0x70] sm:$0xff]
        %v1097 = vld [vmem:[%s4 + $0x78] sm:$0xff]
        %1098 = vmatpush.msra.mxu0 %v1097
        %1099 = vmatpush.msra.mxu0 %v1096
        %1100 = vmatpush.msra.mxu0 %v1095
        %1101 = vmatpush.msra.mxu0 %v1094
        %1102 = vmatpush.msra.mxu0 %v1093
        %1103 = vmatpush.msra.mxu0 %v1092
        %1104 = vmatpush.msra.mxu0 %v1091
        %1105 = vmatpush.msra.mxu0 %v1090
        %1106 = vmatpush.msra.mxu0 %v1089
        %1107 = vmatpush.msra.mxu0 %v1088
        %1108 = vmatpush.msra.mxu0 %v1087
        %1109 = vmatpush.msra.mxu0 %v1086
        %1110 = vmatpush.msra.mxu0 %v1085
        %1111 = vmatpush.msra.mxu0 %v1084
        %1112 = vmatpush.msra.mxu0 %v1083
        %1113 = vmatpush.msra.mxu0 %v1082
        %1114 = vmatmul.f32.gmra.mxu0 %v984
        %v1115 = vpop.f32.mrf.mxu0
        %v1116 = vadd.f32 0.0, %v1115
        %1117 = vmatmul.f32.gmra.mxu0 %v985
        %v1118 = vpop.f32.mrf.mxu0
        %v1119 = vadd.f32 0.0, %v1118
        %1120 = vmatmul.f32.gmra.mxu0 %v986
        %v1121 = vpop.f32.mrf.mxu0
        %v1122 = vadd.f32 0.0, %v1121
        %1123 = vmatmul.f32.gmra.mxu0 %v987
        %v1124 = vpop.f32.mrf.mxu0
        %v1125 = vadd.f32 0.0, %v1124
        %1126 = vmatmul.f32.gmra.mxu0 %v988
        %v1127 = vpop.f32.mrf.mxu0
        %v1128 = vadd.f32 0.0, %v1127
        %1129 = vmatmul.f32.gmra.mxu0 %v989
        %v1130 = vpop.f32.mrf.mxu0
        %v1131 = vadd.f32 0.0, %v1130
        %1132 = vmatmul.f32.gmra.mxu0 %v990
        %v1133 = vpop.f32.mrf.mxu0
        %v1134 = vadd.f32 0.0, %v1133
        %1135 = vmatmul.f32.gmra.mxu0 %v991
        %v1136 = vpop.f32.mrf.mxu0
        %v1137 = vadd.f32 0.0, %v1136
        %1138 = vmatmul.f32.gmra.mxu0 %v992
        %v1139 = vpop.f32.mrf.mxu0
        %v1140 = vadd.f32 0.0, %v1139
        %1141 = vmatmul.f32.gmra.mxu0 %v993
        %v1142 = vpop.f32.mrf.mxu0
        %v1143 = vadd.f32 0.0, %v1142
        %1144 = vmatmul.f32.gmra.mxu0 %v994
        %v1145 = vpop.f32.mrf.mxu0
        %v1146 = vadd.f32 0.0, %v1145
        %1147 = vmatmul.f32.gmra.mxu0 %v995
        %v1148 = vpop.f32.mrf.mxu0
        %v1149 = vadd.f32 0.0, %v1148
        %1150 = vmatmul.f32.gmra.mxu0 %v996
        %v1151 = vpop.f32.mrf.mxu0
        %v1152 = vadd.f32 0.0, %v1151
        %1153 = vmatmul.f32.gmra.mxu0 %v997
        %v1154 = vpop.f32.mrf.mxu0
        %v1155 = vadd.f32 0.0, %v1154
        %1156 = vmatmul.f32.gmra.mxu0 %v998
        %v1157 = vpop.f32.mrf.mxu0
        %v1158 = vadd.f32 0.0, %v1157
        %1159 = vmatmul.f32.gmra.mxu0 %v999
        %v1160 = vpop.f32.mrf.mxu0
        %v1161 = vadd.f32 0.0, %v1160
        %1162 = vdwg.mxu0
        %v1163 = vadd.f32 %v1035, %v1116
        %v1164 = vadd.f32 %v1038, %v1119
        %v1165 = vadd.f32 %v1041, %v1122
        %v1166 = vadd.f32 %v1044, %v1125
        %v1167 = vadd.f32 %v1047, %v1128
        %v1168 = vadd.f32 %v1050, %v1131
        %v1169 = vadd.f32 %v1053, %v1134
        %v1170 = vadd.f32 %v1056, %v1137
        %v1171 = vadd.f32 %v1059, %v1140
        %v1172 = vadd.f32 %v1062, %v1143
        %v1173 = vadd.f32 %v1065, %v1146
        %v1174 = vadd.f32 %v1068, %v1149
        %v1175 = vadd.f32 %v1071, %v1152
        %v1176 = vadd.f32 %v1074, %v1155
        %v1177 = vadd.f32 %v1077, %v1158
        %v1178 = vadd.f32 %v1080, %v1161
        %v1179 = vmax.f32 %v1163, 0.0
        %v1180 = vmax.f32 %v1164, 0.0
        %v1181 = vmax.f32 %v1165, 0.0
        %v1182 = vmax.f32 %v1166, 0.0
        %v1183 = vmax.f32 %v1167, 0.0
        %v1184 = vmax.f32 %v1168, 0.0
        %v1185 = vmax.f32 %v1169, 0.0
        %v1186 = vmax.f32 %v1170, 0.0
        %v1187 = vmax.f32 %v1171, 0.0
        %v1188 = vmax.f32 %v1172, 0.0
        %v1189 = vmax.f32 %v1173, 0.0
        %v1190 = vmax.f32 %v1174, 0.0
        %v1191 = vmax.f32 %v1175, 0.0
        %v1192 = vmax.f32 %v1176, 0.0
        %v1193 = vmax.f32 %v1177, 0.0
        %v1194 = vmax.f32 %v1178, 0.0
        %1195 = vadd.xlane.f32.xlu0 %v1179
        %v1196 = vpop.xlane.xlu0 %1195
        %1197 = vadd.xlane.f32.xlu0 %v1180
        %v1198 = vpop.xlane.xlu0 %1197
        %1199 = vadd.xlane.f32.xlu0 %v1181
        %v1200 = vpop.xlane.xlu0 %1199
        %1201 = vadd.xlane.f32.xlu0 %v1182
        %v1202 = vpop.xlane.xlu0 %1201
        %1203 = vadd.xlane.f32.xlu0 %v1183
        %v1204 = vpop.xlane.xlu0 %1203
        %1205 = vadd.xlane.f32.xlu0 %v1184
        %v1206 = vpop.xlane.xlu0 %1205
        %1207 = vadd.xlane.f32.xlu0 %v1185
        %v1208 = vpop.xlane.xlu0 %1207
        %1209 = vadd.xlane.f32.xlu0 %v1186
        %v1210 = vpop.xlane.xlu0 %1209
        %1211 = vadd.xlane.f32.xlu0 %v1187
        %v1212 = vpop.xlane.xlu0 %1211
        %1213 = vadd.xlane.f32.xlu0 %v1188
        %v1214 = vpop.xlane.xlu0 %1213
        %1215 = vadd.xlane.f32.xlu0 %v1189
        %v1216 = vpop.xlane.xlu0 %1215
        %1217 = vadd.xlane.f32.xlu0 %v1190
        %v1218 = vpop.xlane.xlu0 %1217
        %1219 = vadd.xlane.f32.xlu0 %v1191
        %v1220 = vpop.xlane.xlu0 %1219
        %1221 = vadd.xlane.f32.xlu0 %v1192
        %v1222 = vpop.xlane.xlu0 %1221
        %1223 = vadd.xlane.f32.xlu0 %v1193
        %v1224 = vpop.xlane.xlu0 %1223
        %1225 = vadd.xlane.f32.xlu0 %v1194
        %v1226 = vpop.xlane.xlu0 %1225
        %v1227 = vmul.f32 %v1196, 0.03125
        %v1228 = vmul.f32 %v1198, 0.03125
        %v1229 = vmul.f32 %v1200, 0.03125
        %v1230 = vmul.f32 %v1202, 0.03125
        %v1231 = vmul.f32 %v1204, 0.03125
        %v1232 = vmul.f32 %v1206, 0.03125
        %v1233 = vmul.f32 %v1208, 0.03125
        %v1234 = vmul.f32 %v1210, 0.03125
        %v1235 = vmul.f32 %v1212, 0.03125
        %v1236 = vmul.f32 %v1214, 0.03125
        %v1237 = vmul.f32 %v1216, 0.03125
        %v1238 = vmul.f32 %v1218, 0.03125
        %v1239 = vmul.f32 %v1220, 0.03125
        %v1240 = vmul.f32 %v1222, 0.03125
        %v1241 = vmul.f32 %v1224, 0.03125
        %v1242 = vmul.f32 %v1226, 0.03125
        %v1243 = vsub.f32 %v1179, %v1227
        %v1244 = vsub.f32 %v1180, %v1228
        %v1245 = vsub.f32 %v1181, %v1229
        %v1246 = vsub.f32 %v1182, %v1230
        %v1247 = vsub.f32 %v1183, %v1231
        %v1248 = vsub.f32 %v1184, %v1232
        %v1249 = vsub.f32 %v1185, %v1233
        %v1250 = vsub.f32 %v1186, %v1234
        %v1251 = vsub.f32 %v1187, %v1235
        %v1252 = vsub.f32 %v1188, %v1236
        %v1253 = vsub.f32 %v1189, %v1237
        %v1254 = vsub.f32 %v1190, %v1238
        %v1255 = vsub.f32 %v1191, %v1239
        %v1256 = vsub.f32 %v1192, %v1240
        %v1257 = vsub.f32 %v1193, %v1241
        %v1258 = vsub.f32 %v1194, %v1242
        %v1259 = vperm.slane %v831, 0
        %v1260 = vmul.f32 %v1243, %v1259
        %v1261 = vmul.f32 %v1244, %v1259
        %v1262 = vmul.f32 %v1245, %v1259
        %v1263 = vmul.f32 %v1246, %v1259
        %v1264 = vmul.f32 %v1247, %v1259
        %v1265 = vmul.f32 %v1248, %v1259
        %v1266 = vmul.f32 %v1249, %v1259
        %v1267 = vmul.f32 %v1250, %v1259
        %v1268 = vmul.f32 %v1251, %v1259
        %v1269 = vmul.f32 %v1252, %v1259
        %v1270 = vmul.f32 %v1253, %v1259
        %v1271 = vmul.f32 %v1254, %v1259
        %v1272 = vmul.f32 %v1255, %v1259
        %v1273 = vmul.f32 %v1256, %v1259
        %v1274 = vmul.f32 %v1257, %v1259
        %v1275 = vmul.f32 %v1258, %v1259
        %v1276 = vmul.f32 %v1260, %v1260
        %v1277 = vmul.f32 %v1261, %v1261
        %v1278 = vmul.f32 %v1262, %v1262
        %v1279 = vmul.f32 %v1263, %v1263
        %v1280 = vmul.f32 %v1264, %v1264
        %v1281 = vmul.f32 %v1265, %v1265
        %v1282 = vmul.f32 %v1266, %v1266
        %v1283 = vmul.f32 %v1267, %v1267
        %v1284 = vmul.f32 %v1268, %v1268
        %v1285 = vmul.f32 %v1269, %v1269
        %v1286 = vmul.f32 %v1270, %v1270
        %v1287 = vmul.f32 %v1271, %v1271
        %v1288 = vmul.f32 %v1272, %v1272
        %v1289 = vmul.f32 %v1273, %v1273
        %v1290 = vmul.f32 %v1274, %v1274
        %v1291 = vmul.f32 %v1275, %v1275
        %1292 = vadd.xlane.f32.xlu0 %v1276
        %v1293 = vpop.xlane.xlu0 %1292
        %1294 = vadd.xlane.f32.xlu0 %v1277
        %v1295 = vpop.xlane.xlu0 %1294
        %1296 = vadd.xlane.f32.xlu0 %v1278
        %v1297 = vpop.xlane.xlu0 %1296
        %1298 = vadd.xlane.f32.xlu0 %v1279
        %v1299 = vpop.xlane.xlu0 %1298
        %1300 = vadd.xlane.f32.xlu0 %v1280
        %v1301 = vpop.xlane.xlu0 %1300
        %1302 = vadd.xlane.f32.xlu0 %v1281
        %v1303 = vpop.xlane.xlu0 %1302
        %1304 = vadd.xlane.f32.xlu0 %v1282
        %v1305 = vpop.xlane.xlu0 %1304
        %1306 = vadd.xlane.f32.xlu0 %v1283
        %v1307 = vpop.xlane.xlu0 %1306
        %1308 = vadd.xlane.f32.xlu0 %v1284
        %v1309 = vpop.xlane.xlu0 %1308
        %1310 = vadd.xlane.f32.xlu0 %v1285
        %v1311 = vpop.xlane.xlu0 %1310
        %1312 = vadd.xlane.f32.xlu0 %v1286
        %v1313 = vpop.xlane.xlu0 %1312
        %1314 = vadd.xlane.f32.xlu0 %v1287
        %v1315 = vpop.xlane.xlu0 %1314
        %1316 = vadd.xlane.f32.xlu0 %v1288
        %v1317 = vpop.xlane.xlu0 %1316
        %1318 = vadd.xlane.f32.xlu0 %v1289
        %v1319 = vpop.xlane.xlu0 %1318
        %1320 = vadd.xlane.f32.xlu0 %v1290
        %v1321 = vpop.xlane.xlu0 %1320
        %1322 = vadd.xlane.f32.xlu0 %v1291
        %v1323 = vpop.xlane.xlu0 %1322
        %v1324 = vmul.f32 %v1293, 0.03125
        %v1325 = vmul.f32 %v1295, 0.03125
        %v1326 = vmul.f32 %v1297, 0.03125
        %v1327 = vmul.f32 %v1299, 0.03125
        %v1328 = vmul.f32 %v1301, 0.03125
        %v1329 = vmul.f32 %v1303, 0.03125
        %v1330 = vmul.f32 %v1305, 0.03125
        %v1331 = vmul.f32 %v1307, 0.03125
        %v1332 = vmul.f32 %v1309, 0.03125
        %v1333 = vmul.f32 %v1311, 0.03125
        %v1334 = vmul.f32 %v1313, 0.03125
        %v1335 = vmul.f32 %v1315, 0.03125
        %v1336 = vmul.f32 %v1317, 0.03125
        %v1337 = vmul.f32 %v1319, 0.03125
        %v1338 = vmul.f32 %v1321, 0.03125
        %v1339 = vmul.f32 %v1323, 0.03125
        %v1340 = vadd.f32 %v1324, 1e-05
        %v1341 = vadd.f32 %v1325, 1e-05
        %v1342 = vadd.f32 %v1326, 1e-05
        %v1343 = vadd.f32 %v1327, 1e-05
        %v1344 = vadd.f32 %v1328, 1e-05
        %v1345 = vadd.f32 %v1329, 1e-05
        %v1346 = vadd.f32 %v1330, 1e-05
        %v1347 = vadd.f32 %v1331, 1e-05
        %v1348 = vadd.f32 %v1332, 1e-05
        %v1349 = vadd.f32 %v1333, 1e-05
        %v1350 = vadd.f32 %v1334, 1e-05
        %v1351 = vadd.f32 %v1335, 1e-05
        %v1352 = vadd.f32 %v1336, 1e-05
        %v1353 = vadd.f32 %v1337, 1e-05
        %v1354 = vadd.f32 %v1338, 1e-05
        %v1355 = vadd.f32 %v1339, 1e-05
        %v1356 = vrsqrt.pop %v1340
        %v1357 = vmul.f32 %v1356, %v1340
        %v1358 = vmul.f32 %v1357, %v1356
        %v1359 = vmul.f32 0.5, %v1358
        %v1360 = vsub.f32 1.5, %v1359
        %v1361 = vmul.f32 %v1356, %v1360
        %vm1362 = vweird.f32 %v1340
        %vm1363 = vweird.f32 %v1356
        %vm1364 = vmor %vm1362, %vm1363
        %v1365 = vsel %vm1364, %v1356, %v1361
        %v1366 = vrsqrt.pop %v1341
        %v1367 = vmul.f32 %v1366, %v1341
        %v1368 = vmul.f32 %v1367, %v1366
        %v1369 = vmul.f32 0.5, %v1368
        %v1370 = vsub.f32 1.5, %v1369
        %v1371 = vmul.f32 %v1366, %v1370
        %vm1372 = vweird.f32 %v1341
        %vm1373 = vweird.f32 %v1366
        %vm1374 = vmor %vm1372, %vm1373
        %v1375 = vsel %vm1374, %v1366, %v1371
        %v1376 = vrsqrt.pop %v1342
        %v1377 = vmul.f32 %v1376, %v1342
        %v1378 = vmul.f32 %v1377, %v1376
        %v1379 = vmul.f32 0.5, %v1378
        %v1380 = vsub.f32 1.5, %v1379
        %v1381 = vmul.f32 %v1376, %v1380
        %vm1382 = vweird.f32 %v1342
        %vm1383 = vweird.f32 %v1376
        %vm1384 = vmor %vm1382, %vm1383
        %v1385 = vsel %vm1384, %v1376, %v1381
        %v1386 = vrsqrt.pop %v1343
        %v1387 = vmul.f32 %v1386, %v1343
        %v1388 = vmul.f32 %v1387, %v1386
        %v1389 = vmul.f32 0.5, %v1388
        %v1390 = vsub.f32 1.5, %v1389
        %v1391 = vmul.f32 %v1386, %v1390
        %vm1392 = vweird.f32 %v1343
        %vm1393 = vweird.f32 %v1386
        %vm1394 = vmor %vm1392, %vm1393
        %v1395 = vsel %vm1394, %v1386, %v1391
        %v1396 = vrsqrt.pop %v1344
        %v1397 = vmul.f32 %v1396, %v1344
        %v1398 = vmul.f32 %v1397, %v1396
        %v1399 = vmul.f32 0.5, %v1398
        %v1400 = vsub.f32 1.5, %v1399
        %v1401 = vmul.f32 %v1396, %v1400
        %vm1402 = vweird.f32 %v1344
        %vm1403 = vweird.f32 %v1396
        %vm1404 = vmor %vm1402, %vm1403
        %v1405 = vsel %vm1404, %v1396, %v1401
        %v1406 = vrsqrt.pop %v1345
        %v1407 = vmul.f32 %v1406, %v1345
        %v1408 = vmul.f32 %v1407, %v1406
        %v1409 = vmul.f32 0.5, %v1408
        %v1410 = vsub.f32 1.5, %v1409
        %v1411 = vmul.f32 %v1406, %v1410
        %vm1412 = vweird.f32 %v1345
        %vm1413 = vweird.f32 %v1406
        %vm1414 = vmor %vm1412, %vm1413
        %v1415 = vsel %vm1414, %v1406, %v1411
        %v1416 = vrsqrt.pop %v1346
        %v1417 = vmul.f32 %v1416, %v1346
        %v1418 = vmul.f32 %v1417, %v1416
        %v1419 = vmul.f32 0.5, %v1418
        %v1420 = vsub.f32 1.5, %v1419
        %v1421 = vmul.f32 %v1416, %v1420
        %vm1422 = vweird.f32 %v1346
        %vm1423 = vweird.f32 %v1416
        %vm1424 = vmor %vm1422, %vm1423
        %v1425 = vsel %vm1424, %v1416, %v1421
        %v1426 = vrsqrt.pop %v1347
        %v1427 = vmul.f32 %v1426, %v1347
        %v1428 = vmul.f32 %v1427, %v1426
        %v1429 = vmul.f32 0.5, %v1428
        %v1430 = vsub.f32 1.5, %v1429
        %v1431 = vmul.f32 %v1426, %v1430
        %vm1432 = vweird.f32 %v1347
        %vm1433 = vweird.f32 %v1426
        %vm1434 = vmor %vm1432, %vm1433
        %v1435 = vsel %vm1434, %v1426, %v1431
        %v1436 = vrsqrt.pop %v1348
        %v1437 = vmul.f32 %v1436, %v1348
        %v1438 = vmul.f32 %v1437, %v1436
        %v1439 = vmul.f32 0.5, %v1438
        %v1440 = vsub.f32 1.5, %v1439
        %v1441 = vmul.f32 %v1436, %v1440
        %vm1442 = vweird.f32 %v1348
        %vm1443 = vweird.f32 %v1436
        %vm1444 = vmor %vm1442, %vm1443
        %v1445 = vsel %vm1444, %v1436, %v1441
        %v1446 = vrsqrt.pop %v1349
        %v1447 = vmul.f32 %v1446, %v1349
        %v1448 = vmul.f32 %v1447, %v1446
        %v1449 = vmul.f32 0.5, %v1448
        %v1450 = vsub.f32 1.5, %v1449
        %v1451 = vmul.f32 %v1446, %v1450
        %vm1452 = vweird.f32 %v1349
        %vm1453 = vweird.f32 %v1446
        %vm1454 = vmor %vm1452, %vm1453
        %v1455 = vsel %vm1454, %v1446, %v1451
        %v1456 = vrsqrt.pop %v1350
        %v1457 = vmul.f32 %v1456, %v1350
        %v1458 = vmul.f32 %v1457, %v1456
        %v1459 = vmul.f32 0.5, %v1458
        %v1460 = vsub.f32 1.5, %v1459
        %v1461 = vmul.f32 %v1456, %v1460
        %vm1462 = vweird.f32 %v1350
        %vm1463 = vweird.f32 %v1456
        %vm1464 = vmor %vm1462, %vm1463
        %v1465 = vsel %vm1464, %v1456, %v1461
        %v1466 = vrsqrt.pop %v1351
        %v1467 = vmul.f32 %v1466, %v1351
        %v1468 = vmul.f32 %v1467, %v1466
        %v1469 = vmul.f32 0.5, %v1468
        %v1470 = vsub.f32 1.5, %v1469
        %v1471 = vmul.f32 %v1466, %v1470
        %vm1472 = vweird.f32 %v1351
        %vm1473 = vweird.f32 %v1466
        %vm1474 = vmor %vm1472, %vm1473
        %v1475 = vsel %vm1474, %v1466, %v1471
        %v1476 = vrsqrt.pop %v1352
        %v1477 = vmul.f32 %v1476, %v1352
        %v1478 = vmul.f32 %v1477, %v1476
        %v1479 = vmul.f32 0.5, %v1478
        %v1480 = vsub.f32 1.5, %v1479
        %v1481 = vmul.f32 %v1476, %v1480
        %vm1482 = vweird.f32 %v1352
        %vm1483 = vweird.f32 %v1476
        %vm1484 = vmor %vm1482, %vm1483
        %v1485 = vsel %vm1484, %v1476, %v1481
        %v1486 = vrsqrt.pop %v1353
        %v1487 = vmul.f32 %v1486, %v1353
        %v1488 = vmul.f32 %v1487, %v1486
        %v1489 = vmul.f32 0.5, %v1488
        %v1490 = vsub.f32 1.5, %v1489
        %v1491 = vmul.f32 %v1486, %v1490
        %vm1492 = vweird.f32 %v1353
        %vm1493 = vweird.f32 %v1486
        %vm1494 = vmor %vm1492, %vm1493
        %v1495 = vsel %vm1494, %v1486, %v1491
        %v1496 = vrsqrt.pop %v1354
        %v1497 = vmul.f32 %v1496, %v1354
        %v1498 = vmul.f32 %v1497, %v1496
        %v1499 = vmul.f32 0.5, %v1498
        %v1500 = vsub.f32 1.5, %v1499
        %v1501 = vmul.f32 %v1496, %v1500
        %vm1502 = vweird.f32 %v1354
        %vm1503 = vweird.f32 %v1496
        %vm1504 = vmor %vm1502, %vm1503
        %v1505 = vsel %vm1504, %v1496, %v1501
        %v1506 = vrsqrt.pop %v1355
        %v1507 = vmul.f32 %v1506, %v1355
        %v1508 = vmul.f32 %v1507, %v1506
        %v1509 = vmul.f32 0.5, %v1508
        %v1510 = vsub.f32 1.5, %v1509
        %v1511 = vmul.f32 %v1506, %v1510
        %vm1512 = vweird.f32 %v1355
        %vm1513 = vweird.f32 %v1506
        %vm1514 = vmor %vm1512, %vm1513
        %v1515 = vsel %vm1514, %v1506, %v1511
        %v1516 = vmul.f32 %v1260, %v1365
        %v1517 = vmul.f32 %v1261, %v1375
        %v1518 = vmul.f32 %v1262, %v1385
        %v1519 = vmul.f32 %v1263, %v1395
        %v1520 = vmul.f32 %v1264, %v1405
        %v1521 = vmul.f32 %v1265, %v1415
        %v1522 = vmul.f32 %v1266, %v1425
        %v1523 = vmul.f32 %v1267, %v1435
        %v1524 = vmul.f32 %v1268, %v1445
        %v1525 = vmul.f32 %v1269, %v1455
        %v1526 = vmul.f32 %v1270, %v1465
        %v1527 = vmul.f32 %v1271, %v1475
        %v1528 = vmul.f32 %v1272, %v1485
        %v1529 = vmul.f32 %v1273, %v1495
        %v1530 = vmul.f32 %v1274, %v1505
        %v1531 = vmul.f32 %v1275, %v1515
        %v1532 = vperm.slane %v829, 0
        %v1533 = vmul.f32 %v1516, %v1532
        %v1534 = vmul.f32 %v1517, %v1532
        %v1535 = vmul.f32 %v1518, %v1532
        %v1536 = vmul.f32 %v1519, %v1532
        %v1537 = vmul.f32 %v1520, %v1532
        %v1538 = vmul.f32 %v1521, %v1532
        %v1539 = vmul.f32 %v1522, %v1532
        %v1540 = vmul.f32 %v1523, %v1532
        %v1541 = vmul.f32 %v1524, %v1532
        %v1542 = vmul.f32 %v1525, %v1532
        %v1543 = vmul.f32 %v1526, %v1532
        %v1544 = vmul.f32 %v1527, %v1532
        %v1545 = vmul.f32 %v1528, %v1532
        %v1546 = vmul.f32 %v1529, %v1532
        %v1547 = vmul.f32 %v1530, %v1532
        %v1548 = vmul.f32 %v1531, %v1532
        %v1549 = vperm.slane %v830, 0
        %v1550 = vadd.f32 %v1533, %v1549
        %v1551 = vadd.f32 %v1534, %v1549
        %v1552 = vadd.f32 %v1535, %v1549
        %v1553 = vadd.f32 %v1536, %v1549
        %v1554 = vadd.f32 %v1537, %v1549
        %v1555 = vadd.f32 %v1538, %v1549
        %v1556 = vadd.f32 %v1539, %v1549
        %v1557 = vadd.f32 %v1540, %v1549
        %v1558 = vadd.f32 %v1541, %v1549
        %v1559 = vadd.f32 %v1542, %v1549
        %v1560 = vadd.f32 %v1543, %v1549
        %v1561 = vadd.f32 %v1544, %v1549
        %v1562 = vadd.f32 %v1545, %v1549
        %v1563 = vadd.f32 %v1546, %v1549
        %v1564 = vadd.f32 %v1547, %v1549
        %v1565 = vadd.f32 %v1548, %v1549
        %v1566 = vld [vmem:[%s5] sm:$0xff]
        %v1567 = vld [vmem:[%s5 + $0x8] sm:$0xff]
        %v1568 = vld [vmem:[%s5 + $0x10] sm:$0xff]
        %v1569 = vld [vmem:[%s5 + $0x18] sm:$0xff]
        %v1570 = vld [vmem:[%s5 + $0x20] sm:$0xff]
        %v1571 = vld [vmem:[%s5 + $0x28] sm:$0xff]
        %v1572 = vld [vmem:[%s5 + $0x30] sm:$0xff]
        %v1573 = vld [vmem:[%s5 + $0x38] sm:$0xff]
        %v1574 = vld [vmem:[%s5 + $0x40] sm:$0xff]
        %v1575 = vld [vmem:[%s5 + $0x48] sm:$0xff]
        %v1576 = vld [vmem:[%s5 + $0x50] sm:$0xff]
        %v1577 = vld [vmem:[%s5 + $0x58] sm:$0xff]
        %v1578 = vld [vmem:[%s5 + $0x60] sm:$0xff]
        %v1579 = vld [vmem:[%s5 + $0x68] sm:$0xff]
        %v1580 = vld [vmem:[%s5 + $0x70] sm:$0xff]
        %v1581 = vld [vmem:[%s5 + $0x78] sm:$0xff]
        %v1582 = vperm.slane %v832, 0
        %1583 = vmatpush.msra.mxu0 %v1581
        %1584 = vmatpush.msra.mxu0 %v1580
        %1585 = vmatpush.msra.mxu0 %v1579
        %1586 = vmatpush.msra.mxu0 %v1578
        %1587 = vmatpush.msra.mxu0 %v1577
        %1588 = vmatpush.msra.mxu0 %v1576
        %1589 = vmatpush.msra.mxu0 %v1575
        %1590 = vmatpush.msra.mxu0 %v1574
        %1591 = vmatpush.msra.mxu0 %v1573
        %1592 = vmatpush.msra.mxu0 %v1572
        %1593 = vmatpush.msra.mxu0 %v1571
        %1594 = vmatpush.msra.mxu0 %v1570
        %1595 = vmatpush.msra.mxu0 %v1569
        %1596 = vmatpush.msra.mxu0 %v1568
        %1597 = vmatpush.msra.mxu0 %v1567
        %1598 = vmatpush.msra.mxu0 %v1566
        %1599 = vmatmul.f32.gmra.mxu0 %v1550
        %v1600 = vpop.f32.mrf.mxu0
        %v1601 = vadd.f32 %v1582, %v1600
        %1602 = vmatmul.f32.gmra.mxu0 %v1551
        %v1603 = vpop.f32.mrf.mxu0
        %v1604 = vadd.f32 %v1582, %v1603
        %1605 = vmatmul.f32.gmra.mxu0 %v1552
        %v1606 = vpop.f32.mrf.mxu0
        %v1607 = vadd.f32 %v1582, %v1606
        %1608 = vmatmul.f32.gmra.mxu0 %v1553
        %v1609 = vpop.f32.mrf.mxu0
        %v1610 = vadd.f32 %v1582, %v1609
        %1611 = vmatmul.f32.gmra.mxu0 %v1554
        %v1612 = vpop.f32.mrf.mxu0
        %v1613 = vadd.f32 %v1582, %v1612
        %1614 = vmatmul.f32.gmra.mxu0 %v1555
        %v1615 = vpop.f32.mrf.mxu0
        %v1616 = vadd.f32 %v1582, %v1615
        %1617 = vmatmul.f32.gmra.mxu0 %v1556
        %v1618 = vpop.f32.mrf.mxu0
        %v1619 = vadd.f32 %v1582, %v1618
        %1620 = vmatmul.f32.gmra.mxu0 %v1557
        %v1621 = vpop.f32.mrf.mxu0
        %v1622 = vadd.f32 %v1582, %v1621
        %1623 = vmatmul.f32.gmra.mxu0 %v1558
        %v1624 = vpop.f32.mrf.mxu0
        %v1625 = vadd.f32 %v1582, %v1624
        %1626 = vmatmul.f32.gmra.mxu0 %v1559
        %v1627 = vpop.f32.mrf.mxu0
        %v1628 = vadd.f32 %v1582, %v1627
        %1629 = vmatmul.f32.gmra.mxu0 %v1560
        %v1630 = vpop.f32.mrf.mxu0
        %v1631 = vadd.f32 %v1582, %v1630
        %1632 = vmatmul.f32.gmra.mxu0 %v1561
        %v1633 = vpop.f32.mrf.mxu0
        %v1634 = vadd.f32 %v1582, %v1633
        %1635 = vmatmul.f32.gmra.mxu0 %v1562
        %v1636 = vpop.f32.mrf.mxu0
        %v1637 = vadd.f32 %v1582, %v1636
        %1638 = vmatmul.f32.gmra.mxu0 %v1563
        %v1639 = vpop.f32.mrf.mxu0
        %v1640 = vadd.f32 %v1582, %v1639
        %1641 = vmatmul.f32.gmra.mxu0 %v1564
        %v1642 = vpop.f32.mrf.mxu0
        %v1643 = vadd.f32 %v1582, %v1642
        %1644 = vmatmul.f32.gmra.mxu0 %v1565
        %v1645 = vpop.f32.mrf.mxu0
        %v1646 = vadd.f32 %v1582, %v1645
        %1647 = vdwg.mxu0
        %v1648 = vmax.f32 %v1601, 0.0
        %v1649 = vmax.f32 %v1604, 0.0
        %v1650 = vmax.f32 %v1607, 0.0
        %v1651 = vmax.f32 %v1610, 0.0
        %v1652 = vmax.f32 %v1613, 0.0
        %v1653 = vmax.f32 %v1616, 0.0
        %v1654 = vmax.f32 %v1619, 0.0
        %v1655 = vmax.f32 %v1622, 0.0
        %v1656 = vmax.f32 %v1625, 0.0
        %v1657 = vmax.f32 %v1628, 0.0
        %v1658 = vmax.f32 %v1631, 0.0
        %v1659 = vmax.f32 %v1634, 0.0
        %v1660 = vmax.f32 %v1637, 0.0
        %v1661 = vmax.f32 %v1640, 0.0
        %v1662 = vmax.f32 %v1643, 0.0
        %v1663 = vmax.f32 %v1646, 0.0
        %v1664 = vld [vmem:[%s6] sm:$0xff]
        %v1665 = vld [vmem:[%s6 + $0x8] sm:$0xff]
        %v1666 = vld [vmem:[%s6 + $0x10] sm:$0xff]
        %v1667 = vld [vmem:[%s6 + $0x18] sm:$0xff]
        %v1668 = vld [vmem:[%s6 + $0x20] sm:$0xff]
        %v1669 = vld [vmem:[%s6 + $0x28] sm:$0xff]
        %v1670 = vld [vmem:[%s6 + $0x30] sm:$0xff]
        %v1671 = vld [vmem:[%s6 + $0x38] sm:$0xff]
        %v1672 = vld [vmem:[%s6 + $0x40] sm:$0xff]
        %v1673 = vld [vmem:[%s6 + $0x48] sm:$0xff]
        %v1674 = vld [vmem:[%s6 + $0x50] sm:$0xff]
        %v1675 = vld [vmem:[%s6 + $0x58] sm:$0xff]
        %v1676 = vld [vmem:[%s6 + $0x60] sm:$0xff]
        %v1677 = vld [vmem:[%s6 + $0x68] sm:$0xff]
        %v1678 = vld [vmem:[%s6 + $0x70] sm:$0xff]
        %v1679 = vld [vmem:[%s6 + $0x78] sm:$0xff]
        %v1680 = vperm.slane %v833, 0
        %1681 = vmatpush.msra.mxu0 %v1679
        %1682 = vmatpush.msra.mxu0 %v1678
        %1683 = vmatpush.msra.mxu0 %v1677
        %1684 = vmatpush.msra.mxu0 %v1676
        %1685 = vmatpush.msra.mxu0 %v1675
        %1686 = vmatpush.msra.mxu0 %v1674
        %1687 = vmatpush.msra.mxu0 %v1673
        %1688 = vmatpush.msra.mxu0 %v1672
        %1689 = vmatpush.msra.mxu0 %v1671
        %1690 = vmatpush.msra.mxu0 %v1670
        %1691 = vmatpush.msra.mxu0 %v1669
        %1692 = vmatpush.msra.mxu0 %v1668
        %1693 = vmatpush.msra.mxu0 %v1667
        %1694 = vmatpush.msra.mxu0 %v1666
        %1695 = vmatpush.msra.mxu0 %v1665
        %1696 = vmatpush.msra.mxu0 %v1664
        %1697 = vmatmul.f32.gmra.mxu0 %v1648
        %v1698 = vpop.f32.mrf.mxu0
        %v1699 = vadd.f32 %v1680, %v1698
        %1700 = vmatmul.f32.gmra.mxu0 %v1649
        %v1701 = vpop.f32.mrf.mxu0
        %v1702 = vadd.f32 %v1680, %v1701
        %1703 = vmatmul.f32.gmra.mxu0 %v1650
        %v1704 = vpop.f32.mrf.mxu0
        %v1705 = vadd.f32 %v1680, %v1704
        %1706 = vmatmul.f32.gmra.mxu0 %v1651
        %v1707 = vpop.f32.mrf.mxu0
        %v1708 = vadd.f32 %v1680, %v1707
        %1709 = vmatmul.f32.gmra.mxu0 %v1652
        %v1710 = vpop.f32.mrf.mxu0
        %v1711 = vadd.f32 %v1680, %v1710
        %1712 = vmatmul.f32.gmra.mxu0 %v1653
        %v1713 = vpop.f32.mrf.mxu0
        %v1714 = vadd.f32 %v1680, %v1713
        %1715 = vmatmul.f32.gmra.mxu0 %v1654
        %v1716 = vpop.f32.mrf.mxu0
        %v1717 = vadd.f32 %v1680, %v1716
        %1718 = vmatmul.f32.gmra.mxu0 %v1655
        %v1719 = vpop.f32.mrf.mxu0
        %v1720 = vadd.f32 %v1680, %v1719
        %1721 = vmatmul.f32.gmra.mxu0 %v1656
        %v1722 = vpop.f32.mrf.mxu0
        %v1723 = vadd.f32 %v1680, %v1722
        %1724 = vmatmul.f32.gmra.mxu0 %v1657
        %v1725 = vpop.f32.mrf.mxu0
        %v1726 = vadd.f32 %v1680, %v1725
        %1727 = vmatmul.f32.gmra.mxu0 %v1658
        %v1728 = vpop.f32.mrf.mxu0
        %v1729 = vadd.f32 %v1680, %v1728
        %1730 = vmatmul.f32.gmra.mxu0 %v1659
        %v1731 = vpop.f32.mrf.mxu0
        %v1732 = vadd.f32 %v1680, %v1731
        %1733 = vmatmul.f32.gmra.mxu0 %v1660
        %v1734 = vpop.f32.mrf.mxu0
        %v1735 = vadd.f32 %v1680, %v1734
        %1736 = vmatmul.f32.gmra.mxu0 %v1661
        %v1737 = vpop.f32.mrf.mxu0
        %v1738 = vadd.f32 %v1680, %v1737
        %1739 = vmatmul.f32.gmra.mxu0 %v1662
        %v1740 = vpop.f32.mrf.mxu0
        %v1741 = vadd.f32 %v1680, %v1740
        %1742 = vmatmul.f32.gmra.mxu0 %v1663
        %v1743 = vpop.f32.mrf.mxu0
        %v1744 = vadd.f32 %v1680, %v1743
        %1745 = vdwg.mxu0
        %v1746 = vld [vmem:[%s7] sm:$0xff]
        %v1747 = vld [vmem:[%s7 + $0x8] sm:$0xff]
        %v1748 = vld [vmem:[%s7 + $0x10] sm:$0xff]
        %v1749 = vld [vmem:[%s7 + $0x18] sm:$0xff]
        %v1750 = vld [vmem:[%s7 + $0x20] sm:$0xff]
        %v1751 = vld [vmem:[%s7 + $0x28] sm:$0xff]
        %v1752 = vld [vmem:[%s7 + $0x30] sm:$0xff]
        %v1753 = vld [vmem:[%s7 + $0x38] sm:$0xff]
        %v1754 = vld [vmem:[%s7 + $0x40] sm:$0xff]
        %v1755 = vld [vmem:[%s7 + $0x48] sm:$0xff]
        %v1756 = vld [vmem:[%s7 + $0x50] sm:$0xff]
        %v1757 = vld [vmem:[%s7 + $0x58] sm:$0xff]
        %v1758 = vld [vmem:[%s7 + $0x60] sm:$0xff]
        %v1759 = vld [vmem:[%s7 + $0x68] sm:$0xff]
        %v1760 = vld [vmem:[%s7 + $0x70] sm:$0xff]
        %v1761 = vld [vmem:[%s7 + $0x78] sm:$0xff]
        %v1762 = vperm.slane %v834, 0
        %1763 = vmatpush.msra.mxu0 %v1761
        %1764 = vmatpush.msra.mxu0 %v1760
        %1765 = vmatpush.msra.mxu0 %v1759
        %1766 = vmatpush.msra.mxu0 %v1758
        %1767 = vmatpush.msra.mxu0 %v1757
        %1768 = vmatpush.msra.mxu0 %v1756
        %1769 = vmatpush.msra.mxu0 %v1755
        %1770 = vmatpush.msra.mxu0 %v1754
        %1771 = vmatpush.msra.mxu0 %v1753
        %1772 = vmatpush.msra.mxu0 %v1752
        %1773 = vmatpush.msra.mxu0 %v1751
        %1774 = vmatpush.msra.mxu0 %v1750
        %1775 = vmatpush.msra.mxu0 %v1749
        %1776 = vmatpush.msra.mxu0 %v1748
        %1777 = vmatpush.msra.mxu0 %v1747
        %1778 = vmatpush.msra.mxu0 %v1746
        %1779 = vmatmul.f32.gmra.mxu0 %v1550
        %v1780 = vpop.f32.mrf.mxu0
        %v1781 = vadd.f32 %v1762, %v1780
        %1782 = vmatmul.f32.gmra.mxu0 %v1551
        %v1783 = vpop.f32.mrf.mxu0
        %v1784 = vadd.f32 %v1762, %v1783
        %1785 = vmatmul.f32.gmra.mxu0 %v1552
        %v1786 = vpop.f32.mrf.mxu0
        %v1787 = vadd.f32 %v1762, %v1786
        %1788 = vmatmul.f32.gmra.mxu0 %v1553
        %v1789 = vpop.f32.mrf.mxu0
        %v1790 = vadd.f32 %v1762, %v1789
        %1791 = vmatmul.f32.gmra.mxu0 %v1554
        %v1792 = vpop.f32.mrf.mxu0
        %v1793 = vadd.f32 %v1762, %v1792
        %1794 = vmatmul.f32.gmra.mxu0 %v1555
        %v1795 = vpop.f32.mrf.mxu0
        %v1796 = vadd.f32 %v1762, %v1795
        %1797 = vmatmul.f32.gmra.mxu0 %v1556
        %v1798 = vpop.f32.mrf.mxu0
        %v1799 = vadd.f32 %v1762, %v1798
        %1800 = vmatmul.f32.gmra.mxu0 %v1557
        %v1801 = vpop.f32.mrf.mxu0
        %v1802 = vadd.f32 %v1762, %v1801
        %1803 = vmatmul.f32.gmra.mxu0 %v1558
        %v1804 = vpop.f32.mrf.mxu0
        %v1805 = vadd.f32 %v1762, %v1804
        %1806 = vmatmul.f32.gmra.mxu0 %v1559
        %v1807 = vpop.f32.mrf.mxu0
        %v1808 = vadd.f32 %v1762, %v1807
        %1809 = vmatmul.f32.gmra.mxu0 %v1560
        %v1810 = vpop.f32.mrf.mxu0
        %v1811 = vadd.f32 %v1762, %v1810
        %1812 = vmatmul.f32.gmra.mxu0 %v1561
        %v1813 = vpop.f32.mrf.mxu0
        %v1814 = vadd.f32 %v1762, %v1813
        %1815 = vmatmul.f32.gmra.mxu0 %v1562
        %v1816 = vpop.f32.mrf.mxu0
        %v1817 = vadd.f32 %v1762, %v1816
        %1818 = vmatmul.f32.gmra.mxu0 %v1563
        %v1819 = vpop.f32.mrf.mxu0
        %v1820 = vadd.f32 %v1762, %v1819
        %1821 = vmatmul.f32.gmra.mxu0 %v1564
        %v1822 = vpop.f32.mrf.mxu0
        %v1823 = vadd.f32 %v1762, %v1822
        %1824 = vmatmul.f32.gmra.mxu0 %v1565
        %v1825 = vpop.f32.mrf.mxu0
        %v1826 = vadd.f32 %v1762, %v1825
        %1827 = vdwg.mxu0
        %v1828 = vmax.f32 %v1781, 0.0
        %v1829 = vmax.f32 %v1784, 0.0
        %v1830 = vmax.f32 %v1787, 0.0
        %v1831 = vmax.f32 %v1790, 0.0
        %v1832 = vmax.f32 %v1793, 0.0
        %v1833 = vmax.f32 %v1796, 0.0
        %v1834 = vmax.f32 %v1799, 0.0
        %v1835 = vmax.f32 %v1802, 0.0
        %v1836 = vmax.f32 %v1805, 0.0
        %v1837 = vmax.f32 %v1808, 0.0
        %v1838 = vmax.f32 %v1811, 0.0
        %v1839 = vmax.f32 %v1814, 0.0
        %v1840 = vmax.f32 %v1817, 0.0
        %v1841 = vmax.f32 %v1820, 0.0
        %v1842 = vmax.f32 %v1823, 0.0
        %v1843 = vmax.f32 %v1826, 0.0
        %v1844 = vpack.c.bf16 %v1699, %v1699
        %v1845 = vpack.c.bf16 %v1702, %v1702
        %v1846 = vpack.c.bf16 %v1705, %v1705
        %v1847 = vpack.c.bf16 %v1708, %v1708
        %v1848 = vpack.c.bf16 %v1711, %v1711
        %v1849 = vpack.c.bf16 %v1714, %v1714
        %v1850 = vpack.c.bf16 %v1717, %v1717
        %v1851 = vpack.c.bf16 %v1720, %v1720
        %v1852 = vpack.c.bf16 %v1723, %v1723
        %v1853 = vpack.c.bf16 %v1726, %v1726
        %v1854 = vpack.c.bf16 %v1729, %v1729
        %v1855 = vpack.c.bf16 %v1732, %v1732
        %v1856 = vpack.c.bf16 %v1735, %v1735
        %v1857 = vpack.c.bf16 %v1738, %v1738
        %v1858 = vpack.c.bf16 %v1741, %v1741
        %v1859 = vpack.c.bf16 %v1744, %v1744
        %1860 = vst [vmem:[%s422] sm:$0xf] %v1844
        %1861 = vst [vmem:[%s422 + $0x4] sm:$0xf] %v1845
        %1862 = vst [vmem:[%s422 + $0x8] sm:$0xf] %v1846
        %1863 = vst [vmem:[%s422 + $0xc] sm:$0xf] %v1847
        %1864 = vst [vmem:[%s422 + $0x10] sm:$0xf] %v1848
        %1865 = vst [vmem:[%s422 + $0x14] sm:$0xf] %v1849
        %1866 = vst [vmem:[%s422 + $0x18] sm:$0xf] %v1850
        %1867 = vst [vmem:[%s422 + $0x1c] sm:$0xf] %v1851
        %1868 = vst [vmem:[%s422 + $0x20] sm:$0xf] %v1852
        %1869 = vst [vmem:[%s422 + $0x24] sm:$0xf] %v1853
        %1870 = vst [vmem:[%s422 + $0x28] sm:$0xf] %v1854
        %1871 = vst [vmem:[%s422 + $0x2c] sm:$0xf] %v1855
        %1872 = vst [vmem:[%s422 + $0x30] sm:$0xf] %v1856
        %1873 = vst [vmem:[%s422 + $0x34] sm:$0xf] %v1857
        %1874 = vst [vmem:[%s422 + $0x38] sm:$0xf] %v1858
        %1875 = vst [vmem:[%s422 + $0x3c] sm:$0xf] %v1859
        %v1876 = vpack.c.bf16 %v1828, %v1828
        %v1877 = vpack.c.bf16 %v1829, %v1829
        %v1878 = vpack.c.bf16 %v1830, %v1830
        %v1879 = vpack.c.bf16 %v1831, %v1831
        %v1880 = vpack.c.bf16 %v1832, %v1832
        %v1881 = vpack.c.bf16 %v1833, %v1833
        %v1882 = vpack.c.bf16 %v1834, %v1834
        %v1883 = vpack.c.bf16 %v1835, %v1835
        %v1884 = vpack.c.bf16 %v1836, %v1836
        %v1885 = vpack.c.bf16 %v1837, %v1837
        %v1886 = vpack.c.bf16 %v1838, %v1838
        %v1887 = vpack.c.bf16 %v1839, %v1839
        %v1888 = vpack.c.bf16 %v1840, %v1840
        %v1889 = vpack.c.bf16 %v1841, %v1841
        %v1890 = vpack.c.bf16 %v1842, %v1842
        %v1891 = vpack.c.bf16 %v1843, %v1843
        %1892 = vst [vmem:[%s428] sm:$0xf] %v1876
        %1893 = vst [vmem:[%s428 + $0x4] sm:$0xf] %v1877
        %1894 = vst [vmem:[%s428 + $0x8] sm:$0xf] %v1878
        %1895 = vst [vmem:[%s428 + $0xc] sm:$0xf] %v1879
        %1896 = vst [vmem:[%s428 + $0x10] sm:$0xf] %v1880
        %1897 = vst [vmem:[%s428 + $0x14] sm:$0xf] %v1881
        %1898 = vst [vmem:[%s428 + $0x18] sm:$0xf] %v1882
        %1899 = vst [vmem:[%s428 + $0x1c] sm:$0xf] %v1883
        %1900 = vst [vmem:[%s428 + $0x20] sm:$0xf] %v1884
        %1901 = vst [vmem:[%s428 + $0x24] sm:$0xf] %v1885
        %1902 = vst [vmem:[%s428 + $0x28] sm:$0xf] %v1886
        %1903 = vst [vmem:[%s428 + $0x2c] sm:$0xf] %v1887
        %1904 = vst [vmem:[%s428 + $0x30] sm:$0xf] %v1888
        %1905 = vst [vmem:[%s428 + $0x34] sm:$0xf] %v1889
        %1906 = vst [vmem:[%s428 + $0x38] sm:$0xf] %v1890
        %1907 = vst [vmem:[%s428 + $0x3c] sm:$0xf] %v1891
      $region64: #{dbgcn_forward.2} parent=55 // pred_fallthru
        _
      %s1908 = smul.u32 16, %s26
      %p1909 = scmp.lt.s32.totalorder %s1908, 31
      %s1910 = scalar_select %p1909, %s1908, 31
      %s1911 = smul.addr %s1910, 4
      %s1912 = scalar_lea.vmem %s9, %s1911
      %s1913 = smul.u32 16, %s26
      %p1914 = scmp.lt.s32.totalorder %s1913, 31
      %s1915 = scalar_select %p1914, %s1913, 31
      %s1916 = smul.addr %s1915, 4
      %s1917 = scalar_lea.vmem %s10, %s1916
      // Predicated region
      $region65: #{dbgcn_forward.2} parent=55 // pred_check
        %p1918 = pneg %p253
      $region66: #{dbgcn_forward.2} parent=55 // pred_check_branch
        %1920 = sbr.rel (%p1918) target = $region68
      $region67: #{dbgcn_forward.2} parent=55 // pred_region
        %s1921 = smul.u32 16, %s26
      $region68: #{dbgcn_forward.2} parent=55 // pred_fallthru
        _
      // Predicated region
      $region69: #{dbgcn_forward.2} parent=55 // pred_check
        %p1922 = pneg %p279
      $region70: #{dbgcn_forward.2} parent=55 // pred_check_branch
        %1924 = sbr.rel (%p1922) target = $region72
      $region71: #{dbgcn_forward.2} parent=55 // pred_region
        %s1925 = smul.u32 16, %s26
      $region72: #{dbgcn_forward.2} parent=55 // pred_fallthru
        _
    $region56: #{dbgcn_forward.2} parent=5 // pred_fallthru
      _
    %p1926 = scmp.le.s32.totalorder 2, %s17
    // Predicated region
    $region73: #{dbgcn_forward.2} parent=5 // pred_check
      %p1927 = pneg %p1926
    $region74: #{dbgcn_forward.2} parent=5 // pred_check_branch
      %1929 = sbr.rel (%p1927) target = $region76
    $region75: #{dbgcn_forward.2} parent=5 // pred_region
      %s1930 = ssub.s32 %s17, 2
      // Predicated region
      $region77: #{dbgcn_forward.2} parent=75 // pred_check
        %p1931 = pneg %p259
      $region78: #{dbgcn_forward.2} parent=75 // pred_check_branch
        %1933 = sbr.rel (%p1931) target = $region80
      $region79: #{dbgcn_forward.2} parent=75 // pred_region
        %s1934 = smul.u32 16, %s28
        %p1935 = scmp.lt.s32.totalorder %s1934, 31
        %s1936 = scalar_select %p1935, %s1934, 31
        %s1937 = smul.addr %s1936, 4
        %s1938 = scalar_lea.vmem %s9, %s1937
      $region80: #{dbgcn_forward.2} parent=75 // pred_fallthru
        _
      // Predicated region
      $region81: #{dbgcn_forward.2} parent=75 // pred_check
        %p1939 = pneg %p285
      $region82: #{dbgcn_forward.2} parent=75 // pred_check_branch
        %1941 = sbr.rel (%p1939) target = $region84
      $region83: #{dbgcn_forward.2} parent=75 // pred_region
        %s1942 = smul.u32 16, %s28
        %p1943 = scmp.lt.s32.totalorder %s1942, 31
        %s1944 = scalar_select %p1943, %s1942, 31
        %s1945 = smul.addr %s1944, 4
        %s1946 = scalar_lea.vmem %s10, %s1945
      $region84: #{dbgcn_forward.2} parent=75 // pred_fallthru
        _
    $region76: #{dbgcn_forward.2} parent=5 // pred_fallthru
      _
  $region6: #{dbgcn_forward.2} parent=0 // loop_footer
    %s21 = sadd.s32 1, %s17
  $region7: #{dbgcn_forward.2} parent=0 // loop_footer_branch
    %16 = sbr.rel target = $region3
  $region8: #{dbgcn_forward.2} parent=0 // loop_exit
    _

</llo_original>
